<compile_context>
chip_gen: v6e
topology: v6e:2x2x1
jax: 0.10.0
libtpu: 0.0.40
codegen_flags: <defaults>
</compile_context>

<pallas_src>
import jax
import jax.numpy as jnp
import numpy as np
from jax.experimental import pallas as pl
from jax.experimental.pallas import tpu as pltpu

KSIZE = 8  # nn.Conv2d(kernel_size=8) in the reference module


# ------------------------------ fused kernel --------------------------------
def cnn_kernel(x_ref, w1, b1, w2, b2, w3, b3, w4, b4, wl_ref, bl_ref, o_ref):
    """Whole network for one batch element.

    x_ref : (1, H0, W0*3)                         merged (H, W*C) input
    w{l}  : (KSIZE, Win_l*Cin_l, Wout_l*Cout_l)   block-banded conv weights
    b{l}  : (1, Wout_l*Cout_l)                    bias tiled across W
    wl_ref: (Hp, Wout4*Cout4 - Cout4, output)     masked + permuted linear weight
    bl_ref: (1, output)
    o_ref : (1, 1, output)
    """
    x = x_ref[0]                                          # (H0, W0*C0)

    # ---- 4 x (valid conv k=8, stride 1) + bias + ReLU, merged (H, W*C) layout
    for w_ref, b_ref in ((w1, b1), (w2, b2), (w3, b3), (w4, b4)):
        hout = x.shape[0] - KSIZE + 1
        wc_out = w_ref.shape[-1]
        acc = jnp.broadcast_to(b_ref[...], (hout, wc_out))      # bias init
        for kh in range(KSIZE):
            acc = acc + jnp.dot(x[kh:kh + hout, :], w_ref[kh],
                                preferred_element_type=jnp.float32)
        x = jnp.maximum(acc, 0.0)                               # (Hout, Wout*Cout)

    # ---- MaxPool2d(2) + Flatten + Linear, fused (no reshape / transpose).
    wc = x.shape[1]                       # Wout4 * Cout4
    cout = wc - wl_ref.shape[1]           # Cout of last conv layer
    hp = wl_ref.shape[0]                  # pooled height
    # W-direction pool candidates: mw[r, j*cout + c] = max over columns j, j+1.
    mw = jnp.maximum(x[:, :wc - cout], x[:, cout:])
    out = bl_ref[...]                                           # (1, output)
    for ip in range(hp):
        # H-direction pool for pooled row ip (rows 2ip, 2ip+1).
        row = jnp.maximum(mw[2 * ip:2 * ip + 1, :],
                          mw[2 * ip + 1:2 * ip + 2, :])
        # wl_ref[ip] is zero except at lanes 2*jp*cout + c, which hold the
        # original linear weight row for PyTorch flatten index (c, ip, jp):
        # pool-column selection and NCHW flatten order live in the weight.
        out = out + jnp.dot(row, wl_ref[ip],
                            preferred_element_type=jnp.float32)
    o_ref[0] = out.astype(o_ref.dtype)


def _full_spec(shape):
    zeros = (0,) * len(shape)
    return pl.BlockSpec(shape, lambda i: zeros)


def cnn_forward(x_nchw, kp):
    """x_nchw: (N, 3, H, W) float32; kp: output of prepare_kernel_params."""
    n, c, h, w = x_nchw.shape
    x2d = jnp.transpose(x_nchw, (0, 2, 3, 1)).reshape(n, h, w * c)   # (N, H, W*C)

    weight_ops = [kp["w1"], kp["b1"], kp["w2"], kp["b2"], kp["w3"], kp["b3"],
                  kp["w4"], kp["b4"], kp["wl"], kp["bl"]]
    output = kp["bl"].shape[-1]

    out = pl.pallas_call(
        cnn_kernel,
        out_shape=jax.ShapeDtypeStruct((n, 1, output), jnp.float32),
        grid=(n,),
        in_specs=[pl.BlockSpec((1, h, w * c), lambda i: (i, 0, 0))]
                 + [_full_spec(op.shape) for op in weight_ops],
        out_specs=pl.BlockSpec((1, 1, output), lambda i: (i, 0, 0)),
        compiler_params=pltpu.CompilerParams(dimension_semantics=("parallel",)),
    )(x2d, *weight_ops)
    return out.reshape(n, output)


# ------------------- one-time weight preprocessing (init) -------------------
def prepare_kernel_params(params, spatial):
    """Convert conv/linear weights into the kernel's banded / merged layout."""
    kp = {}
    win = spatial
    cout = None
    for l in range(1, 5):
        wc = np.asarray(params[f"w{l}"], np.float32)         # (8, 8, cin, cout)
        b = np.asarray(params[f"b{l}"], np.float32)          # (cout,)
        kh_n, kw_n, cin, cout = wc.shape
        wout = win - kw_n + 1
        # Block-banded weight:  y[i, j*cout+co] = sum_kh (x[i+kh, :] @ wb[kh])[j*cout+co]
        wb = np.zeros((kh_n, win * cin, wout * cout), np.float32)
        for kh in range(kh_n):
            for kw in range(kw_n):
                blk = wc[kh, kw]                             # (cin, cout)
                for j in range(wout):
                    wb[kh, (j + kw) * cin:(j + kw + 1) * cin,
                       j * cout:(j + 1) * cout] = blk
        kp[f"w{l}"] = jnp.asarray(wb)
        kp[f"b{l}"] = jnp.asarray(np.tile(b, wout)[None, :])  # (1, wout*cout)
        win = wout

    # Fold MaxPool column selection + NCHW flatten permutation into the Linear.
    hout4 = wout4 = win
    cout4 = cout
    hp, wp = hout4 // 2, wout4 // 2
    wl = np.asarray(params["wl"], np.float32)                # (cout4*hp*wp, output)
    output = wl.shape[1]
    wlb = np.zeros((hp, wout4 * cout4 - cout4, output), np.float32)
    for ip in range(hp):
        for jp in range(wp):
            for ch in range(cout4):
                wlb[ip, 2 * jp * cout4 + ch, :] = wl[ch * hp * wp + ip * wp + jp, :]
    kp["wl"] = jnp.asarray(wlb)
    kp["bl"] = jnp.asarray(np.asarray(params["bl"], np.float32)[None, :])
    return kp


# ------------------------------ reference path -------------------------------
def reference_forward(x_nchw, params):
    """Plain-JAX reference (uses the ORIGINAL conv/linear weights)."""
    x = jnp.transpose(x_nchw, (0, 2, 3, 1))
    for i in range(1, 5):
        x = jax.lax.conv_general_dilated(
            x, params[f"w{i}"], window_strides=(1, 1), padding="VALID",
            dimension_numbers=("NHWC", "HWIO", "NHWC"))
        x = jnp.maximum(x + params[f"b{i}"], 0.0)
    n, h, w, c = x.shape
    x = x[:, : (h // 2) * 2, : (w // 2) * 2, :]
    x = x.reshape(n, h // 2, 2, w // 2, 2, c).max(axis=(2, 4))
    x = jnp.transpose(x, (0, 3, 1, 2)).reshape(n, -1)        # PyTorch NCHW flatten
    return x @ params["wl"] + params["bl"]


def init_params(key, filters, output, spatial):
    chans = [3, filters, filters * 2, filters * 4, filters * 8]
    keys = jax.random.split(key, 10)
    params = {}
    for i in range(4):
        cin, cout = chans[i], chans[i + 1]
        scale = 1.0 / np.sqrt(cin * KSIZE * KSIZE)
        params[f"w{i+1}"] = jax.random.uniform(
            keys[2 * i], (KSIZE, KSIZE, cin, cout), jnp.float32, -scale, scale)
        params[f"b{i+1}"] = jax.random.uniform(
            keys[2 * i + 1], (cout,), jnp.float32, -scale, scale)
    s = spatial
    for _ in range(4):
        s = s - KSIZE + 1
    s = s // 2
    in_features = chans[4] * s * s
    scale = 1.0 / np.sqrt(in_features)
    params["wl"] = jax.random.uniform(
        keys[8], (in_features, output), jnp.float32, -scale, scale)
    params["bl"] = jax.random.uniform(
        keys[9], (output,), jnp.float32, -scale, scale)
    return params


if __name__ == "__main__":
    batch, filters, output, spatial = 2, 2, 4, 32

    key = jax.random.PRNGKey(0)
    k_x, k_p = jax.random.split(key)
    x = jax.random.normal(k_x, (batch, 3, spatial, spatial), jnp.float32)  # NCHW
    params = init_params(k_p, filters, output, spatial)
    kparams = prepare_kernel_params(params, spatial)

    out = jax.block_until_ready(cnn_forward(x, kparams))
    ref = jax.block_until_ready(reference_forward(x, params))

    assert out.shape == (batch, output), out.shape
    if not np.allclose(np.asarray(out), np.asarray(ref), rtol=1e-4, atol=1e-4):
        raise AssertionError("Pallas output does not match JAX reference")

    print("KERNEL_OK")
</pallas_src>

<mosaic_0001>
module attributes {stable_mosaic.version = 11 : i64} {
  func.func @cnn_kernel(%arg0: i32, %arg1: memref<1x32x96xf32, #tpu.memory_space<vmem>>, %arg2: memref<8x96x50xf32, #tpu.memory_space<vmem>>, %arg3: memref<1x50xf32, #tpu.memory_space<vmem>>, %arg4: memref<8x50x72xf32, #tpu.memory_space<vmem>>, %arg5: memref<1x72xf32, #tpu.memory_space<vmem>>, %arg6: memref<8x72x88xf32, #tpu.memory_space<vmem>>, %arg7: memref<1x88xf32, #tpu.memory_space<vmem>>, %arg8: memref<8x88x64xf32, #tpu.memory_space<vmem>>, %arg9: memref<1x64xf32, #tpu.memory_space<vmem>>, %arg10: memref<2x48x4xf32, #tpu.memory_space<vmem>>, %arg11: memref<1x4xf32, #tpu.memory_space<vmem>>, %arg12: memref<1x1x4xf32, #tpu.memory_space<vmem>>) attributes {dimension_semantics = [#tpu.dimension_semantics<parallel>], iteration_bounds = array<i64: 2>, scalar_prefetch = 0 : i64, scratch_operands = 0 : i64, tpu.core_type = #tpu.core_type<tc>, window_params = [{transform_indices = @transform_0, window_bounds = array<i64: 1, 32, 96>}, {pipeline_mode = #tpu.pipeline_mode<synchronous>, transform_indices = @transform_1, window_bounds = array<i64: 8, 96, 50>}, {pipeline_mode = #tpu.pipeline_mode<synchronous>, transform_indices = @transform_2, window_bounds = array<i64: 1, 50>}, {pipeline_mode = #tpu.pipeline_mode<synchronous>, transform_indices = @transform_3, window_bounds = array<i64: 8, 50, 72>}, {pipeline_mode = #tpu.pipeline_mode<synchronous>, transform_indices = @transform_4, window_bounds = array<i64: 1, 72>}, {pipeline_mode = #tpu.pipeline_mode<synchronous>, transform_indices = @transform_5, window_bounds = array<i64: 8, 72, 88>}, {pipeline_mode = #tpu.pipeline_mode<synchronous>, transform_indices = @transform_6, window_bounds = array<i64: 1, 88>}, {pipeline_mode = #tpu.pipeline_mode<synchronous>, transform_indices = @transform_7, window_bounds = array<i64: 8, 88, 64>}, {pipeline_mode = #tpu.pipeline_mode<synchronous>, transform_indices = @transform_8, window_bounds = array<i64: 1, 64>}, {pipeline_mode = #tpu.pipeline_mode<synchronous>, transform_indices = @transform_9, window_bounds = array<i64: 2, 48, 4>}, {pipeline_mode = #tpu.pipeline_mode<synchronous>, transform_indices = @transform_10, window_bounds = array<i64: 1, 4>}, {transform_indices = @transform_11, window_bounds = array<i64: 1, 1, 4>}]} {
    %c0 = arith.constant 0 : index
    %c0_0 = arith.constant 0 : index
    %c0_1 = arith.constant 0 : index
    %0 = vector.load %arg1[%c0, %c0_0, %c0_1] : memref<1x32x96xf32, #tpu.memory_space<vmem>>, vector<1x32x96xf32>
    %1 = vector.shape_cast %0 : vector<1x32x96xf32> to vector<32x96xf32>
    %c0_2 = arith.constant 0 : index
    %c0_3 = arith.constant 0 : index
    %2 = vector.load %arg3[%c0_2, %c0_3] : memref<1x50xf32, #tpu.memory_space<vmem>>, vector<1x50xf32>
    %3 = vector.shape_cast %2 : vector<1x50xf32> to vector<1x50xf32>
    %4 = vector.broadcast %3 : vector<1x50xf32> to vector<25x50xf32>
    %5 = vector.extract_strided_slice %1 {offsets = [0, 0], sizes = [25, 96], strides = [1, 1]} : vector<32x96xf32> to vector<25x96xf32>
    %c0_4 = arith.constant 0 : index
    %c0_5 = arith.constant 0 : index
    %c0_6 = arith.constant 0 : index
    %6 = vector.load %arg2[%c0_4, %c0_5, %c0_6] : memref<8x96x50xf32, #tpu.memory_space<vmem>>, vector<1x96x50xf32>
    %7 = vector.shape_cast %6 : vector<1x96x50xf32> to vector<96x50xf32>
    %cst = arith.constant dense<0.000000e+00> : vector<25x50xf32>
    %8 = tpu.matmul %5, %7, %cst {dimension_numbers = #tpu.dot_dimension_numbers<[1], [0], [0], [1], [0, 0, 1, 1], [], []>} : vector<25x96xf32>, vector<96x50xf32>, vector<25x50xf32> -> vector<25x50xf32>
    %9 = arith.addf %4, %8 : vector<25x50xf32>
    %10 = vector.extract_strided_slice %1 {offsets = [1, 0], sizes = [25, 96], strides = [1, 1]} : vector<32x96xf32> to vector<25x96xf32>
    %c1 = arith.constant 1 : index
    %c0_7 = arith.constant 0 : index
    %c0_8 = arith.constant 0 : index
    %11 = vector.load %arg2[%c1, %c0_7, %c0_8] : memref<8x96x50xf32, #tpu.memory_space<vmem>>, vector<1x96x50xf32>
    %12 = vector.shape_cast %11 : vector<1x96x50xf32> to vector<96x50xf32>
    %cst_9 = arith.constant dense<0.000000e+00> : vector<25x50xf32>
    %13 = tpu.matmul %10, %12, %cst_9 {dimension_numbers = #tpu.dot_dimension_numbers<[1], [0], [0], [1], [0, 0, 1, 1], [], []>} : vector<25x96xf32>, vector<96x50xf32>, vector<25x50xf32> -> vector<25x50xf32>
    %14 = arith.addf %9, %13 : vector<25x50xf32>
    %15 = vector.extract_strided_slice %1 {offsets = [2, 0], sizes = [25, 96], strides = [1, 1]} : vector<32x96xf32> to vector<25x96xf32>
    %c2 = arith.constant 2 : index
    %c0_10 = arith.constant 0 : index
    %c0_11 = arith.constant 0 : index
    %16 = vector.load %arg2[%c2, %c0_10, %c0_11] : memref<8x96x50xf32, #tpu.memory_space<vmem>>, vector<1x96x50xf32>
    %17 = vector.shape_cast %16 : vector<1x96x50xf32> to vector<96x50xf32>
    %cst_12 = arith.constant dense<0.000000e+00> : vector<25x50xf32>
    %18 = tpu.matmul %15, %17, %cst_12 {dimension_numbers = #tpu.dot_dimension_numbers<[1], [0], [0], [1], [0, 0, 1, 1], [], []>} : vector<25x96xf32>, vector<96x50xf32>, vector<25x50xf32> -> vector<25x50xf32>
    %19 = arith.addf %14, %18 : vector<25x50xf32>
    %20 = vector.extract_strided_slice %1 {offsets = [3, 0], sizes = [25, 96], strides = [1, 1]} : vector<32x96xf32> to vector<25x96xf32>
    %c3 = arith.constant 3 : index
    %c0_13 = arith.constant 0 : index
    %c0_14 = arith.constant 0 : index
    %21 = vector.load %arg2[%c3, %c0_13, %c0_14] : memref<8x96x50xf32, #tpu.memory_space<vmem>>, vector<1x96x50xf32>
    %22 = vector.shape_cast %21 : vector<1x96x50xf32> to vector<96x50xf32>
    %cst_15 = arith.constant dense<0.000000e+00> : vector<25x50xf32>
    %23 = tpu.matmul %20, %22, %cst_15 {dimension_numbers = #tpu.dot_dimension_numbers<[1], [0], [0], [1], [0, 0, 1, 1], [], []>} : vector<25x96xf32>, vector<96x50xf32>, vector<25x50xf32> -> vector<25x50xf32>
    %24 = arith.addf %19, %23 : vector<25x50xf32>
    %25 = vector.extract_strided_slice %1 {offsets = [4, 0], sizes = [25, 96], strides = [1, 1]} : vector<32x96xf32> to vector<25x96xf32>
    %c4 = arith.constant 4 : index
    %c0_16 = arith.constant 0 : index
    %c0_17 = arith.constant 0 : index
    %26 = vector.load %arg2[%c4, %c0_16, %c0_17] : memref<8x96x50xf32, #tpu.memory_space<vmem>>, vector<1x96x50xf32>
    %27 = vector.shape_cast %26 : vector<1x96x50xf32> to vector<96x50xf32>
    %cst_18 = arith.constant dense<0.000000e+00> : vector<25x50xf32>
    %28 = tpu.matmul %25, %27, %cst_18 {dimension_numbers = #tpu.dot_dimension_numbers<[1], [0], [0], [1], [0, 0, 1, 1], [], []>} : vector<25x96xf32>, vector<96x50xf32>, vector<25x50xf32> -> vector<25x50xf32>
    %29 = arith.addf %24, %28 : vector<25x50xf32>
    %30 = vector.extract_strided_slice %1 {offsets = [5, 0], sizes = [25, 96], strides = [1, 1]} : vector<32x96xf32> to vector<25x96xf32>
    %c5 = arith.constant 5 : index
    %c0_19 = arith.constant 0 : index
    %c0_20 = arith.constant 0 : index
    %31 = vector.load %arg2[%c5, %c0_19, %c0_20] : memref<8x96x50xf32, #tpu.memory_space<vmem>>, vector<1x96x50xf32>
    %32 = vector.shape_cast %31 : vector<1x96x50xf32> to vector<96x50xf32>
    %cst_21 = arith.constant dense<0.000000e+00> : vector<25x50xf32>
    %33 = tpu.matmul %30, %32, %cst_21 {dimension_numbers = #tpu.dot_dimension_numbers<[1], [0], [0], [1], [0, 0, 1, 1], [], []>} : vector<25x96xf32>, vector<96x50xf32>, vector<25x50xf32> -> vector<25x50xf32>
    %34 = arith.addf %29, %33 : vector<25x50xf32>
    %35 = vector.extract_strided_slice %1 {offsets = [6, 0], sizes = [25, 96], strides = [1, 1]} : vector<32x96xf32> to vector<25x96xf32>
    %c6 = arith.constant 6 : index
    %c0_22 = arith.constant 0 : index
    %c0_23 = arith.constant 0 : index
    %36 = vector.load %arg2[%c6, %c0_22, %c0_23] : memref<8x96x50xf32, #tpu.memory_space<vmem>>, vector<1x96x50xf32>
    %37 = vector.shape_cast %36 : vector<1x96x50xf32> to vector<96x50xf32>
    %cst_24 = arith.constant dense<0.000000e+00> : vector<25x50xf32>
    %38 = tpu.matmul %35, %37, %cst_24 {dimension_numbers = #tpu.dot_dimension_numbers<[1], [0], [0], [1], [0, 0, 1, 1], [], []>} : vector<25x96xf32>, vector<96x50xf32>, vector<25x50xf32> -> vector<25x50xf32>
    %39 = arith.addf %34, %38 : vector<25x50xf32>
    %40 = vector.extract_strided_slice %1 {offsets = [7, 0], sizes = [25, 96], strides = [1, 1]} : vector<32x96xf32> to vector<25x96xf32>
    %c7 = arith.constant 7 : index
    %c0_25 = arith.constant 0 : index
    %c0_26 = arith.constant 0 : index
    %41 = vector.load %arg2[%c7, %c0_25, %c0_26] : memref<8x96x50xf32, #tpu.memory_space<vmem>>, vector<1x96x50xf32>
    %42 = vector.shape_cast %41 : vector<1x96x50xf32> to vector<96x50xf32>
    %cst_27 = arith.constant dense<0.000000e+00> : vector<25x50xf32>
    %43 = tpu.matmul %40, %42, %cst_27 {dimension_numbers = #tpu.dot_dimension_numbers<[1], [0], [0], [1], [0, 0, 1, 1], [], []>} : vector<25x96xf32>, vector<96x50xf32>, vector<25x50xf32> -> vector<25x50xf32>
    %44 = arith.addf %39, %43 : vector<25x50xf32>
    %cst_28 = arith.constant 0.000000e+00 : f32
    %45 = vector.broadcast %cst_28 : f32 to vector<25x50xf32>
    %46 = arith.maximumf %44, %45 : vector<25x50xf32>
    %c0_29 = arith.constant 0 : index
    %c0_30 = arith.constant 0 : index
    %47 = vector.load %arg5[%c0_29, %c0_30] : memref<1x72xf32, #tpu.memory_space<vmem>>, vector<1x72xf32>
    %48 = vector.shape_cast %47 : vector<1x72xf32> to vector<1x72xf32>
    %49 = vector.broadcast %48 : vector<1x72xf32> to vector<18x72xf32>
    %50 = vector.extract_strided_slice %46 {offsets = [0, 0], sizes = [18, 50], strides = [1, 1]} : vector<25x50xf32> to vector<18x50xf32>
    %c0_31 = arith.constant 0 : index
    %c0_32 = arith.constant 0 : index
    %c0_33 = arith.constant 0 : index
    %51 = vector.load %arg4[%c0_31, %c0_32, %c0_33] : memref<8x50x72xf32, #tpu.memory_space<vmem>>, vector<1x50x72xf32>
    %52 = vector.shape_cast %51 : vector<1x50x72xf32> to vector<50x72xf32>
    %cst_34 = arith.constant dense<0.000000e+00> : vector<18x72xf32>
    %53 = tpu.matmul %50, %52, %cst_34 {dimension_numbers = #tpu.dot_dimension_numbers<[1], [0], [0], [1], [0, 0, 1, 1], [], []>} : vector<18x50xf32>, vector<50x72xf32>, vector<18x72xf32> -> vector<18x72xf32>
    %54 = arith.addf %49, %53 : vector<18x72xf32>
    %55 = vector.extract_strided_slice %46 {offsets = [1, 0], sizes = [18, 50], strides = [1, 1]} : vector<25x50xf32> to vector<18x50xf32>
    %c1_35 = arith.constant 1 : index
    %c0_36 = arith.constant 0 : index
    %c0_37 = arith.constant 0 : index
    %56 = vector.load %arg4[%c1_35, %c0_36, %c0_37] : memref<8x50x72xf32, #tpu.memory_space<vmem>>, vector<1x50x72xf32>
    %57 = vector.shape_cast %56 : vector<1x50x72xf32> to vector<50x72xf32>
    %cst_38 = arith.constant dense<0.000000e+00> : vector<18x72xf32>
    %58 = tpu.matmul %55, %57, %cst_38 {dimension_numbers = #tpu.dot_dimension_numbers<[1], [0], [0], [1], [0, 0, 1, 1], [], []>} : vector<18x50xf32>, vector<50x72xf32>, vector<18x72xf32> -> vector<18x72xf32>
    %59 = arith.addf %54, %58 : vector<18x72xf32>
    %60 = vector.extract_strided_slice %46 {offsets = [2, 0], sizes = [18, 50], strides = [1, 1]} : vector<25x50xf32> to vector<18x50xf32>
    %c2_39 = arith.constant 2 : index
    %c0_40 = arith.constant 0 : index
    %c0_41 = arith.constant 0 : index
    %61 = vector.load %arg4[%c2_39, %c0_40, %c0_41] : memref<8x50x72xf32, #tpu.memory_space<vmem>>, vector<1x50x72xf32>
    %62 = vector.shape_cast %61 : vector<1x50x72xf32> to vector<50x72xf32>
    %cst_42 = arith.constant dense<0.000000e+00> : vector<18x72xf32>
    %63 = tpu.matmul %60, %62, %cst_42 {dimension_numbers = #tpu.dot_dimension_numbers<[1], [0], [0], [1], [0, 0, 1, 1], [], []>} : vector<18x50xf32>, vector<50x72xf32>, vector<18x72xf32> -> vector<18x72xf32>
    %64 = arith.addf %59, %63 : vector<18x72xf32>
    %65 = vector.extract_strided_slice %46 {offsets = [3, 0], sizes = [18, 50], strides = [1, 1]} : vector<25x50xf32> to vector<18x50xf32>
    %c3_43 = arith.constant 3 : index
    %c0_44 = arith.constant 0 : index
    %c0_45 = arith.constant 0 : index
    %66 = vector.load %arg4[%c3_43, %c0_44, %c0_45] : memref<8x50x72xf32, #tpu.memory_space<vmem>>, vector<1x50x72xf32>
    %67 = vector.shape_cast %66 : vector<1x50x72xf32> to vector<50x72xf32>
    %cst_46 = arith.constant dense<0.000000e+00> : vector<18x72xf32>
    %68 = tpu.matmul %65, %67, %cst_46 {dimension_numbers = #tpu.dot_dimension_numbers<[1], [0], [0], [1], [0, 0, 1, 1], [], []>} : vector<18x50xf32>, vector<50x72xf32>, vector<18x72xf32> -> vector<18x72xf32>
    %69 = arith.addf %64, %68 : vector<18x72xf32>
    %70 = vector.extract_strided_slice %46 {offsets = [4, 0], sizes = [18, 50], strides = [1, 1]} : vector<25x50xf32> to vector<18x50xf32>
    %c4_47 = arith.constant 4 : index
    %c0_48 = arith.constant 0 : index
    %c0_49 = arith.constant 0 : index
    %71 = vector.load %arg4[%c4_47, %c0_48, %c0_49] : memref<8x50x72xf32, #tpu.memory_space<vmem>>, vector<1x50x72xf32>
    %72 = vector.shape_cast %71 : vector<1x50x72xf32> to vector<50x72xf32>
    %cst_50 = arith.constant dense<0.000000e+00> : vector<18x72xf32>
    %73 = tpu.matmul %70, %72, %cst_50 {dimension_numbers = #tpu.dot_dimension_numbers<[1], [0], [0], [1], [0, 0, 1, 1], [], []>} : vector<18x50xf32>, vector<50x72xf32>, vector<18x72xf32> -> vector<18x72xf32>
    %74 = arith.addf %69, %73 : vector<18x72xf32>
    %75 = vector.extract_strided_slice %46 {offsets = [5, 0], sizes = [18, 50], strides = [1, 1]} : vector<25x50xf32> to vector<18x50xf32>
    %c5_51 = arith.constant 5 : index
    %c0_52 = arith.constant 0 : index
    %c0_53 = arith.constant 0 : index
    %76 = vector.load %arg4[%c5_51, %c0_52, %c0_53] : memref<8x50x72xf32, #tpu.memory_space<vmem>>, vector<1x50x72xf32>
    %77 = vector.shape_cast %76 : vector<1x50x72xf32> to vector<50x72xf32>
    %cst_54 = arith.constant dense<0.000000e+00> : vector<18x72xf32>
    %78 = tpu.matmul %75, %77, %cst_54 {dimension_numbers = #tpu.dot_dimension_numbers<[1], [0], [0], [1], [0, 0, 1, 1], [], []>} : vector<18x50xf32>, vector<50x72xf32>, vector<18x72xf32> -> vector<18x72xf32>
    %79 = arith.addf %74, %78 : vector<18x72xf32>
    %80 = vector.extract_strided_slice %46 {offsets = [6, 0], sizes = [18, 50], strides = [1, 1]} : vector<25x50xf32> to vector<18x50xf32>
    %c6_55 = arith.constant 6 : index
    %c0_56 = arith.constant 0 : index
    %c0_57 = arith.constant 0 : index
    %81 = vector.load %arg4[%c6_55, %c0_56, %c0_57] : memref<8x50x72xf32, #tpu.memory_space<vmem>>, vector<1x50x72xf32>
    %82 = vector.shape_cast %81 : vector<1x50x72xf32> to vector<50x72xf32>
    %cst_58 = arith.constant dense<0.000000e+00> : vector<18x72xf32>
    %83 = tpu.matmul %80, %82, %cst_58 {dimension_numbers = #tpu.dot_dimension_numbers<[1], [0], [0], [1], [0, 0, 1, 1], [], []>} : vector<18x50xf32>, vector<50x72xf32>, vector<18x72xf32> -> vector<18x72xf32>
    %84 = arith.addf %79, %83 : vector<18x72xf32>
    %85 = vector.extract_strided_slice %46 {offsets = [7, 0], sizes = [18, 50], strides = [1, 1]} : vector<25x50xf32> to vector<18x50xf32>
    %c7_59 = arith.constant 7 : index
    %c0_60 = arith.constant 0 : index
    %c0_61 = arith.constant 0 : index
    %86 = vector.load %arg4[%c7_59, %c0_60, %c0_61] : memref<8x50x72xf32, #tpu.memory_space<vmem>>, vector<1x50x72xf32>
    %87 = vector.shape_cast %86 : vector<1x50x72xf32> to vector<50x72xf32>
    %cst_62 = arith.constant dense<0.000000e+00> : vector<18x72xf32>
    %88 = tpu.matmul %85, %87, %cst_62 {dimension_numbers = #tpu.dot_dimension_numbers<[1], [0], [0], [1], [0, 0, 1, 1], [], []>} : vector<18x50xf32>, vector<50x72xf32>, vector<18x72xf32> -> vector<18x72xf32>
    %89 = arith.addf %84, %88 : vector<18x72xf32>
    %cst_63 = arith.constant 0.000000e+00 : f32
    %90 = vector.broadcast %cst_63 : f32 to vector<18x72xf32>
    %91 = arith.maximumf %89, %90 : vector<18x72xf32>
    %c0_64 = arith.constant 0 : index
    %c0_65 = arith.constant 0 : index
    %92 = vector.load %arg7[%c0_64, %c0_65] : memref<1x88xf32, #tpu.memory_space<vmem>>, vector<1x88xf32>
    %93 = vector.shape_cast %92 : vector<1x88xf32> to vector<1x88xf32>
    %94 = vector.broadcast %93 : vector<1x88xf32> to vector<11x88xf32>
    %95 = vector.extract_strided_slice %91 {offsets = [0, 0], sizes = [11, 72], strides = [1, 1]} : vector<18x72xf32> to vector<11x72xf32>
    %c0_66 = arith.constant 0 : index
    %c0_67 = arith.constant 0 : index
    %c0_68 = arith.constant 0 : index
    %96 = vector.load %arg6[%c0_66, %c0_67, %c0_68] : memref<8x72x88xf32, #tpu.memory_space<vmem>>, vector<1x72x88xf32>
    %97 = vector.shape_cast %96 : vector<1x72x88xf32> to vector<72x88xf32>
    %cst_69 = arith.constant dense<0.000000e+00> : vector<11x88xf32>
    %98 = tpu.matmul %95, %97, %cst_69 {dimension_numbers = #tpu.dot_dimension_numbers<[1], [0], [0], [1], [0, 0, 1, 1], [], []>} : vector<11x72xf32>, vector<72x88xf32>, vector<11x88xf32> -> vector<11x88xf32>
    %99 = arith.addf %94, %98 : vector<11x88xf32>
    %100 = vector.extract_strided_slice %91 {offsets = [1, 0], sizes = [11, 72], strides = [1, 1]} : vector<18x72xf32> to vector<11x72xf32>
    %c1_70 = arith.constant 1 : index
    %c0_71 = arith.constant 0 : index
    %c0_72 = arith.constant 0 : index
    %101 = vector.load %arg6[%c1_70, %c0_71, %c0_72] : memref<8x72x88xf32, #tpu.memory_space<vmem>>, vector<1x72x88xf32>
    %102 = vector.shape_cast %101 : vector<1x72x88xf32> to vector<72x88xf32>
    %cst_73 = arith.constant dense<0.000000e+00> : vector<11x88xf32>
    %103 = tpu.matmul %100, %102, %cst_73 {dimension_numbers = #tpu.dot_dimension_numbers<[1], [0], [0], [1], [0, 0, 1, 1], [], []>} : vector<11x72xf32>, vector<72x88xf32>, vector<11x88xf32> -> vector<11x88xf32>
    %104 = arith.addf %99, %103 : vector<11x88xf32>
    %105 = vector.extract_strided_slice %91 {offsets = [2, 0], sizes = [11, 72], strides = [1, 1]} : vector<18x72xf32> to vector<11x72xf32>
    %c2_74 = arith.constant 2 : index
    %c0_75 = arith.constant 0 : index
    %c0_76 = arith.constant 0 : index
    %106 = vector.load %arg6[%c2_74, %c0_75, %c0_76] : memref<8x72x88xf32, #tpu.memory_space<vmem>>, vector<1x72x88xf32>
    %107 = vector.shape_cast %106 : vector<1x72x88xf32> to vector<72x88xf32>
    %cst_77 = arith.constant dense<0.000000e+00> : vector<11x88xf32>
    %108 = tpu.matmul %105, %107, %cst_77 {dimension_numbers = #tpu.dot_dimension_numbers<[1], [0], [0], [1], [0, 0, 1, 1], [], []>} : vector<11x72xf32>, vector<72x88xf32>, vector<11x88xf32> -> vector<11x88xf32>
    %109 = arith.addf %104, %108 : vector<11x88xf32>
    %110 = vector.extract_strided_slice %91 {offsets = [3, 0], sizes = [11, 72], strides = [1, 1]} : vector<18x72xf32> to vector<11x72xf32>
    %c3_78 = arith.constant 3 : index
    %c0_79 = arith.constant 0 : index
    %c0_80 = arith.constant 0 : index
    %111 = vector.load %arg6[%c3_78, %c0_79, %c0_80] : memref<8x72x88xf32, #tpu.memory_space<vmem>>, vector<1x72x88xf32>
    %112 = vector.shape_cast %111 : vector<1x72x88xf32> to vector<72x88xf32>
    %cst_81 = arith.constant dense<0.000000e+00> : vector<11x88xf32>
    %113 = tpu.matmul %110, %112, %cst_81 {dimension_numbers = #tpu.dot_dimension_numbers<[1], [0], [0], [1], [0, 0, 1, 1], [], []>} : vector<11x72xf32>, vector<72x88xf32>, vector<11x88xf32> -> vector<11x88xf32>
    %114 = arith.addf %109, %113 : vector<11x88xf32>
    %115 = vector.extract_strided_slice %91 {offsets = [4, 0], sizes = [11, 72], strides = [1, 1]} : vector<18x72xf32> to vector<11x72xf32>
    %c4_82 = arith.constant 4 : index
    %c0_83 = arith.constant 0 : index
    %c0_84 = arith.constant 0 : index
    %116 = vector.load %arg6[%c4_82, %c0_83, %c0_84] : memref<8x72x88xf32, #tpu.memory_space<vmem>>, vector<1x72x88xf32>
    %117 = vector.shape_cast %116 : vector<1x72x88xf32> to vector<72x88xf32>
    %cst_85 = arith.constant dense<0.000000e+00> : vector<11x88xf32>
    %118 = tpu.matmul %115, %117, %cst_85 {dimension_numbers = #tpu.dot_dimension_numbers<[1], [0], [0], [1], [0, 0, 1, 1], [], []>} : vector<11x72xf32>, vector<72x88xf32>, vector<11x88xf32> -> vector<11x88xf32>
    %119 = arith.addf %114, %118 : vector<11x88xf32>
    %120 = vector.extract_strided_slice %91 {offsets = [5, 0], sizes = [11, 72], strides = [1, 1]} : vector<18x72xf32> to vector<11x72xf32>
    %c5_86 = arith.constant 5 : index
    %c0_87 = arith.constant 0 : index
    %c0_88 = arith.constant 0 : index
    %121 = vector.load %arg6[%c5_86, %c0_87, %c0_88] : memref<8x72x88xf32, #tpu.memory_space<vmem>>, vector<1x72x88xf32>
    %122 = vector.shape_cast %121 : vector<1x72x88xf32> to vector<72x88xf32>
    %cst_89 = arith.constant dense<0.000000e+00> : vector<11x88xf32>
    %123 = tpu.matmul %120, %122, %cst_89 {dimension_numbers = #tpu.dot_dimension_numbers<[1], [0], [0], [1], [0, 0, 1, 1], [], []>} : vector<11x72xf32>, vector<72x88xf32>, vector<11x88xf32> -> vector<11x88xf32>
    %124 = arith.addf %119, %123 : vector<11x88xf32>
    %125 = vector.extract_strided_slice %91 {offsets = [6, 0], sizes = [11, 72], strides = [1, 1]} : vector<18x72xf32> to vector<11x72xf32>
    %c6_90 = arith.constant 6 : index
    %c0_91 = arith.constant 0 : index
    %c0_92 = arith.constant 0 : index
    %126 = vector.load %arg6[%c6_90, %c0_91, %c0_92] : memref<8x72x88xf32, #tpu.memory_space<vmem>>, vector<1x72x88xf32>
    %127 = vector.shape_cast %126 : vector<1x72x88xf32> to vector<72x88xf32>
    %cst_93 = arith.constant dense<0.000000e+00> : vector<11x88xf32>
    %128 = tpu.matmul %125, %127, %cst_93 {dimension_numbers = #tpu.dot_dimension_numbers<[1], [0], [0], [1], [0, 0, 1, 1], [], []>} : vector<11x72xf32>, vector<72x88xf32>, vector<11x88xf32> -> vector<11x88xf32>
    %129 = arith.addf %124, %128 : vector<11x88xf32>
    %130 = vector.extract_strided_slice %91 {offsets = [7, 0], sizes = [11, 72], strides = [1, 1]} : vector<18x72xf32> to vector<11x72xf32>
    %c7_94 = arith.constant 7 : index
    %c0_95 = arith.constant 0 : index
    %c0_96 = arith.constant 0 : index
    %131 = vector.load %arg6[%c7_94, %c0_95, %c0_96] : memref<8x72x88xf32, #tpu.memory_space<vmem>>, vector<1x72x88xf32>
    %132 = vector.shape_cast %131 : vector<1x72x88xf32> to vector<72x88xf32>
    %cst_97 = arith.constant dense<0.000000e+00> : vector<11x88xf32>
    %133 = tpu.matmul %130, %132, %cst_97 {dimension_numbers = #tpu.dot_dimension_numbers<[1], [0], [0], [1], [0, 0, 1, 1], [], []>} : vector<11x72xf32>, vector<72x88xf32>, vector<11x88xf32> -> vector<11x88xf32>
    %134 = arith.addf %129, %133 : vector<11x88xf32>
    %cst_98 = arith.constant 0.000000e+00 : f32
    %135 = vector.broadcast %cst_98 : f32 to vector<11x88xf32>
    %136 = arith.maximumf %134, %135 : vector<11x88xf32>
    %c0_99 = arith.constant 0 : index
    %c0_100 = arith.constant 0 : index
    %137 = vector.load %arg9[%c0_99, %c0_100] : memref<1x64xf32, #tpu.memory_space<vmem>>, vector<1x64xf32>
    %138 = vector.shape_cast %137 : vector<1x64xf32> to vector<1x64xf32>
    %139 = vector.broadcast %138 : vector<1x64xf32> to vector<4x64xf32>
    %140 = vector.extract_strided_slice %136 {offsets = [0, 0], sizes = [4, 88], strides = [1, 1]} : vector<11x88xf32> to vector<4x88xf32>
    %c0_101 = arith.constant 0 : index
    %c0_102 = arith.constant 0 : index
    %c0_103 = arith.constant 0 : index
    %141 = vector.load %arg8[%c0_101, %c0_102, %c0_103] : memref<8x88x64xf32, #tpu.memory_space<vmem>>, vector<1x88x64xf32>
    %142 = vector.shape_cast %141 : vector<1x88x64xf32> to vector<88x64xf32>
    %cst_104 = arith.constant dense<0.000000e+00> : vector<4x64xf32>
    %143 = tpu.matmul %140, %142, %cst_104 {dimension_numbers = #tpu.dot_dimension_numbers<[1], [0], [0], [1], [0, 0, 1, 1], [], []>} : vector<4x88xf32>, vector<88x64xf32>, vector<4x64xf32> -> vector<4x64xf32>
    %144 = arith.addf %139, %143 : vector<4x64xf32>
    %145 = vector.extract_strided_slice %136 {offsets = [1, 0], sizes = [4, 88], strides = [1, 1]} : vector<11x88xf32> to vector<4x88xf32>
    %c1_105 = arith.constant 1 : index
    %c0_106 = arith.constant 0 : index
    %c0_107 = arith.constant 0 : index
    %146 = vector.load %arg8[%c1_105, %c0_106, %c0_107] : memref<8x88x64xf32, #tpu.memory_space<vmem>>, vector<1x88x64xf32>
    %147 = vector.shape_cast %146 : vector<1x88x64xf32> to vector<88x64xf32>
    %cst_108 = arith.constant dense<0.000000e+00> : vector<4x64xf32>
    %148 = tpu.matmul %145, %147, %cst_108 {dimension_numbers = #tpu.dot_dimension_numbers<[1], [0], [0], [1], [0, 0, 1, 1], [], []>} : vector<4x88xf32>, vector<88x64xf32>, vector<4x64xf32> -> vector<4x64xf32>
    %149 = arith.addf %144, %148 : vector<4x64xf32>
    %150 = vector.extract_strided_slice %136 {offsets = [2, 0], sizes = [4, 88], strides = [1, 1]} : vector<11x88xf32> to vector<4x88xf32>
    %c2_109 = arith.constant 2 : index
    %c0_110 = arith.constant 0 : index
    %c0_111 = arith.constant 0 : index
    %151 = vector.load %arg8[%c2_109, %c0_110, %c0_111] : memref<8x88x64xf32, #tpu.memory_space<vmem>>, vector<1x88x64xf32>
    %152 = vector.shape_cast %151 : vector<1x88x64xf32> to vector<88x64xf32>
    %cst_112 = arith.constant dense<0.000000e+00> : vector<4x64xf32>
    %153 = tpu.matmul %150, %152, %cst_112 {dimension_numbers = #tpu.dot_dimension_numbers<[1], [0], [0], [1], [0, 0, 1, 1], [], []>} : vector<4x88xf32>, vector<88x64xf32>, vector<4x64xf32> -> vector<4x64xf32>
    %154 = arith.addf %149, %153 : vector<4x64xf32>
    %155 = vector.extract_strided_slice %136 {offsets = [3, 0], sizes = [4, 88], strides = [1, 1]} : vector<11x88xf32> to vector<4x88xf32>
    %c3_113 = arith.constant 3 : index
    %c0_114 = arith.constant 0 : index
    %c0_115 = arith.constant 0 : index
    %156 = vector.load %arg8[%c3_113, %c0_114, %c0_115] : memref<8x88x64xf32, #tpu.memory_space<vmem>>, vector<1x88x64xf32>
    %157 = vector.shape_cast %156 : vector<1x88x64xf32> to vector<88x64xf32>
    %cst_116 = arith.constant dense<0.000000e+00> : vector<4x64xf32>
    %158 = tpu.matmul %155, %157, %cst_116 {dimension_numbers = #tpu.dot_dimension_numbers<[1], [0], [0], [1], [0, 0, 1, 1], [], []>} : vector<4x88xf32>, vector<88x64xf32>, vector<4x64xf32> -> vector<4x64xf32>
    %159 = arith.addf %154, %158 : vector<4x64xf32>
    %160 = vector.extract_strided_slice %136 {offsets = [4, 0], sizes = [4, 88], strides = [1, 1]} : vector<11x88xf32> to vector<4x88xf32>
    %c4_117 = arith.constant 4 : index
    %c0_118 = arith.constant 0 : index
    %c0_119 = arith.constant 0 : index
    %161 = vector.load %arg8[%c4_117, %c0_118, %c0_119] : memref<8x88x64xf32, #tpu.memory_space<vmem>>, vector<1x88x64xf32>
    %162 = vector.shape_cast %161 : vector<1x88x64xf32> to vector<88x64xf32>
    %cst_120 = arith.constant dense<0.000000e+00> : vector<4x64xf32>
    %163 = tpu.matmul %160, %162, %cst_120 {dimension_numbers = #tpu.dot_dimension_numbers<[1], [0], [0], [1], [0, 0, 1, 1], [], []>} : vector<4x88xf32>, vector<88x64xf32>, vector<4x64xf32> -> vector<4x64xf32>
    %164 = arith.addf %159, %163 : vector<4x64xf32>
    %165 = vector.extract_strided_slice %136 {offsets = [5, 0], sizes = [4, 88], strides = [1, 1]} : vector<11x88xf32> to vector<4x88xf32>
    %c5_121 = arith.constant 5 : index
    %c0_122 = arith.constant 0 : index
    %c0_123 = arith.constant 0 : index
    %166 = vector.load %arg8[%c5_121, %c0_122, %c0_123] : memref<8x88x64xf32, #tpu.memory_space<vmem>>, vector<1x88x64xf32>
    %167 = vector.shape_cast %166 : vector<1x88x64xf32> to vector<88x64xf32>
    %cst_124 = arith.constant dense<0.000000e+00> : vector<4x64xf32>
    %168 = tpu.matmul %165, %167, %cst_124 {dimension_numbers = #tpu.dot_dimension_numbers<[1], [0], [0], [1], [0, 0, 1, 1], [], []>} : vector<4x88xf32>, vector<88x64xf32>, vector<4x64xf32> -> vector<4x64xf32>
    %169 = arith.addf %164, %168 : vector<4x64xf32>
    %170 = vector.extract_strided_slice %136 {offsets = [6, 0], sizes = [4, 88], strides = [1, 1]} : vector<11x88xf32> to vector<4x88xf32>
    %c6_125 = arith.constant 6 : index
    %c0_126 = arith.constant 0 : index
    %c0_127 = arith.constant 0 : index
    %171 = vector.load %arg8[%c6_125, %c0_126, %c0_127] : memref<8x88x64xf32, #tpu.memory_space<vmem>>, vector<1x88x64xf32>
    %172 = vector.shape_cast %171 : vector<1x88x64xf32> to vector<88x64xf32>
    %cst_128 = arith.constant dense<0.000000e+00> : vector<4x64xf32>
    %173 = tpu.matmul %170, %172, %cst_128 {dimension_numbers = #tpu.dot_dimension_numbers<[1], [0], [0], [1], [0, 0, 1, 1], [], []>} : vector<4x88xf32>, vector<88x64xf32>, vector<4x64xf32> -> vector<4x64xf32>
    %174 = arith.addf %169, %173 : vector<4x64xf32>
    %175 = vector.extract_strided_slice %136 {offsets = [7, 0], sizes = [4, 88], strides = [1, 1]} : vector<11x88xf32> to vector<4x88xf32>
    %c7_129 = arith.constant 7 : index
    %c0_130 = arith.constant 0 : index
    %c0_131 = arith.constant 0 : index
    %176 = vector.load %arg8[%c7_129, %c0_130, %c0_131] : memref<8x88x64xf32, #tpu.memory_space<vmem>>, vector<1x88x64xf32>
    %177 = vector.shape_cast %176 : vector<1x88x64xf32> to vector<88x64xf32>
    %cst_132 = arith.constant dense<0.000000e+00> : vector<4x64xf32>
    %178 = tpu.matmul %175, %177, %cst_132 {dimension_numbers = #tpu.dot_dimension_numbers<[1], [0], [0], [1], [0, 0, 1, 1], [], []>} : vector<4x88xf32>, vector<88x64xf32>, vector<4x64xf32> -> vector<4x64xf32>
    %179 = arith.addf %174, %178 : vector<4x64xf32>
    %cst_133 = arith.constant 0.000000e+00 : f32
    %180 = vector.broadcast %cst_133 : f32 to vector<4x64xf32>
    %181 = arith.maximumf %179, %180 : vector<4x64xf32>
    %182 = vector.extract_strided_slice %181 {offsets = [0, 0], sizes = [4, 48], strides = [1, 1]} : vector<4x64xf32> to vector<4x48xf32>
    %183 = vector.extract_strided_slice %181 {offsets = [0, 16], sizes = [4, 48], strides = [1, 1]} : vector<4x64xf32> to vector<4x48xf32>
    %184 = arith.maximumf %182, %183 : vector<4x48xf32>
    %c0_134 = arith.constant 0 : index
    %c0_135 = arith.constant 0 : index
    %185 = vector.load %arg11[%c0_134, %c0_135] : memref<1x4xf32, #tpu.memory_space<vmem>>, vector<1x4xf32>
    %186 = vector.extract_strided_slice %184 {offsets = [0, 0], sizes = [1, 48], strides = [1, 1]} : vector<4x48xf32> to vector<1x48xf32>
    %187 = vector.extract_strided_slice %184 {offsets = [1, 0], sizes = [1, 48], strides = [1, 1]} : vector<4x48xf32> to vector<1x48xf32>
    %188 = arith.maximumf %186, %187 : vector<1x48xf32>
    %c0_136 = arith.constant 0 : index
    %c0_137 = arith.constant 0 : index
    %c0_138 = arith.constant 0 : index
    %189 = vector.load %arg10[%c0_136, %c0_137, %c0_138] : memref<2x48x4xf32, #tpu.memory_space<vmem>>, vector<1x48x4xf32>
    %190 = vector.shape_cast %189 : vector<1x48x4xf32> to vector<48x4xf32>
    %cst_139 = arith.constant dense<0.000000e+00> : vector<1x4xf32>
    %191 = tpu.matmul %188, %190, %cst_139 {dimension_numbers = #tpu.dot_dimension_numbers<[1], [0], [0], [1], [0, 0, 1, 1], [], []>} : vector<1x48xf32>, vector<48x4xf32>, vector<1x4xf32> -> vector<1x4xf32>
    %192 = arith.addf %185, %191 : vector<1x4xf32>
    %193 = vector.extract_strided_slice %184 {offsets = [2, 0], sizes = [1, 48], strides = [1, 1]} : vector<4x48xf32> to vector<1x48xf32>
    %194 = vector.extract_strided_slice %184 {offsets = [3, 0], sizes = [1, 48], strides = [1, 1]} : vector<4x48xf32> to vector<1x48xf32>
    %195 = arith.maximumf %193, %194 : vector<1x48xf32>
    %c1_140 = arith.constant 1 : index
    %c0_141 = arith.constant 0 : index
    %c0_142 = arith.constant 0 : index
    %196 = vector.load %arg10[%c1_140, %c0_141, %c0_142] : memref<2x48x4xf32, #tpu.memory_space<vmem>>, vector<1x48x4xf32>
    %197 = vector.shape_cast %196 : vector<1x48x4xf32> to vector<48x4xf32>
    %cst_143 = arith.constant dense<0.000000e+00> : vector<1x4xf32>
    %198 = tpu.matmul %195, %197, %cst_143 {dimension_numbers = #tpu.dot_dimension_numbers<[1], [0], [0], [1], [0, 0, 1, 1], [], []>} : vector<1x48xf32>, vector<48x4xf32>, vector<1x4xf32> -> vector<1x4xf32>
    %199 = arith.addf %192, %198 : vector<1x4xf32>
    %c0_144 = arith.constant 0 : index
    %c0_145 = arith.constant 0 : index
    %c0_146 = arith.constant 0 : index
    %200 = vector.load %arg12[%c0_144, %c0_145, %c0_146] : memref<1x1x4xf32, #tpu.memory_space<vmem>>, vector<1x1x4xf32>
    %201 = vector.shape_cast %200 : vector<1x1x4xf32> to vector<1x4xf32>
    %202 = vector.shape_cast %199 : vector<1x4xf32> to vector<1x1x4xf32>
    tpu.vector_store %arg12[%c0_144, %c0_145, %c0_146], %202 {strides = array<i32>} : memref<1x1x4xf32, #tpu.memory_space<vmem>>, vector<1x1x4xf32>,
    return
  }
  func.func @transform_0(%arg0: i32) -> (i32, i32, i32) {
    %c0_i32 = arith.constant 0 : i32
    %c0_i32_0 = arith.constant 0 : i32
    %c0_i32_1 = arith.constant 0 : i32
    return %arg0, %c0_i32, %c0_i32_0 : i32, i32, i32
  }
  func.func @transform_1(%arg0: i32) -> (i32, i32, i32) {
    %c0_i32 = arith.constant 0 : i32
    %c0_i32_0 = arith.constant 0 : i32
    %c0_i32_1 = arith.constant 0 : i32
    %c0_i32_2 = arith.constant 0 : i32
    return %c0_i32, %c0_i32_0, %c0_i32_1 : i32, i32, i32
  }
  func.func @transform_2(%arg0: i32) -> (i32, i32) {
    %c0_i32 = arith.constant 0 : i32
    %c0_i32_0 = arith.constant 0 : i32
    %c0_i32_1 = arith.constant 0 : i32
    return %c0_i32, %c0_i32_0 : i32, i32
  }
  func.func @transform_3(%arg0: i32) -> (i32, i32, i32) {
    %c0_i32 = arith.constant 0 : i32
    %c0_i32_0 = arith.constant 0 : i32
    %c0_i32_1 = arith.constant 0 : i32
    %c0_i32_2 = arith.constant 0 : i32
    return %c0_i32, %c0_i32_0, %c0_i32_1 : i32, i32, i32
  }
  func.func @transform_4(%arg0: i32) -> (i32, i32) {
    %c0_i32 = arith.constant 0 : i32
    %c0_i32_0 = arith.constant 0 : i32
    %c0_i32_1 = arith.constant 0 : i32
    return %c0_i32, %c0_i32_0 : i32, i32
  }
  func.func @transform_5(%arg0: i32) -> (i32, i32, i32) {
    %c0_i32 = arith.constant 0 : i32
    %c0_i32_0 = arith.constant 0 : i32
    %c0_i32_1 = arith.constant 0 : i32
    %c0_i32_2 = arith.constant 0 : i32
    return %c0_i32, %c0_i32_0, %c0_i32_1 : i32, i32, i32
  }
  func.func @transform_6(%arg0: i32) -> (i32, i32) {
    %c0_i32 = arith.constant 0 : i32
    %c0_i32_0 = arith.constant 0 : i32
    %c0_i32_1 = arith.constant 0 : i32
    return %c0_i32, %c0_i32_0 : i32, i32
  }
  func.func @transform_7(%arg0: i32) -> (i32, i32, i32) {
    %c0_i32 = arith.constant 0 : i32
    %c0_i32_0 = arith.constant 0 : i32
    %c0_i32_1 = arith.constant 0 : i32
    %c0_i32_2 = arith.constant 0 : i32
    return %c0_i32, %c0_i32_0, %c0_i32_1 : i32, i32, i32
  }
  func.func @transform_8(%arg0: i32) -> (i32, i32) {
    %c0_i32 = arith.constant 0 : i32
    %c0_i32_0 = arith.constant 0 : i32
    %c0_i32_1 = arith.constant 0 : i32
    return %c0_i32, %c0_i32_0 : i32, i32
  }
  func.func @transform_9(%arg0: i32) -> (i32, i32, i32) {
    %c0_i32 = arith.constant 0 : i32
    %c0_i32_0 = arith.constant 0 : i32
    %c0_i32_1 = arith.constant 0 : i32
    %c0_i32_2 = arith.constant 0 : i32
    return %c0_i32, %c0_i32_0, %c0_i32_1 : i32, i32, i32
  }
  func.func @transform_10(%arg0: i32) -> (i32, i32) {
    %c0_i32 = arith.constant 0 : i32
    %c0_i32_0 = arith.constant 0 : i32
    %c0_i32_1 = arith.constant 0 : i32
    return %c0_i32, %c0_i32_0 : i32, i32
  }
  func.func @transform_11(%arg0: i32) -> (i32, i32, i32) {
    %c0_i32 = arith.constant 0 : i32
    %c0_i32_0 = arith.constant 0 : i32
    %c0_i32_1 = arith.constant 0 : i32
    return %arg0, %c0_i32, %c0_i32_0 : i32, i32, i32
  }
}

</mosaic_0001>

<llo_original>
// kernel: tpu_custom_call.1
$region0: #{tpu_custom_call.1}
  #allocation0 [shape = 'u32[]', space=smem, size = 0x4, offset = 0x4, fixed_abs, tag = 'smem constant byte address 0x4 - core index']
  #allocation1 [shape = 'u32[144,128]{1,0:T(1,128)}', space=vmem, size = 0x12000, scoped, tag = 'internal scratch']
  %s0 = inlined_call_operand.vmem [shape: f32[2,32,96], index: 0, kind: input, shape index: {}]
  %s1 = inlined_call_operand.vmem [shape: f32[8,96,50], index: 1, kind: input, shape index: {}]
  %s2 = inlined_call_operand.vmem [shape: f32[1,50], index: 2, kind: input, shape index: {}]
  %s3 = inlined_call_operand.vmem [shape: f32[8,50,72], index: 3, kind: input, shape index: {}]
  %s4 = inlined_call_operand.vmem [shape: f32[1,72], index: 4, kind: input, shape index: {}]
  %s5 = inlined_call_operand.vmem [shape: f32[8,72,88], index: 5, kind: input, shape index: {}]
  %s6 = inlined_call_operand.vmem [shape: f32[1,88], index: 6, kind: input, shape index: {}]
  %s7 = inlined_call_operand.vmem [shape: f32[8,88,64], index: 7, kind: input, shape index: {}]
  %s8 = inlined_call_operand.vmem [shape: f32[1,64], index: 8, kind: input, shape index: {}]
  %s9 = inlined_call_operand.vmem [shape: f32[2,48,4], index: 9, kind: input, shape index: {}]
  %s10 = inlined_call_operand.vmem [shape: f32[1,4], index: 10, kind: input, shape index: {}]
  %s11 = inlined_call_operand.hbm [shape: f32[2,1,4], index: 11, kind: output, shape index: {}]
  %s12 = sld [smem:[#allocation0]]
  $region77: #{tpu_custom_call.1} parent=0
    _
  %s14 = ssub.s32 1, %s12
  %s15 = scalar_select 0, %s14, %s12
  $region1: #{tpu_custom_call.1} parent=0
    #allocation2 [shape = 'u8[1024]{0}', space=vmem, size = 0x400, scoped, tag = 'output window, operand 0']
    #allocation3 [shape = 's32[2]{0}', space=sflag, size = 0x8, scoped, tag = 'scoped memory for tpu_custom_call.1']
    %16 = vsyncpa [#allocation3], 0
    %s17 = scalar_lea.sflag [#allocation3], 1
    %18 = vsyncpa %s17, 0
    loop: start=0, step=1, limit=4
    $region2: #{tpu_custom_call.1} parent=1 // loop_pre_header
      _
    $region3: #{tpu_custom_call.1} parent=1 // loop_header
      %s20 = sphi 0, %s24
      %p21 = scmp.ge.s32.totalorder %s20, 4
      %s30 = sphi 0, %s32
      %s33 = sphi 0, %s30
      %s34 = sphi 0, %s33
      %s50 = sphi 0, %s34
      %s54 = sphi 0, %s54
      %s56 = sphi 0, %s54
      %s57 = sphi 0, %s56
      %s71 = sphi 0, %s57
      %s75 = sphi 0, %s75
      %s77 = sphi 0, %s75
      %s78 = sphi 0, %s77
      %s92 = sphi 0, %s78
      %s96 = sphi 0, %s96
      %s98 = sphi 0, %s96
      %s99 = sphi 0, %s98
      %s113 = sphi 0, %s99
      %s117 = sphi 0, %s117
      %s119 = sphi 0, %s117
      %s120 = sphi 0, %s119
      %s134 = sphi 0, %s120
      %s138 = sphi 0, %s138
      %s140 = sphi 0, %s138
      %s141 = sphi 0, %s140
      %s155 = sphi 0, %s141
      %s159 = sphi 0, %s159
      %s161 = sphi 0, %s159
      %s162 = sphi 0, %s161
      %s176 = sphi 0, %s162
      %s180 = sphi 0, %s180
      %s182 = sphi 0, %s180
      %s183 = sphi 0, %s182
      %s197 = sphi 0, %s183
      %s201 = sphi 0, %s201
      %s203 = sphi 0, %s201
      %s204 = sphi 0, %s203
      %s218 = sphi 0, %s204
      %s222 = sphi 0, %s222
      %s224 = sphi 0, %s222
      %s225 = sphi 0, %s224
      %s239 = sphi 0, %s225
      %s243 = sphi 0, %s243
      %s245 = sphi 0, %s243
      %s246 = sphi 0, %s245
      %s260 = sphi 0, %s246
      %s266 = sphi 0, %s268
      %s269 = sphi 0, %s266
      %s270 = sphi 0, %s269
      %s286 = sphi 0, %s270
    $region4: #{tpu_custom_call.1} parent=1 // loop_header_branch
      %23 = sbr.rel (%p21) target = $region8
    $region5: #{tpu_custom_call.1} parent=1 // loop_body
      %s25 = ssub.s32 %s20, 1
      %s26 = ssub.s32 %s20, 2
      %s27 = sadd.s32 %s20, 1
      %s28 = ssub.s32 %s20, %s27
      %p29 = scmp.eq.s32.totalorder %s28, 0
      %s31 = sadd.s32 %s30, 1
      %s32 = scalar_select %p29, %s30, %s31
      %p35 = pneg %p29
      %p36 = scmp.eq.s32.totalorder %s20, 1
      %p37 = por %p35, %p36
      %p38 = scmp.ne.s32.totalorder %s30, %s33
      %p39 = scmp.eq.s32.totalorder %s20, 0
      %p40 = por %p38, %p39
      %p41 = scmp.ne.s32.totalorder %s30, %s33
      %p42 = scmp.eq.s32.totalorder %s25, 1
      %p43 = por %p41, %p42
      %p44 = scmp.ne.s32.totalorder %s33, %s34
      %p45 = scmp.eq.s32.totalorder %s25, 0
      %p46 = por %p44, %p45
      %p47 = scmp.ne.s32.totalorder %s33, %s34
      %p48 = scmp.eq.s32.totalorder %s26, 1
      %p49 = por %p47, %p48
      %p51 = scmp.ne.s32.totalorder %s34, %s50
      %p52 = scmp.eq.s32.totalorder %s26, 0
      %p53 = por %p51, %p52
      %s55 = sadd.s32 %s54, 1
      %p58 = scmp.eq.s32.totalorder %s20, 1
      %p59 = scmp.ne.s32.totalorder %s54, %s56
      %p60 = scmp.eq.s32.totalorder %s20, 0
      %p61 = por %p59, %p60
      %p62 = scmp.ne.s32.totalorder %s54, %s56
      %p63 = scmp.eq.s32.totalorder %s25, 1
      %p64 = por %p62, %p63
      %p65 = scmp.ne.s32.totalorder %s56, %s57
      %p66 = scmp.eq.s32.totalorder %s25, 0
      %p67 = por %p65, %p66
      %p68 = scmp.ne.s32.totalorder %s56, %s57
      %p69 = scmp.eq.s32.totalorder %s26, 1
      %p70 = por %p68, %p69
      %p72 = scmp.ne.s32.totalorder %s57, %s71
      %p73 = scmp.eq.s32.totalorder %s26, 0
      %p74 = por %p72, %p73
      %s76 = sadd.s32 %s75, 1
      %p79 = scmp.eq.s32.totalorder %s20, 1
      %p80 = scmp.ne.s32.totalorder %s75, %s77
      %p81 = scmp.eq.s32.totalorder %s20, 0
      %p82 = por %p80, %p81
      %p83 = scmp.ne.s32.totalorder %s75, %s77
      %p84 = scmp.eq.s32.totalorder %s25, 1
      %p85 = por %p83, %p84
      %p86 = scmp.ne.s32.totalorder %s77, %s78
      %p87 = scmp.eq.s32.totalorder %s25, 0
      %p88 = por %p86, %p87
      %p89 = scmp.ne.s32.totalorder %s77, %s78
      %p90 = scmp.eq.s32.totalorder %s26, 1
      %p91 = por %p89, %p90
      %p93 = scmp.ne.s32.totalorder %s78, %s92
      %p94 = scmp.eq.s32.totalorder %s26, 0
      %p95 = por %p93, %p94
      %s97 = sadd.s32 %s96, 1
      %p100 = scmp.eq.s32.totalorder %s20, 1
      %p101 = scmp.ne.s32.totalorder %s96, %s98
      %p102 = scmp.eq.s32.totalorder %s20, 0
      %p103 = por %p101, %p102
      %p104 = scmp.ne.s32.totalorder %s96, %s98
      %p105 = scmp.eq.s32.totalorder %s25, 1
      %p106 = por %p104, %p105
      %p107 = scmp.ne.s32.totalorder %s98, %s99
      %p108 = scmp.eq.s32.totalorder %s25, 0
      %p109 = por %p107, %p108
      %p110 = scmp.ne.s32.totalorder %s98, %s99
      %p111 = scmp.eq.s32.totalorder %s26, 1
      %p112 = por %p110, %p111
      %p114 = scmp.ne.s32.totalorder %s99, %s113
      %p115 = scmp.eq.s32.totalorder %s26, 0
      %p116 = por %p114, %p115
      %s118 = sadd.s32 %s117, 1
      %p121 = scmp.eq.s32.totalorder %s20, 1
      %p122 = scmp.ne.s32.totalorder %s117, %s119
      %p123 = scmp.eq.s32.totalorder %s20, 0
      %p124 = por %p122, %p123
      %p125 = scmp.ne.s32.totalorder %s117, %s119
      %p126 = scmp.eq.s32.totalorder %s25, 1
      %p127 = por %p125, %p126
      %p128 = scmp.ne.s32.totalorder %s119, %s120
      %p129 = scmp.eq.s32.totalorder %s25, 0
      %p130 = por %p128, %p129
      %p131 = scmp.ne.s32.totalorder %s119, %s120
      %p132 = scmp.eq.s32.totalorder %s26, 1
      %p133 = por %p131, %p132
      %p135 = scmp.ne.s32.totalorder %s120, %s134
      %p136 = scmp.eq.s32.totalorder %s26, 0
      %p137 = por %p135, %p136
      %s139 = sadd.s32 %s138, 1
      %p142 = scmp.eq.s32.totalorder %s20, 1
      %p143 = scmp.ne.s32.totalorder %s138, %s140
      %p144 = scmp.eq.s32.totalorder %s20, 0
      %p145 = por %p143, %p144
      %p146 = scmp.ne.s32.totalorder %s138, %s140
      %p147 = scmp.eq.s32.totalorder %s25, 1
      %p148 = por %p146, %p147
      %p149 = scmp.ne.s32.totalorder %s140, %s141
      %p150 = scmp.eq.s32.totalorder %s25, 0
      %p151 = por %p149, %p150
      %p152 = scmp.ne.s32.totalorder %s140, %s141
      %p153 = scmp.eq.s32.totalorder %s26, 1
      %p154 = por %p152, %p153
      %p156 = scmp.ne.s32.totalorder %s141, %s155
      %p157 = scmp.eq.s32.totalorder %s26, 0
      %p158 = por %p156, %p157
      %s160 = sadd.s32 %s159, 1
      %p163 = scmp.eq.s32.totalorder %s20, 1
      %p164 = scmp.ne.s32.totalorder %s159, %s161
      %p165 = scmp.eq.s32.totalorder %s20, 0
      %p166 = por %p164, %p165
      %p167 = scmp.ne.s32.totalorder %s159, %s161
      %p168 = scmp.eq.s32.totalorder %s25, 1
      %p169 = por %p167, %p168
      %p170 = scmp.ne.s32.totalorder %s161, %s162
      %p171 = scmp.eq.s32.totalorder %s25, 0
      %p172 = por %p170, %p171
      %p173 = scmp.ne.s32.totalorder %s161, %s162
      %p174 = scmp.eq.s32.totalorder %s26, 1
      %p175 = por %p173, %p174
      %p177 = scmp.ne.s32.totalorder %s162, %s176
      %p178 = scmp.eq.s32.totalorder %s26, 0
      %p179 = por %p177, %p178
      %s181 = sadd.s32 %s180, 1
      %p184 = scmp.eq.s32.totalorder %s20, 1
      %p185 = scmp.ne.s32.totalorder %s180, %s182
      %p186 = scmp.eq.s32.totalorder %s20, 0
      %p187 = por %p185, %p186
      %p188 = scmp.ne.s32.totalorder %s180, %s182
      %p189 = scmp.eq.s32.totalorder %s25, 1
      %p190 = por %p188, %p189
      %p191 = scmp.ne.s32.totalorder %s182, %s183
      %p192 = scmp.eq.s32.totalorder %s25, 0
      %p193 = por %p191, %p192
      %p194 = scmp.ne.s32.totalorder %s182, %s183
      %p195 = scmp.eq.s32.totalorder %s26, 1
      %p196 = por %p194, %p195
      %p198 = scmp.ne.s32.totalorder %s183, %s197
      %p199 = scmp.eq.s32.totalorder %s26, 0
      %p200 = por %p198, %p199
      %s202 = sadd.s32 %s201, 1
      %p205 = scmp.eq.s32.totalorder %s20, 1
      %p206 = scmp.ne.s32.totalorder %s201, %s203
      %p207 = scmp.eq.s32.totalorder %s20, 0
      %p208 = por %p206, %p207
      %p209 = scmp.ne.s32.totalorder %s201, %s203
      %p210 = scmp.eq.s32.totalorder %s25, 1
      %p211 = por %p209, %p210
      %p212 = scmp.ne.s32.totalorder %s203, %s204
      %p213 = scmp.eq.s32.totalorder %s25, 0
      %p214 = por %p212, %p213
      %p215 = scmp.ne.s32.totalorder %s203, %s204
      %p216 = scmp.eq.s32.totalorder %s26, 1
      %p217 = por %p215, %p216
      %p219 = scmp.ne.s32.totalorder %s204, %s218
      %p220 = scmp.eq.s32.totalorder %s26, 0
      %p221 = por %p219, %p220
      %s223 = sadd.s32 %s222, 1
      %p226 = scmp.eq.s32.totalorder %s20, 1
      %p227 = scmp.ne.s32.totalorder %s222, %s224
      %p228 = scmp.eq.s32.totalorder %s20, 0
      %p229 = por %p227, %p228
      %p230 = scmp.ne.s32.totalorder %s222, %s224
      %p231 = scmp.eq.s32.totalorder %s25, 1
      %p232 = por %p230, %p231
      %p233 = scmp.ne.s32.totalorder %s224, %s225
      %p234 = scmp.eq.s32.totalorder %s25, 0
      %p235 = por %p233, %p234
      %p236 = scmp.ne.s32.totalorder %s224, %s225
      %p237 = scmp.eq.s32.totalorder %s26, 1
      %p238 = por %p236, %p237
      %p240 = scmp.ne.s32.totalorder %s225, %s239
      %p241 = scmp.eq.s32.totalorder %s26, 0
      %p242 = por %p240, %p241
      %s244 = sadd.s32 %s243, 1
      %p247 = scmp.eq.s32.totalorder %s20, 1
      %p248 = scmp.ne.s32.totalorder %s243, %s245
      %p249 = scmp.eq.s32.totalorder %s20, 0
      %p250 = por %p248, %p249
      %p251 = scmp.ne.s32.totalorder %s243, %s245
      %p252 = scmp.eq.s32.totalorder %s25, 1
      %p253 = por %p251, %p252
      %p254 = scmp.ne.s32.totalorder %s245, %s246
      %p255 = scmp.eq.s32.totalorder %s25, 0
      %p256 = por %p254, %p255
      %p257 = scmp.ne.s32.totalorder %s245, %s246
      %p258 = scmp.eq.s32.totalorder %s26, 1
      %p259 = por %p257, %p258
      %p261 = scmp.ne.s32.totalorder %s246, %s260
      %p262 = scmp.eq.s32.totalorder %s26, 0
      %p263 = por %p261, %p262
      %s264 = ssub.s32 %s20, %s27
      %p265 = scmp.eq.s32.totalorder %s264, 0
      %s267 = sadd.s32 %s266, 1
      %s268 = scalar_select %p265, %s266, %s267
      %p271 = pneg %p265
      %p272 = scmp.eq.s32.totalorder %s20, 1
      %p273 = por %p271, %p272
      %p274 = scmp.ne.s32.totalorder %s266, %s269
      %p275 = scmp.eq.s32.totalorder %s20, 0
      %p276 = por %p274, %p275
      %p277 = scmp.ne.s32.totalorder %s266, %s269
      %p278 = scmp.eq.s32.totalorder %s25, 1
      %p279 = por %p277, %p278
      %p280 = scmp.ne.s32.totalorder %s269, %s270
      %p281 = scmp.eq.s32.totalorder %s25, 0
      %p282 = por %p280, %p281
      %p283 = scmp.ne.s32.totalorder %s269, %s270
      %p284 = scmp.eq.s32.totalorder %s26, 1
      %p285 = por %p283, %p284
      %p287 = scmp.ne.s32.totalorder %s270, %s286
      %p288 = scmp.eq.s32.totalorder %s26, 0
      %p289 = por %p287, %p288
      %p290 = scmp.le.s32.totalorder 1, %s20
      %p291 = scmp.lt.s32.totalorder %s20, 3
      %p292 = pnand %p290, %p291
      %p293 = pneg %p292
      // Predicated region
      $region9: #{tpu_custom_call.1} parent=5 // pred_check
        _
      $region10: #{tpu_custom_call.1} parent=5 // pred_check_branch
        %295 = sbr.rel (%p292) target = $region12
      $region11: #{tpu_custom_call.1} parent=5 // pred_region
        %s296 = ssub.s32 %s20, 1
        // Predicated region
        $region13: #{tpu_custom_call.1} parent=11 // pred_check
          %p297 = pneg %p67
        $region14: #{tpu_custom_call.1} parent=11 // pred_check_branch
          %299 = sbr.rel (%p297) target = $region16
        $region15: #{tpu_custom_call.1} parent=11 // pred_region
          _
        $region16: #{tpu_custom_call.1} parent=11 // pred_fallthru
          _
        // Predicated region
        $region17: #{tpu_custom_call.1} parent=11 // pred_check
          %p300 = pneg %p88
        $region18: #{tpu_custom_call.1} parent=11 // pred_check_branch
          %302 = sbr.rel (%p300) target = $region20
        $region19: #{tpu_custom_call.1} parent=11 // pred_region
          _
        $region20: #{tpu_custom_call.1} parent=11 // pred_fallthru
          _
        // Predicated region
        $region21: #{tpu_custom_call.1} parent=11 // pred_check
          %p303 = pneg %p109
        $region22: #{tpu_custom_call.1} parent=11 // pred_check_branch
          %305 = sbr.rel (%p303) target = $region24
        $region23: #{tpu_custom_call.1} parent=11 // pred_region
          _
        $region24: #{tpu_custom_call.1} parent=11 // pred_fallthru
          _
        // Predicated region
        $region25: #{tpu_custom_call.1} parent=11 // pred_check
          %p306 = pneg %p130
        $region26: #{tpu_custom_call.1} parent=11 // pred_check_branch
          %308 = sbr.rel (%p306) target = $region28
        $region27: #{tpu_custom_call.1} parent=11 // pred_region
          _
        $region28: #{tpu_custom_call.1} parent=11 // pred_fallthru
          _
        // Predicated region
        $region29: #{tpu_custom_call.1} parent=11 // pred_check
          %p309 = pneg %p151
        $region30: #{tpu_custom_call.1} parent=11 // pred_check_branch
          %311 = sbr.rel (%p309) target = $region32
        $region31: #{tpu_custom_call.1} parent=11 // pred_region
          _
        $region32: #{tpu_custom_call.1} parent=11 // pred_fallthru
          _
        // Predicated region
        $region33: #{tpu_custom_call.1} parent=11 // pred_check
          %p312 = pneg %p172
        $region34: #{tpu_custom_call.1} parent=11 // pred_check_branch
          %314 = sbr.rel (%p312) target = $region36
        $region35: #{tpu_custom_call.1} parent=11 // pred_region
          _
        $region36: #{tpu_custom_call.1} parent=11 // pred_fallthru
          _
        // Predicated region
        $region37: #{tpu_custom_call.1} parent=11 // pred_check
          %p315 = pneg %p193
        $region38: #{tpu_custom_call.1} parent=11 // pred_check_branch
          %317 = sbr.rel (%p315) target = $region40
        $region39: #{tpu_custom_call.1} parent=11 // pred_region
          _
        $region40: #{tpu_custom_call.1} parent=11 // pred_fallthru
          _
        // Predicated region
        $region41: #{tpu_custom_call.1} parent=11 // pred_check
          %p318 = pneg %p214
        $region42: #{tpu_custom_call.1} parent=11 // pred_check_branch
          %320 = sbr.rel (%p318) target = $region44
        $region43: #{tpu_custom_call.1} parent=11 // pred_region
          _
        $region44: #{tpu_custom_call.1} parent=11 // pred_fallthru
          _
        // Predicated region
        $region45: #{tpu_custom_call.1} parent=11 // pred_check
          %p321 = pneg %p235
        $region46: #{tpu_custom_call.1} parent=11 // pred_check_branch
          %323 = sbr.rel (%p321) target = $region48
        $region47: #{tpu_custom_call.1} parent=11 // pred_region
          _
        $region48: #{tpu_custom_call.1} parent=11 // pred_fallthru
          _
        // Predicated region
        $region49: #{tpu_custom_call.1} parent=11 // pred_check
          %p324 = pneg %p256
        $region50: #{tpu_custom_call.1} parent=11 // pred_check_branch
          %326 = sbr.rel (%p324) target = $region52
        $region51: #{tpu_custom_call.1} parent=11 // pred_region
          _
        $region52: #{tpu_custom_call.1} parent=11 // pred_fallthru
          _
      $region12: #{tpu_custom_call.1} parent=5 // pred_fallthru
        _
      %p327 = scmp.lt.s32.totalorder %s20, 2
      // Predicated region
      $region53: #{tpu_custom_call.1} parent=5 // pred_check
        %p328 = pneg %p327
      $region54: #{tpu_custom_call.1} parent=5 // pred_check_branch
        %330 = sbr.rel (%p328) target = $region56
      $region55: #{tpu_custom_call.1} parent=5 // pred_region
        // Predicated region
        $region57: #{tpu_custom_call.1} parent=55 // pred_check
          %p331 = pneg %p40
        $region58: #{tpu_custom_call.1} parent=55 // pred_check_branch
          %333 = sbr.rel (%p331) target = $region60
        $region59: #{tpu_custom_call.1} parent=55 // pred_region
          %p334 = scmp.lt.s32.totalorder %s20, 1
          %s335 = scalar_select %p334, %s20, 1
          %s336 = smul.addr %s335, 4
          %s337 = smul.addr %s336, 8
          %s338 = scalar_lea.vmem %s0, %s337
        $region60: #{tpu_custom_call.1} parent=55 // pred_fallthru
          _
      $region56: #{tpu_custom_call.1} parent=5 // pred_fallthru
        _
      %p339 = scmp.le.s32.totalorder 1, %s20
      %p340 = scmp.lt.s32.totalorder %s20, 3
      %p341 = pnand %p339, %p340
      %p342 = pneg %p341
      // Predicated region
      $region61: #{tpu_custom_call.1} parent=5 // pred_check
        _
      $region62: #{tpu_custom_call.1} parent=5 // pred_check_branch
        %344 = sbr.rel (%p341) target = $region64
      $region63: #{tpu_custom_call.1} parent=5 // pred_region
        %s345 = ssub.s32 %s20, 1
        %p346 = scmp.lt.s32.totalorder %s25, 1
        %s347 = scalar_select %p346, %s25, 1
        %s348 = smul.addr %s347, 4
        %s349 = smul.addr %s348, 8
        %s350 = scalar_lea.vmem %s0, %s349
        %p351 = pneg %p46
        %p352 = pneg %p43
        %p353 = pneg %p67
        %p354 = pneg %p64
        %p355 = pneg %p88
        %p356 = pneg %p85
        %p357 = pneg %p109
        %p358 = pneg %p106
        %p359 = pneg %p130
        %p360 = pneg %p127
        %p361 = pneg %p151
        %p362 = pneg %p148
        %p363 = pneg %p172
        %p364 = pneg %p169
        %p365 = pneg %p193
        %p366 = pneg %p190
        %p367 = pneg %p214
        %p368 = pneg %p211
        %p369 = pneg %p235
        %p370 = pneg %p232
        %p371 = pneg %p256
        %p372 = pneg %p253
        %p373 = pneg %p282
        %p374 = pneg %p279
        %s375 = sand.u32 %s269, 1
        %s376 = scalar_lea.sflag [#allocation3], %s375
        %s377 = sand.u32 %s269, 1
        %s378 = scalar_lea.vmem [#allocation2], %s377
        %p379 = scmp.lt.s32.totalorder %s25, 1
        %s380 = scalar_select %p379, %s25, 1
        %s381 = smul.addr %s380, 4
        %s382 = smul.addr %s381, 8
        %s383 = scalar_lea.vmem %s0, %s382
        %v384 = vld [vmem:[%s383] sm:$0xff]
        %v385 = vld [vmem:[%s383 + $0x8] sm:$0xff]
        %v386 = vld [vmem:[%s383 + $0x10] sm:$0xff]
        %v387 = vld [vmem:[%s383 + $0x18] sm:$0xff]
        %v388 = vld [vmem:[%s2] sm:$0x1]
        %v390 = vlaneseq
        %v391 = vshrl.u32 %v390, 7
        %v392 = vsub.s32 0, %v391
        %v393 = vrot.slane %v388, %v392
        %v395 = vld [vmem:[%s1] sm:$0xff]
        %v396 = vld [vmem:[%s1 + $0x8] sm:$0xff]
        %v397 = vld [vmem:[%s1 + $0x10] sm:$0xff]
        %v398 = vld [vmem:[%s1 + $0x18] sm:$0xff]
        %v399 = vld [vmem:[%s1 + $0x20] sm:$0xff]
        %v400 = vld [vmem:[%s1 + $0x28] sm:$0xff]
        %v401 = vld [vmem:[%s1 + $0x30] sm:$0xff]
        %v402 = vld [vmem:[%s1 + $0x38] sm:$0xff]
        %v403 = vld [vmem:[%s1 + $0x40] sm:$0xff]
        %v404 = vld [vmem:[%s1 + $0x48] sm:$0xff]
        %v405 = vld [vmem:[%s1 + $0x50] sm:$0xff]
        %v406 = vld [vmem:[%s1 + $0x58] sm:$0xff]
        %vm407 = vcmask 785408
        %v409 = vsel %vm407, %v384, 0
        %v412 = vsel %vm407, %v385, 0
        %v415 = vsel %vm407, %v386, 0
        %v418 = vsel %vm407, %v387, 0
        %420 = vmatprep.subr.mxu0 0.0
        %421 = vmatpush1.msra.mxu0 0.0
        %422 = vmatprep.subr.mxu0 0.0
        %423 = vmatpush1.msra.mxu0 0.0
        %424 = vmatprep.subr.mxu0 0.0
        %425 = vmatpush1.msra.mxu0 0.0
        %426 = vmatprep.subr.mxu0 0.0
        %427 = vmatpush1.msra.mxu0 0.0
        %428 = vmatprep.subr.mxu0 0.0
        %429 = vmatpush1.msra.mxu0 %v406
        %430 = vmatprep.subr.mxu0 0.0
        %431 = vmatpush1.msra.mxu0 %v405
        %432 = vmatprep.subr.mxu0 0.0
        %433 = vmatpush1.msra.mxu0 %v404
        %434 = vmatprep.subr.mxu0 0.0
        %435 = vmatpush1.msra.mxu0 %v403
        %436 = vmatprep.subr.mxu0 0.0
        %437 = vmatpush1.msra.mxu0 %v402
        %438 = vmatprep.subr.mxu0 0.0
        %439 = vmatpush1.msra.mxu0 %v401
        %440 = vmatprep.subr.mxu0 0.0
        %441 = vmatpush1.msra.mxu0 %v400
        %442 = vmatprep.subr.mxu0 0.0
        %443 = vmatpush1.msra.mxu0 %v399
        %444 = vmatprep.subr.mxu0 0.0
        %445 = vmatpush1.msra.mxu0 %v398
        %446 = vmatprep.subr.mxu0 0.0
        %447 = vmatpush1.msra.mxu0 %v397
        %448 = vmatprep.subr.mxu0 0.0
        %449 = vmatpush1.msra.mxu0 %v396
        %450 = vmatprep.subr.mxu0 0.0
        %451 = vmatpush1.msra.mxu0 %v395
        %452 = vmatprep.subr.mxu0 0.0
        %453 = vmatpush2.msra.mxu0 0.0
        %454 = vmatprep.subr.mxu0 0.0
        %455 = vmatpush2.msra.mxu0 0.0
        %456 = vmatprep.subr.mxu0 0.0
        %457 = vmatpush2.msra.mxu0 0.0
        %458 = vmatprep.subr.mxu0 0.0
        %459 = vmatpush2.msra.mxu0 0.0
        %460 = vmatprep.subr.mxu0 0.0
        %461 = vmatpush2.msra.mxu0 0.0
        %462 = vmatprep.subr.mxu0 0.0
        %463 = vmatpush2.msra.mxu0 0.0
        %464 = vmatprep.subr.mxu0 0.0
        %465 = vmatpush2.msra.mxu0 0.0
        %466 = vmatprep.subr.mxu0 0.0
        %467 = vmatpush2.msra.mxu0 0.0
        %468 = vmatprep.subr.mxu0 0.0
        %469 = vmatpush2.msra.mxu0 0.0
        %470 = vmatprep.subr.mxu0 0.0
        %471 = vmatpush2.msra.mxu0 0.0
        %472 = vmatprep.subr.mxu0 0.0
        %473 = vmatpush2.msra.mxu0 0.0
        %474 = vmatprep.subr.mxu0 0.0
        %475 = vmatpush2.msra.mxu0 0.0
        %476 = vmatprep.subr.mxu0 0.0
        %477 = vmatpush2.msra.mxu0 0.0
        %478 = vmatprep.subr.mxu0 0.0
        %479 = vmatpush2.msra.mxu0 0.0
        %480 = vmatprep.subr.mxu0 0.0
        %481 = vmatpush2.msra.mxu0 0.0
        %482 = vmatprep.subr.mxu0 0.0
        %483 = vmatpush2.msra.mxu0 0.0
        %484 = vmatprep.mubr.f32.mxu0 0.0
        %485 = vmatmul.mubr.f32.gmra.mxu0 %v409
        %v486 = vpop.f32.mrf.mxu0
        %v487 = vadd.f32 0.0, %v486
        %v488 = vpop.f32.mrf.mxu0
        %489 = vmatprep.mubr.f32.mxu0 0.0
        %490 = vmatmul.mubr.f32.gmra.mxu0 %v412
        %v491 = vpop.f32.mrf.mxu0
        %v492 = vadd.f32 0.0, %v491
        %v493 = vpop.f32.mrf.mxu0
        %494 = vmatprep.mubr.f32.mxu0 0.0
        %495 = vmatmul.mubr.f32.gmra.mxu0 %v415
        %v496 = vpop.f32.mrf.mxu0
        %v497 = vadd.f32 0.0, %v496
        %v498 = vpop.f32.mrf.mxu0
        %499 = vmatprep.mubr.f32.mxu0 0.0
        %500 = vmatmul.mubr.f32.gmra.mxu0 %v418
        %v501 = vpop.f32.mrf.mxu0
        %v502 = vadd.f32 0.0, %v501
        %v503 = vpop.f32.mrf.mxu0
        %504 = vdwg.mxu0
        %v505 = vadd.f32 %v393, %v487
        %v506 = vadd.f32 %v393, %v492
        %v507 = vadd.f32 %v393, %v497
        %v508 = vadd.f32 %v393, %v502
        %s509 = scalar_lea.vmem %s1, 96
        %v510 = vld [vmem:[%s509] sm:$0xff]
        %v511 = vld [vmem:[%s509 + $0x8] sm:$0xff]
        %v512 = vld [vmem:[%s509 + $0x10] sm:$0xff]
        %v513 = vld [vmem:[%s509 + $0x18] sm:$0xff]
        %v514 = vld [vmem:[%s509 + $0x20] sm:$0xff]
        %v515 = vld [vmem:[%s509 + $0x28] sm:$0xff]
        %v516 = vld [vmem:[%s509 + $0x30] sm:$0xff]
        %v517 = vld [vmem:[%s509 + $0x38] sm:$0xff]
        %v518 = vld [vmem:[%s509 + $0x40] sm:$0xff]
        %v519 = vld [vmem:[%s509 + $0x48] sm:$0xff]
        %v520 = vld [vmem:[%s509 + $0x50] sm:$0xff]
        %v521 = vld [vmem:[%s509 + $0x58] sm:$0xff]
        %vm522 = vcmask 1046528
        %v523 = vrot.slane %v384, 1
        %v524 = vrot.slane %v385, 1
        %v525 = vsel %vm522, %v523, %v524
        %v526 = vrot.slane %v386, 1
        %v527 = vsel %vm522, %v524, %v526
        %v528 = vrot.slane %v387, 1
        %v529 = vsel %vm522, %v526, %v528
        %v530 = vsel %vm407, %v525, 0
        %v532 = vsel %vm407, %v527, 0
        %v534 = vsel %vm407, %v529, 0
        %v536 = vsel %vm407, %v528, 0
        %538 = vmatprep.subr.mxu0 0.0
        %539 = vmatpush1.msra.mxu0 0.0
        %540 = vmatprep.subr.mxu0 0.0
        %541 = vmatpush1.msra.mxu0 0.0
        %542 = vmatprep.subr.mxu0 0.0
        %543 = vmatpush1.msra.mxu0 0.0
        %544 = vmatprep.subr.mxu0 0.0
        %545 = vmatpush1.msra.mxu0 0.0
        %546 = vmatprep.subr.mxu0 0.0
        %547 = vmatpush1.msra.mxu0 %v521
        %548 = vmatprep.subr.mxu0 0.0
        %549 = vmatpush1.msra.mxu0 %v520
        %550 = vmatprep.subr.mxu0 0.0
        %551 = vmatpush1.msra.mxu0 %v519
        %552 = vmatprep.subr.mxu0 0.0
        %553 = vmatpush1.msra.mxu0 %v518
        %554 = vmatprep.subr.mxu0 0.0
        %555 = vmatpush1.msra.mxu0 %v517
        %556 = vmatprep.subr.mxu0 0.0
        %557 = vmatpush1.msra.mxu0 %v516
        %558 = vmatprep.subr.mxu0 0.0
        %559 = vmatpush1.msra.mxu0 %v515
        %560 = vmatprep.subr.mxu0 0.0
        %561 = vmatpush1.msra.mxu0 %v514
        %562 = vmatprep.subr.mxu0 0.0
        %563 = vmatpush1.msra.mxu0 %v513
        %564 = vmatprep.subr.mxu0 0.0
        %565 = vmatpush1.msra.mxu0 %v512
        %566 = vmatprep.subr.mxu0 0.0
        %567 = vmatpush1.msra.mxu0 %v511
        %568 = vmatprep.subr.mxu0 0.0
        %569 = vmatpush1.msra.mxu0 %v510
        %570 = vmatprep.subr.mxu0 0.0
        %571 = vmatpush2.msra.mxu0 0.0
        %572 = vmatprep.subr.mxu0 0.0
        %573 = vmatpush2.msra.mxu0 0.0
        %574 = vmatprep.subr.mxu0 0.0
        %575 = vmatpush2.msra.mxu0 0.0
        %576 = vmatprep.subr.mxu0 0.0
        %577 = vmatpush2.msra.mxu0 0.0
        %578 = vmatprep.subr.mxu0 0.0
        %579 = vmatpush2.msra.mxu0 0.0
        %580 = vmatprep.subr.mxu0 0.0
        %581 = vmatpush2.msra.mxu0 0.0
        %582 = vmatprep.subr.mxu0 0.0
        %583 = vmatpush2.msra.mxu0 0.0
        %584 = vmatprep.subr.mxu0 0.0
        %585 = vmatpush2.msra.mxu0 0.0
        %586 = vmatprep.subr.mxu0 0.0
        %587 = vmatpush2.msra.mxu0 0.0
        %588 = vmatprep.subr.mxu0 0.0
        %589 = vmatpush2.msra.mxu0 0.0
        %590 = vmatprep.subr.mxu0 0.0
        %591 = vmatpush2.msra.mxu0 0.0
        %592 = vmatprep.subr.mxu0 0.0
        %593 = vmatpush2.msra.mxu0 0.0
        %594 = vmatprep.subr.mxu0 0.0
        %595 = vmatpush2.msra.mxu0 0.0
        %596 = vmatprep.subr.mxu0 0.0
        %597 = vmatpush2.msra.mxu0 0.0
        %598 = vmatprep.subr.mxu0 0.0
        %599 = vmatpush2.msra.mxu0 0.0
        %600 = vmatprep.subr.mxu0 0.0
        %601 = vmatpush2.msra.mxu0 0.0
        %602 = vmatprep.mubr.f32.mxu0 0.0
        %603 = vmatmul.mubr.f32.gmra.mxu0 %v530
        %v604 = vpop.f32.mrf.mxu0
        %v605 = vadd.f32 0.0, %v604
        %v606 = vpop.f32.mrf.mxu0
        %607 = vmatprep.mubr.f32.mxu0 0.0
        %608 = vmatmul.mubr.f32.gmra.mxu0 %v532
        %v609 = vpop.f32.mrf.mxu0
        %v610 = vadd.f32 0.0, %v609
        %v611 = vpop.f32.mrf.mxu0
        %612 = vmatprep.mubr.f32.mxu0 0.0
        %613 = vmatmul.mubr.f32.gmra.mxu0 %v534
        %v614 = vpop.f32.mrf.mxu0
        %v615 = vadd.f32 0.0, %v614
        %v616 = vpop.f32.mrf.mxu0
        %617 = vmatprep.mubr.f32.mxu0 0.0
        %618 = vmatmul.mubr.f32.gmra.mxu0 %v536
        %v619 = vpop.f32.mrf.mxu0
        %v620 = vadd.f32 0.0, %v619
        %v621 = vpop.f32.mrf.mxu0
        %622 = vdwg.mxu0
        %v623 = vadd.f32 %v505, %v605
        %v624 = vadd.f32 %v506, %v610
        %v625 = vadd.f32 %v507, %v615
        %v626 = vadd.f32 %v508, %v620
        %s627 = scalar_lea.vmem %s1, 192
        %v628 = vld [vmem:[%s627] sm:$0xff]
        %v629 = vld [vmem:[%s627 + $0x8] sm:$0xff]
        %v630 = vld [vmem:[%s627 + $0x10] sm:$0xff]
        %v631 = vld [vmem:[%s627 + $0x18] sm:$0xff]
        %v632 = vld [vmem:[%s627 + $0x20] sm:$0xff]
        %v633 = vld [vmem:[%s627 + $0x28] sm:$0xff]
        %v634 = vld [vmem:[%s627 + $0x30] sm:$0xff]
        %v635 = vld [vmem:[%s627 + $0x38] sm:$0xff]
        %v636 = vld [vmem:[%s627 + $0x40] sm:$0xff]
        %v637 = vld [vmem:[%s627 + $0x48] sm:$0xff]
        %v638 = vld [vmem:[%s627 + $0x50] sm:$0xff]
        %v639 = vld [vmem:[%s627 + $0x58] sm:$0xff]
        %vm640 = vcmask 1045504
        %v641 = vrot.slane %v384, 2
        %v642 = vrot.slane %v385, 2
        %v643 = vsel %vm640, %v641, %v642
        %v644 = vrot.slane %v386, 2
        %v645 = vsel %vm640, %v642, %v644
        %v646 = vrot.slane %v387, 2
        %v647 = vsel %vm640, %v644, %v646
        %v648 = vsel %vm407, %v643, 0
        %v650 = vsel %vm407, %v645, 0
        %v652 = vsel %vm407, %v647, 0
        %v654 = vsel %vm407, %v646, 0
        %656 = vmatprep.subr.mxu0 0.0
        %657 = vmatpush1.msra.mxu0 0.0
        %658 = vmatprep.subr.mxu0 0.0
        %659 = vmatpush1.msra.mxu0 0.0
        %660 = vmatprep.subr.mxu0 0.0
        %661 = vmatpush1.msra.mxu0 0.0
        %662 = vmatprep.subr.mxu0 0.0
        %663 = vmatpush1.msra.mxu0 0.0
        %664 = vmatprep.subr.mxu0 0.0
        %665 = vmatpush1.msra.mxu0 %v639
        %666 = vmatprep.subr.mxu0 0.0
        %667 = vmatpush1.msra.mxu0 %v638
        %668 = vmatprep.subr.mxu0 0.0
        %669 = vmatpush1.msra.mxu0 %v637
        %670 = vmatprep.subr.mxu0 0.0
        %671 = vmatpush1.msra.mxu0 %v636
        %672 = vmatprep.subr.mxu0 0.0
        %673 = vmatpush1.msra.mxu0 %v635
        %674 = vmatprep.subr.mxu0 0.0
        %675 = vmatpush1.msra.mxu0 %v634
        %676 = vmatprep.subr.mxu0 0.0
        %677 = vmatpush1.msra.mxu0 %v633
        %678 = vmatprep.subr.mxu0 0.0
        %679 = vmatpush1.msra.mxu0 %v632
        %680 = vmatprep.subr.mxu0 0.0
        %681 = vmatpush1.msra.mxu0 %v631
        %682 = vmatprep.subr.mxu0 0.0
        %683 = vmatpush1.msra.mxu0 %v630
        %684 = vmatprep.subr.mxu0 0.0
        %685 = vmatpush1.msra.mxu0 %v629
        %686 = vmatprep.subr.mxu0 0.0
        %687 = vmatpush1.msra.mxu0 %v628
        %688 = vmatprep.subr.mxu0 0.0
        %689 = vmatpush2.msra.mxu0 0.0
        %690 = vmatprep.subr.mxu0 0.0
        %691 = vmatpush2.msra.mxu0 0.0
        %692 = vmatprep.subr.mxu0 0.0
        %693 = vmatpush2.msra.mxu0 0.0
        %694 = vmatprep.subr.mxu0 0.0
        %695 = vmatpush2.msra.mxu0 0.0
        %696 = vmatprep.subr.mxu0 0.0
        %697 = vmatpush2.msra.mxu0 0.0
        %698 = vmatprep.subr.mxu0 0.0
        %699 = vmatpush2.msra.mxu0 0.0
        %700 = vmatprep.subr.mxu0 0.0
        %701 = vmatpush2.msra.mxu0 0.0
        %702 = vmatprep.subr.mxu0 0.0
        %703 = vmatpush2.msra.mxu0 0.0
        %704 = vmatprep.subr.mxu0 0.0
        %705 = vmatpush2.msra.mxu0 0.0
        %706 = vmatprep.subr.mxu0 0.0
        %707 = vmatpush2.msra.mxu0 0.0
        %708 = vmatprep.subr.mxu0 0.0
        %709 = vmatpush2.msra.mxu0 0.0
        %710 = vmatprep.subr.mxu0 0.0
        %711 = vmatpush2.msra.mxu0 0.0
        %712 = vmatprep.subr.mxu0 0.0
        %713 = vmatpush2.msra.mxu0 0.0
        %714 = vmatprep.subr.mxu0 0.0
        %715 = vmatpush2.msra.mxu0 0.0
        %716 = vmatprep.subr.mxu0 0.0
        %717 = vmatpush2.msra.mxu0 0.0
        %718 = vmatprep.subr.mxu0 0.0
        %719 = vmatpush2.msra.mxu0 0.0
        %720 = vmatprep.mubr.f32.mxu0 0.0
        %721 = vmatmul.mubr.f32.gmra.mxu0 %v648
        %v722 = vpop.f32.mrf.mxu0
        %v723 = vadd.f32 0.0, %v722
        %v724 = vpop.f32.mrf.mxu0
        %725 = vmatprep.mubr.f32.mxu0 0.0
        %726 = vmatmul.mubr.f32.gmra.mxu0 %v650
        %v727 = vpop.f32.mrf.mxu0
        %v728 = vadd.f32 0.0, %v727
        %v729 = vpop.f32.mrf.mxu0
        %730 = vmatprep.mubr.f32.mxu0 0.0
        %731 = vmatmul.mubr.f32.gmra.mxu0 %v652
        %v732 = vpop.f32.mrf.mxu0
        %v733 = vadd.f32 0.0, %v732
        %v734 = vpop.f32.mrf.mxu0
        %735 = vmatprep.mubr.f32.mxu0 0.0
        %736 = vmatmul.mubr.f32.gmra.mxu0 %v654
        %v737 = vpop.f32.mrf.mxu0
        %v738 = vadd.f32 0.0, %v737
        %v739 = vpop.f32.mrf.mxu0
        %740 = vdwg.mxu0
        %v741 = vadd.f32 %v623, %v723
        %v742 = vadd.f32 %v624, %v728
        %v743 = vadd.f32 %v625, %v733
        %v744 = vadd.f32 %v626, %v738
        %s745 = scalar_lea.vmem %s1, 288
        %v746 = vld [vmem:[%s745] sm:$0xff]
        %v747 = vld [vmem:[%s745 + $0x8] sm:$0xff]
        %v748 = vld [vmem:[%s745 + $0x10] sm:$0xff]
        %v749 = vld [vmem:[%s745 + $0x18] sm:$0xff]
        %v750 = vld [vmem:[%s745 + $0x20] sm:$0xff]
        %v751 = vld [vmem:[%s745 + $0x28] sm:$0xff]
        %v752 = vld [vmem:[%s745 + $0x30] sm:$0xff]
        %v753 = vld [vmem:[%s745 + $0x38] sm:$0xff]
        %v754 = vld [vmem:[%s745 + $0x40] sm:$0xff]
        %v755 = vld [vmem:[%s745 + $0x48] sm:$0xff]
        %v756 = vld [vmem:[%s745 + $0x50] sm:$0xff]
        %v757 = vld [vmem:[%s745 + $0x58] sm:$0xff]
        %vm758 = vcmask 1044480
        %v759 = vrot.slane %v384, 3
        %v760 = vrot.slane %v385, 3
        %v761 = vsel %vm758, %v759, %v760
        %v762 = vrot.slane %v386, 3
        %v763 = vsel %vm758, %v760, %v762
        %v764 = vrot.slane %v387, 3
        %v765 = vsel %vm758, %v762, %v764
        %v766 = vsel %vm407, %v761, 0
        %v768 = vsel %vm407, %v763, 0
        %v770 = vsel %vm407, %v765, 0
        %v772 = vsel %vm407, %v764, 0
        %774 = vmatprep.subr.mxu0 0.0
        %775 = vmatpush1.msra.mxu0 0.0
        %776 = vmatprep.subr.mxu0 0.0
        %777 = vmatpush1.msra.mxu0 0.0
        %778 = vmatprep.subr.mxu0 0.0
        %779 = vmatpush1.msra.mxu0 0.0
        %780 = vmatprep.subr.mxu0 0.0
        %781 = vmatpush1.msra.mxu0 0.0
        %782 = vmatprep.subr.mxu0 0.0
        %783 = vmatpush1.msra.mxu0 %v757
        %784 = vmatprep.subr.mxu0 0.0
        %785 = vmatpush1.msra.mxu0 %v756
        %786 = vmatprep.subr.mxu0 0.0
        %787 = vmatpush1.msra.mxu0 %v755
        %788 = vmatprep.subr.mxu0 0.0
        %789 = vmatpush1.msra.mxu0 %v754
        %790 = vmatprep.subr.mxu0 0.0
        %791 = vmatpush1.msra.mxu0 %v753
        %792 = vmatprep.subr.mxu0 0.0
        %793 = vmatpush1.msra.mxu0 %v752
        %794 = vmatprep.subr.mxu0 0.0
        %795 = vmatpush1.msra.mxu0 %v751
        %796 = vmatprep.subr.mxu0 0.0
        %797 = vmatpush1.msra.mxu0 %v750
        %798 = vmatprep.subr.mxu0 0.0
        %799 = vmatpush1.msra.mxu0 %v749
        %800 = vmatprep.subr.mxu0 0.0
        %801 = vmatpush1.msra.mxu0 %v748
        %802 = vmatprep.subr.mxu0 0.0
        %803 = vmatpush1.msra.mxu0 %v747
        %804 = vmatprep.subr.mxu0 0.0
        %805 = vmatpush1.msra.mxu0 %v746
        %806 = vmatprep.subr.mxu0 0.0
        %807 = vmatpush2.msra.mxu0 0.0
        %808 = vmatprep.subr.mxu0 0.0
        %809 = vmatpush2.msra.mxu0 0.0
        %810 = vmatprep.subr.mxu0 0.0
        %811 = vmatpush2.msra.mxu0 0.0
        %812 = vmatprep.subr.mxu0 0.0
        %813 = vmatpush2.msra.mxu0 0.0
        %814 = vmatprep.subr.mxu0 0.0
        %815 = vmatpush2.msra.mxu0 0.0
        %816 = vmatprep.subr.mxu0 0.0
        %817 = vmatpush2.msra.mxu0 0.0
        %818 = vmatprep.subr.mxu0 0.0
        %819 = vmatpush2.msra.mxu0 0.0
        %820 = vmatprep.subr.mxu0 0.0
        %821 = vmatpush2.msra.mxu0 0.0
        %822 = vmatprep.subr.mxu0 0.0
        %823 = vmatpush2.msra.mxu0 0.0
        %824 = vmatprep.subr.mxu0 0.0
        %825 = vmatpush2.msra.mxu0 0.0
        %826 = vmatprep.subr.mxu0 0.0
        %827 = vmatpush2.msra.mxu0 0.0
        %828 = vmatprep.subr.mxu0 0.0
        %829 = vmatpush2.msra.mxu0 0.0
        %830 = vmatprep.subr.mxu0 0.0
        %831 = vmatpush2.msra.mxu0 0.0
        %832 = vmatprep.subr.mxu0 0.0
        %833 = vmatpush2.msra.mxu0 0.0
        %834 = vmatprep.subr.mxu0 0.0
        %835 = vmatpush2.msra.mxu0 0.0
        %836 = vmatprep.subr.mxu0 0.0
        %837 = vmatpush2.msra.mxu0 0.0
        %838 = vmatprep.mubr.f32.mxu0 0.0
        %839 = vmatmul.mubr.f32.gmra.mxu0 %v766
        %v840 = vpop.f32.mrf.mxu0
        %v841 = vadd.f32 0.0, %v840
        %v842 = vpop.f32.mrf.mxu0
        %843 = vmatprep.mubr.f32.mxu0 0.0
        %844 = vmatmul.mubr.f32.gmra.mxu0 %v768
        %v845 = vpop.f32.mrf.mxu0
        %v846 = vadd.f32 0.0, %v845
        %v847 = vpop.f32.mrf.mxu0
        %848 = vmatprep.mubr.f32.mxu0 0.0
        %849 = vmatmul.mubr.f32.gmra.mxu0 %v770
        %v850 = vpop.f32.mrf.mxu0
        %v851 = vadd.f32 0.0, %v850
        %v852 = vpop.f32.mrf.mxu0
        %853 = vmatprep.mubr.f32.mxu0 0.0
        %854 = vmatmul.mubr.f32.gmra.mxu0 %v772
        %v855 = vpop.f32.mrf.mxu0
        %v856 = vadd.f32 0.0, %v855
        %v857 = vpop.f32.mrf.mxu0
        %858 = vdwg.mxu0
        %v859 = vadd.f32 %v741, %v841
        %v860 = vadd.f32 %v742, %v846
        %v861 = vadd.f32 %v743, %v851
        %v862 = vadd.f32 %v744, %v856
        %s863 = scalar_lea.vmem %s1, 384
        %v864 = vld [vmem:[%s863] sm:$0xff]
        %v865 = vld [vmem:[%s863 + $0x8] sm:$0xff]
        %v866 = vld [vmem:[%s863 + $0x10] sm:$0xff]
        %v867 = vld [vmem:[%s863 + $0x18] sm:$0xff]
        %v868 = vld [vmem:[%s863 + $0x20] sm:$0xff]
        %v869 = vld [vmem:[%s863 + $0x28] sm:$0xff]
        %v870 = vld [vmem:[%s863 + $0x30] sm:$0xff]
        %v871 = vld [vmem:[%s863 + $0x38] sm:$0xff]
        %v872 = vld [vmem:[%s863 + $0x40] sm:$0xff]
        %v873 = vld [vmem:[%s863 + $0x48] sm:$0xff]
        %v874 = vld [vmem:[%s863 + $0x50] sm:$0xff]
        %v875 = vld [vmem:[%s863 + $0x58] sm:$0xff]
        %vm876 = vcmask 1043456
        %v877 = vrot.slane %v384, 4
        %v878 = vrot.slane %v385, 4
        %v879 = vsel %vm876, %v877, %v878
        %v880 = vrot.slane %v386, 4
        %v881 = vsel %vm876, %v878, %v880
        %v882 = vrot.slane %v387, 4
        %v883 = vsel %vm876, %v880, %v882
        %v884 = vsel %vm407, %v879, 0
        %v886 = vsel %vm407, %v881, 0
        %v888 = vsel %vm407, %v883, 0
        %v890 = vsel %vm407, %v882, 0
        %892 = vmatprep.subr.mxu0 0.0
        %893 = vmatpush1.msra.mxu0 0.0
        %894 = vmatprep.subr.mxu0 0.0
        %895 = vmatpush1.msra.mxu0 0.0
        %896 = vmatprep.subr.mxu0 0.0
        %897 = vmatpush1.msra.mxu0 0.0
        %898 = vmatprep.subr.mxu0 0.0
        %899 = vmatpush1.msra.mxu0 0.0
        %900 = vmatprep.subr.mxu0 0.0
        %901 = vmatpush1.msra.mxu0 %v875
        %902 = vmatprep.subr.mxu0 0.0
        %903 = vmatpush1.msra.mxu0 %v874
        %904 = vmatprep.subr.mxu0 0.0
        %905 = vmatpush1.msra.mxu0 %v873
        %906 = vmatprep.subr.mxu0 0.0
        %907 = vmatpush1.msra.mxu0 %v872
        %908 = vmatprep.subr.mxu0 0.0
        %909 = vmatpush1.msra.mxu0 %v871
        %910 = vmatprep.subr.mxu0 0.0
        %911 = vmatpush1.msra.mxu0 %v870
        %912 = vmatprep.subr.mxu0 0.0
        %913 = vmatpush1.msra.mxu0 %v869
        %914 = vmatprep.subr.mxu0 0.0
        %915 = vmatpush1.msra.mxu0 %v868
        %916 = vmatprep.subr.mxu0 0.0
        %917 = vmatpush1.msra.mxu0 %v867
        %918 = vmatprep.subr.mxu0 0.0
        %919 = vmatpush1.msra.mxu0 %v866
        %920 = vmatprep.subr.mxu0 0.0
        %921 = vmatpush1.msra.mxu0 %v865
        %922 = vmatprep.subr.mxu0 0.0
        %923 = vmatpush1.msra.mxu0 %v864
        %924 = vmatprep.subr.mxu0 0.0
        %925 = vmatpush2.msra.mxu0 0.0
        %926 = vmatprep.subr.mxu0 0.0
        %927 = vmatpush2.msra.mxu0 0.0
        %928 = vmatprep.subr.mxu0 0.0
        %929 = vmatpush2.msra.mxu0 0.0
        %930 = vmatprep.subr.mxu0 0.0
        %931 = vmatpush2.msra.mxu0 0.0
        %932 = vmatprep.subr.mxu0 0.0
        %933 = vmatpush2.msra.mxu0 0.0
        %934 = vmatprep.subr.mxu0 0.0
        %935 = vmatpush2.msra.mxu0 0.0
        %936 = vmatprep.subr.mxu0 0.0
        %937 = vmatpush2.msra.mxu0 0.0
        %938 = vmatprep.subr.mxu0 0.0
        %939 = vmatpush2.msra.mxu0 0.0
        %940 = vmatprep.subr.mxu0 0.0
        %941 = vmatpush2.msra.mxu0 0.0
        %942 = vmatprep.subr.mxu0 0.0
        %943 = vmatpush2.msra.mxu0 0.0
        %944 = vmatprep.subr.mxu0 0.0
        %945 = vmatpush2.msra.mxu0 0.0
        %946 = vmatprep.subr.mxu0 0.0
        %947 = vmatpush2.msra.mxu0 0.0
        %948 = vmatprep.subr.mxu0 0.0
        %949 = vmatpush2.msra.mxu0 0.0
        %950 = vmatprep.subr.mxu0 0.0
        %951 = vmatpush2.msra.mxu0 0.0
        %952 = vmatprep.subr.mxu0 0.0
        %953 = vmatpush2.msra.mxu0 0.0
        %954 = vmatprep.subr.mxu0 0.0
        %955 = vmatpush2.msra.mxu0 0.0
        %956 = vmatprep.mubr.f32.mxu0 0.0
        %957 = vmatmul.mubr.f32.gmra.mxu0 %v884
        %v958 = vpop.f32.mrf.mxu0
        %v959 = vadd.f32 0.0, %v958
        %v960 = vpop.f32.mrf.mxu0
        %961 = vmatprep.mubr.f32.mxu0 0.0
        %962 = vmatmul.mubr.f32.gmra.mxu0 %v886
        %v963 = vpop.f32.mrf.mxu0
        %v964 = vadd.f32 0.0, %v963
        %v965 = vpop.f32.mrf.mxu0
        %966 = vmatprep.mubr.f32.mxu0 0.0
        %967 = vmatmul.mubr.f32.gmra.mxu0 %v888
        %v968 = vpop.f32.mrf.mxu0
        %v969 = vadd.f32 0.0, %v968
        %v970 = vpop.f32.mrf.mxu0
        %971 = vmatprep.mubr.f32.mxu0 0.0
        %972 = vmatmul.mubr.f32.gmra.mxu0 %v890
        %v973 = vpop.f32.mrf.mxu0
        %v974 = vadd.f32 0.0, %v973
        %v975 = vpop.f32.mrf.mxu0
        %976 = vdwg.mxu0
        %v977 = vadd.f32 %v859, %v959
        %v978 = vadd.f32 %v860, %v964
        %v979 = vadd.f32 %v861, %v969
        %v980 = vadd.f32 %v862, %v974
        %s981 = scalar_lea.vmem %s1, 480
        %v982 = vld [vmem:[%s981] sm:$0xff]
        %v983 = vld [vmem:[%s981 + $0x8] sm:$0xff]
        %v984 = vld [vmem:[%s981 + $0x10] sm:$0xff]
        %v985 = vld [vmem:[%s981 + $0x18] sm:$0xff]
        %v986 = vld [vmem:[%s981 + $0x20] sm:$0xff]
        %v987 = vld [vmem:[%s981 + $0x28] sm:$0xff]
        %v988 = vld [vmem:[%s981 + $0x30] sm:$0xff]
        %v989 = vld [vmem:[%s981 + $0x38] sm:$0xff]
        %v990 = vld [vmem:[%s981 + $0x40] sm:$0xff]
        %v991 = vld [vmem:[%s981 + $0x48] sm:$0xff]
        %v992 = vld [vmem:[%s981 + $0x50] sm:$0xff]
        %v993 = vld [vmem:[%s981 + $0x58] sm:$0xff]
        %vm994 = vcmask 1042432
        %v995 = vrot.slane %v384, 5
        %v996 = vrot.slane %v385, 5
        %v997 = vsel %vm994, %v995, %v996
        %v998 = vrot.slane %v386, 5
        %v999 = vsel %vm994, %v996, %v998
        %v1000 = vrot.slane %v387, 5
        %v1001 = vsel %vm994, %v998, %v1000
        %v1002 = vsel %vm407, %v997, 0
        %v1004 = vsel %vm407, %v999, 0
        %v1006 = vsel %vm407, %v1001, 0
        %v1008 = vsel %vm407, %v1000, 0
        %1010 = vmatprep.subr.mxu0 0.0
        %1011 = vmatpush1.msra.mxu0 0.0
        %1012 = vmatprep.subr.mxu0 0.0
        %1013 = vmatpush1.msra.mxu0 0.0
        %1014 = vmatprep.subr.mxu0 0.0
        %1015 = vmatpush1.msra.mxu0 0.0
        %1016 = vmatprep.subr.mxu0 0.0
        %1017 = vmatpush1.msra.mxu0 0.0
        %1018 = vmatprep.subr.mxu0 0.0
        %1019 = vmatpush1.msra.mxu0 %v993
        %1020 = vmatprep.subr.mxu0 0.0
        %1021 = vmatpush1.msra.mxu0 %v992
        %1022 = vmatprep.subr.mxu0 0.0
        %1023 = vmatpush1.msra.mxu0 %v991
        %1024 = vmatprep.subr.mxu0 0.0
        %1025 = vmatpush1.msra.mxu0 %v990
        %1026 = vmatprep.subr.mxu0 0.0
        %1027 = vmatpush1.msra.mxu0 %v989
        %1028 = vmatprep.subr.mxu0 0.0
        %1029 = vmatpush1.msra.mxu0 %v988
        %1030 = vmatprep.subr.mxu0 0.0
        %1031 = vmatpush1.msra.mxu0 %v987
        %1032 = vmatprep.subr.mxu0 0.0
        %1033 = vmatpush1.msra.mxu0 %v986
        %1034 = vmatprep.subr.mxu0 0.0
        %1035 = vmatpush1.msra.mxu0 %v985
        %1036 = vmatprep.subr.mxu0 0.0
        %1037 = vmatpush1.msra.mxu0 %v984
        %1038 = vmatprep.subr.mxu0 0.0
        %1039 = vmatpush1.msra.mxu0 %v983
        %1040 = vmatprep.subr.mxu0 0.0
        %1041 = vmatpush1.msra.mxu0 %v982
        %1042 = vmatprep.subr.mxu0 0.0
        %1043 = vmatpush2.msra.mxu0 0.0
        %1044 = vmatprep.subr.mxu0 0.0
        %1045 = vmatpush2.msra.mxu0 0.0
        %1046 = vmatprep.subr.mxu0 0.0
        %1047 = vmatpush2.msra.mxu0 0.0
        %1048 = vmatprep.subr.mxu0 0.0
        %1049 = vmatpush2.msra.mxu0 0.0
        %1050 = vmatprep.subr.mxu0 0.0
        %1051 = vmatpush2.msra.mxu0 0.0
        %1052 = vmatprep.subr.mxu0 0.0
        %1053 = vmatpush2.msra.mxu0 0.0
        %1054 = vmatprep.subr.mxu0 0.0
        %1055 = vmatpush2.msra.mxu0 0.0
        %1056 = vmatprep.subr.mxu0 0.0
        %1057 = vmatpush2.msra.mxu0 0.0
        %1058 = vmatprep.subr.mxu0 0.0
        %1059 = vmatpush2.msra.mxu0 0.0
        %1060 = vmatprep.subr.mxu0 0.0
        %1061 = vmatpush2.msra.mxu0 0.0
        %1062 = vmatprep.subr.mxu0 0.0
        %1063 = vmatpush2.msra.mxu0 0.0
        %1064 = vmatprep.subr.mxu0 0.0
        %1065 = vmatpush2.msra.mxu0 0.0
        %1066 = vmatprep.subr.mxu0 0.0
        %1067 = vmatpush2.msra.mxu0 0.0
        %1068 = vmatprep.subr.mxu0 0.0
        %1069 = vmatpush2.msra.mxu0 0.0
        %1070 = vmatprep.subr.mxu0 0.0
        %1071 = vmatpush2.msra.mxu0 0.0
        %1072 = vmatprep.subr.mxu0 0.0
        %1073 = vmatpush2.msra.mxu0 0.0
        %1074 = vmatprep.mubr.f32.mxu0 0.0
        %1075 = vmatmul.mubr.f32.gmra.mxu0 %v1002
        %v1076 = vpop.f32.mrf.mxu0
        %v1077 = vadd.f32 0.0, %v1076
        %v1078 = vpop.f32.mrf.mxu0
        %1079 = vmatprep.mubr.f32.mxu0 0.0
        %1080 = vmatmul.mubr.f32.gmra.mxu0 %v1004
        %v1081 = vpop.f32.mrf.mxu0
        %v1082 = vadd.f32 0.0, %v1081
        %v1083 = vpop.f32.mrf.mxu0
        %1084 = vmatprep.mubr.f32.mxu0 0.0
        %1085 = vmatmul.mubr.f32.gmra.mxu0 %v1006
        %v1086 = vpop.f32.mrf.mxu0
        %v1087 = vadd.f32 0.0, %v1086
        %v1088 = vpop.f32.mrf.mxu0
        %1089 = vmatprep.mubr.f32.mxu0 0.0
        %1090 = vmatmul.mubr.f32.gmra.mxu0 %v1008
        %v1091 = vpop.f32.mrf.mxu0
        %v1092 = vadd.f32 0.0, %v1091
        %v1093 = vpop.f32.mrf.mxu0
        %1094 = vdwg.mxu0
        %v1095 = vadd.f32 %v977, %v1077
        %v1096 = vadd.f32 %v978, %v1082
        %v1097 = vadd.f32 %v979, %v1087
        %v1098 = vadd.f32 %v980, %v1092
        %s1099 = scalar_lea.vmem %s1, 576
        %v1100 = vld [vmem:[%s1099] sm:$0xff]
        %v1101 = vld [vmem:[%s1099 + $0x8] sm:$0xff]
        %v1102 = vld [vmem:[%s1099 + $0x10] sm:$0xff]
        %v1103 = vld [vmem:[%s1099 + $0x18] sm:$0xff]
        %v1104 = vld [vmem:[%s1099 + $0x20] sm:$0xff]
        %v1105 = vld [vmem:[%s1099 + $0x28] sm:$0xff]
        %v1106 = vld [vmem:[%s1099 + $0x30] sm:$0xff]
        %v1107 = vld [vmem:[%s1099 + $0x38] sm:$0xff]
        %v1108 = vld [vmem:[%s1099 + $0x40] sm:$0xff]
        %v1109 = vld [vmem:[%s1099 + $0x48] sm:$0xff]
        %v1110 = vld [vmem:[%s1099 + $0x50] sm:$0xff]
        %v1111 = vld [vmem:[%s1099 + $0x58] sm:$0xff]
        %vm1112 = vcmask 1041408
        %v1113 = vrot.slane %v384, 6
        %v1114 = vrot.slane %v385, 6
        %v1115 = vsel %vm1112, %v1113, %v1114
        %v1116 = vrot.slane %v386, 6
        %v1117 = vsel %vm1112, %v1114, %v1116
        %v1118 = vrot.slane %v387, 6
        %v1119 = vsel %vm1112, %v1116, %v1118
        %v1120 = vsel %vm407, %v1115, 0
        %v1122 = vsel %vm407, %v1117, 0
        %v1124 = vsel %vm407, %v1119, 0
        %v1126 = vsel %vm407, %v1118, 0
        %1128 = vmatprep.subr.mxu0 0.0
        %1129 = vmatpush1.msra.mxu0 0.0
        %1130 = vmatprep.subr.mxu0 0.0
        %1131 = vmatpush1.msra.mxu0 0.0
        %1132 = vmatprep.subr.mxu0 0.0
        %1133 = vmatpush1.msra.mxu0 0.0
        %1134 = vmatprep.subr.mxu0 0.0
        %1135 = vmatpush1.msra.mxu0 0.0
        %1136 = vmatprep.subr.mxu0 0.0
        %1137 = vmatpush1.msra.mxu0 %v1111
        %1138 = vmatprep.subr.mxu0 0.0
        %1139 = vmatpush1.msra.mxu0 %v1110
        %1140 = vmatprep.subr.mxu0 0.0
        %1141 = vmatpush1.msra.mxu0 %v1109
        %1142 = vmatprep.subr.mxu0 0.0
        %1143 = vmatpush1.msra.mxu0 %v1108
        %1144 = vmatprep.subr.mxu0 0.0
        %1145 = vmatpush1.msra.mxu0 %v1107
        %1146 = vmatprep.subr.mxu0 0.0
        %1147 = vmatpush1.msra.mxu0 %v1106
        %1148 = vmatprep.subr.mxu0 0.0
        %1149 = vmatpush1.msra.mxu0 %v1105
        %1150 = vmatprep.subr.mxu0 0.0
        %1151 = vmatpush1.msra.mxu0 %v1104
        %1152 = vmatprep.subr.mxu0 0.0
        %1153 = vmatpush1.msra.mxu0 %v1103
        %1154 = vmatprep.subr.mxu0 0.0
        %1155 = vmatpush1.msra.mxu0 %v1102
        %1156 = vmatprep.subr.mxu0 0.0
        %1157 = vmatpush1.msra.mxu0 %v1101
        %1158 = vmatprep.subr.mxu0 0.0
        %1159 = vmatpush1.msra.mxu0 %v1100
        %1160 = vmatprep.subr.mxu0 0.0
        %1161 = vmatpush2.msra.mxu0 0.0
        %1162 = vmatprep.subr.mxu0 0.0
        %1163 = vmatpush2.msra.mxu0 0.0
        %1164 = vmatprep.subr.mxu0 0.0
        %1165 = vmatpush2.msra.mxu0 0.0
        %1166 = vmatprep.subr.mxu0 0.0
        %1167 = vmatpush2.msra.mxu0 0.0
        %1168 = vmatprep.subr.mxu0 0.0
        %1169 = vmatpush2.msra.mxu0 0.0
        %1170 = vmatprep.subr.mxu0 0.0
        %1171 = vmatpush2.msra.mxu0 0.0
        %1172 = vmatprep.subr.mxu0 0.0
        %1173 = vmatpush2.msra.mxu0 0.0
        %1174 = vmatprep.subr.mxu0 0.0
        %1175 = vmatpush2.msra.mxu0 0.0
        %1176 = vmatprep.subr.mxu0 0.0
        %1177 = vmatpush2.msra.mxu0 0.0
        %1178 = vmatprep.subr.mxu0 0.0
        %1179 = vmatpush2.msra.mxu0 0.0
        %1180 = vmatprep.subr.mxu0 0.0
        %1181 = vmatpush2.msra.mxu0 0.0
        %1182 = vmatprep.subr.mxu0 0.0
        %1183 = vmatpush2.msra.mxu0 0.0
        %1184 = vmatprep.subr.mxu0 0.0
        %1185 = vmatpush2.msra.mxu0 0.0
        %1186 = vmatprep.subr.mxu0 0.0
        %1187 = vmatpush2.msra.mxu0 0.0
        %1188 = vmatprep.subr.mxu0 0.0
        %1189 = vmatpush2.msra.mxu0 0.0
        %1190 = vmatprep.subr.mxu0 0.0
        %1191 = vmatpush2.msra.mxu0 0.0
        %1192 = vmatprep.mubr.f32.mxu0 0.0
        %1193 = vmatmul.mubr.f32.gmra.mxu0 %v1120
        %v1194 = vpop.f32.mrf.mxu0
        %v1195 = vadd.f32 0.0, %v1194
        %v1196 = vpop.f32.mrf.mxu0
        %1197 = vmatprep.mubr.f32.mxu0 0.0
        %1198 = vmatmul.mubr.f32.gmra.mxu0 %v1122
        %v1199 = vpop.f32.mrf.mxu0
        %v1200 = vadd.f32 0.0, %v1199
        %v1201 = vpop.f32.mrf.mxu0
        %1202 = vmatprep.mubr.f32.mxu0 0.0
        %1203 = vmatmul.mubr.f32.gmra.mxu0 %v1124
        %v1204 = vpop.f32.mrf.mxu0
        %v1205 = vadd.f32 0.0, %v1204
        %v1206 = vpop.f32.mrf.mxu0
        %1207 = vmatprep.mubr.f32.mxu0 0.0
        %1208 = vmatmul.mubr.f32.gmra.mxu0 %v1126
        %v1209 = vpop.f32.mrf.mxu0
        %v1210 = vadd.f32 0.0, %v1209
        %v1211 = vpop.f32.mrf.mxu0
        %1212 = vdwg.mxu0
        %v1213 = vadd.f32 %v1095, %v1195
        %v1214 = vadd.f32 %v1096, %v1200
        %v1215 = vadd.f32 %v1097, %v1205
        %v1216 = vadd.f32 %v1098, %v1210
        %s1217 = scalar_lea.vmem %s1, 672
        %v1218 = vld [vmem:[%s1217] sm:$0xff]
        %v1219 = vld [vmem:[%s1217 + $0x8] sm:$0xff]
        %v1220 = vld [vmem:[%s1217 + $0x10] sm:$0xff]
        %v1221 = vld [vmem:[%s1217 + $0x18] sm:$0xff]
        %v1222 = vld [vmem:[%s1217 + $0x20] sm:$0xff]
        %v1223 = vld [vmem:[%s1217 + $0x28] sm:$0xff]
        %v1224 = vld [vmem:[%s1217 + $0x30] sm:$0xff]
        %v1225 = vld [vmem:[%s1217 + $0x38] sm:$0xff]
        %v1226 = vld [vmem:[%s1217 + $0x40] sm:$0xff]
        %v1227 = vld [vmem:[%s1217 + $0x48] sm:$0xff]
        %v1228 = vld [vmem:[%s1217 + $0x50] sm:$0xff]
        %v1229 = vld [vmem:[%s1217 + $0x58] sm:$0xff]
        %vm1230 = vcmask 1040384
        %v1231 = vrot.slane %v384, 7
        %v1232 = vrot.slane %v385, 7
        %v1233 = vsel %vm1230, %v1231, %v1232
        %v1234 = vrot.slane %v386, 7
        %v1235 = vsel %vm1230, %v1232, %v1234
        %v1236 = vrot.slane %v387, 7
        %v1237 = vsel %vm1230, %v1234, %v1236
        %v1238 = vsel %vm407, %v1233, 0
        %v1240 = vsel %vm407, %v1235, 0
        %v1242 = vsel %vm407, %v1237, 0
        %v1244 = vsel %vm407, %v1236, 0
        %1246 = vmatprep.subr.mxu0 0.0
        %1247 = vmatpush1.msra.mxu0 0.0
        %1248 = vmatprep.subr.mxu0 0.0
        %1249 = vmatpush1.msra.mxu0 0.0
        %1250 = vmatprep.subr.mxu0 0.0
        %1251 = vmatpush1.msra.mxu0 0.0
        %1252 = vmatprep.subr.mxu0 0.0
        %1253 = vmatpush1.msra.mxu0 0.0
        %1254 = vmatprep.subr.mxu0 0.0
        %1255 = vmatpush1.msra.mxu0 %v1229
        %1256 = vmatprep.subr.mxu0 0.0
        %1257 = vmatpush1.msra.mxu0 %v1228
        %1258 = vmatprep.subr.mxu0 0.0
        %1259 = vmatpush1.msra.mxu0 %v1227
        %1260 = vmatprep.subr.mxu0 0.0
        %1261 = vmatpush1.msra.mxu0 %v1226
        %1262 = vmatprep.subr.mxu0 0.0
        %1263 = vmatpush1.msra.mxu0 %v1225
        %1264 = vmatprep.subr.mxu0 0.0
        %1265 = vmatpush1.msra.mxu0 %v1224
        %1266 = vmatprep.subr.mxu0 0.0
        %1267 = vmatpush1.msra.mxu0 %v1223
        %1268 = vmatprep.subr.mxu0 0.0
        %1269 = vmatpush1.msra.mxu0 %v1222
        %1270 = vmatprep.subr.mxu0 0.0
        %1271 = vmatpush1.msra.mxu0 %v1221
        %1272 = vmatprep.subr.mxu0 0.0
        %1273 = vmatpush1.msra.mxu0 %v1220
        %1274 = vmatprep.subr.mxu0 0.0
        %1275 = vmatpush1.msra.mxu0 %v1219
        %1276 = vmatprep.subr.mxu0 0.0
        %1277 = vmatpush1.msra.mxu0 %v1218
        %1278 = vmatprep.subr.mxu0 0.0
        %1279 = vmatpush2.msra.mxu0 0.0
        %1280 = vmatprep.subr.mxu0 0.0
        %1281 = vmatpush2.msra.mxu0 0.0
        %1282 = vmatprep.subr.mxu0 0.0
        %1283 = vmatpush2.msra.mxu0 0.0
        %1284 = vmatprep.subr.mxu0 0.0
        %1285 = vmatpush2.msra.mxu0 0.0
        %1286 = vmatprep.subr.mxu0 0.0
        %1287 = vmatpush2.msra.mxu0 0.0
        %1288 = vmatprep.subr.mxu0 0.0
        %1289 = vmatpush2.msra.mxu0 0.0
        %1290 = vmatprep.subr.mxu0 0.0
        %1291 = vmatpush2.msra.mxu0 0.0
        %1292 = vmatprep.subr.mxu0 0.0
        %1293 = vmatpush2.msra.mxu0 0.0
        %1294 = vmatprep.subr.mxu0 0.0
        %1295 = vmatpush2.msra.mxu0 0.0
        %1296 = vmatprep.subr.mxu0 0.0
        %1297 = vmatpush2.msra.mxu0 0.0
        %1298 = vmatprep.subr.mxu0 0.0
        %1299 = vmatpush2.msra.mxu0 0.0
        %1300 = vmatprep.subr.mxu0 0.0
        %1301 = vmatpush2.msra.mxu0 0.0
        %1302 = vmatprep.subr.mxu0 0.0
        %1303 = vmatpush2.msra.mxu0 0.0
        %1304 = vmatprep.subr.mxu0 0.0
        %1305 = vmatpush2.msra.mxu0 0.0
        %1306 = vmatprep.subr.mxu0 0.0
        %1307 = vmatpush2.msra.mxu0 0.0
        %1308 = vmatprep.subr.mxu0 0.0
        %1309 = vmatpush2.msra.mxu0 0.0
        %1310 = vmatprep.mubr.f32.mxu0 0.0
        %1311 = vmatmul.mubr.f32.gmra.mxu0 %v1238
        %v1312 = vpop.f32.mrf.mxu0
        %v1313 = vadd.f32 0.0, %v1312
        %v1314 = vpop.f32.mrf.mxu0
        %1315 = vmatprep.mubr.f32.mxu0 0.0
        %1316 = vmatmul.mubr.f32.gmra.mxu0 %v1240
        %v1317 = vpop.f32.mrf.mxu0
        %v1318 = vadd.f32 0.0, %v1317
        %v1319 = vpop.f32.mrf.mxu0
        %1320 = vmatprep.mubr.f32.mxu0 0.0
        %1321 = vmatmul.mubr.f32.gmra.mxu0 %v1242
        %v1322 = vpop.f32.mrf.mxu0
        %v1323 = vadd.f32 0.0, %v1322
        %v1324 = vpop.f32.mrf.mxu0
        %1325 = vmatprep.mubr.f32.mxu0 0.0
        %1326 = vmatmul.mubr.f32.gmra.mxu0 %v1244
        %v1327 = vpop.f32.mrf.mxu0
        %v1328 = vadd.f32 0.0, %v1327
        %v1329 = vpop.f32.mrf.mxu0
        %1330 = vdwg.mxu0
        %v1331 = vadd.f32 %v1213, %v1313
        %v1332 = vadd.f32 %v1214, %v1318
        %v1333 = vadd.f32 %v1215, %v1323
        %v1334 = vadd.f32 %v1216, %v1328
        %v1335 = vmax.f32 %v1331, 0.0
        %v1336 = vmax.f32 %v1332, 0.0
        %v1337 = vmax.f32 %v1333, 0.0
        %v1338 = vmax.f32 %v1334, 0.0
        %v1339 = vld [vmem:[%s4] sm:$0x1]
        %v1341 = vlaneseq
        %v1342 = vshrl.u32 %v1341, 7
        %v1343 = vsub.s32 0, %v1342
        %v1344 = vrot.slane %v1339, %v1343
        %v1346 = vld [vmem:[%s3] sm:$0xff]
        %v1347 = vld [vmem:[%s3 + $0x8] sm:$0xff]
        %v1348 = vld [vmem:[%s3 + $0x10] sm:$0xff]
        %v1349 = vld [vmem:[%s3 + $0x18] sm:$0xff]
        %v1350 = vld [vmem:[%s3 + $0x20] sm:$0xff]
        %v1351 = vld [vmem:[%s3 + $0x28] sm:$0xff]
        %v1352 = vld [vmem:[%s3 + $0x30] sm:$0x3]
        %vm1353 = vcmask 408576
        %v1355 = vsel %vm1353, %v1335, 0
        %v1358 = vsel %vm1353, %v1336, 0
        %v1361 = vsel %vm1353, %v1337, 0
        %v1364 = vsel %vm1112, %v1352, 0
        %1366 = vmatprep.subr.mxu0 0.0
        %1367 = vmatpush1.msra.mxu0 0.0
        %1368 = vmatprep.subr.mxu0 0.0
        %1369 = vmatpush1.msra.mxu0 0.0
        %1370 = vmatprep.subr.mxu0 0.0
        %1371 = vmatpush1.msra.mxu0 0.0
        %1372 = vmatprep.subr.mxu0 0.0
        %1373 = vmatpush1.msra.mxu0 0.0
        %1374 = vmatprep.subr.mxu0 0.0
        %1375 = vmatpush1.msra.mxu0 0.0
        %1376 = vmatprep.subr.mxu0 0.0
        %1377 = vmatpush1.msra.mxu0 0.0
        %1378 = vmatprep.subr.mxu0 0.0
        %1379 = vmatpush1.msra.mxu0 0.0
        %1380 = vmatprep.subr.mxu0 0.0
        %1381 = vmatpush1.msra.mxu0 0.0
        %1382 = vmatprep.subr.mxu0 0.0
        %1383 = vmatpush1.msra.mxu0 0.0
        %1384 = vmatprep.subr.mxu0 0.0
        %1385 = vmatpush1.msra.mxu0 %v1364
        %1386 = vmatprep.subr.mxu0 0.0
        %1387 = vmatpush1.msra.mxu0 %v1351
        %1388 = vmatprep.subr.mxu0 0.0
        %1389 = vmatpush1.msra.mxu0 %v1350
        %1390 = vmatprep.subr.mxu0 0.0
        %1391 = vmatpush1.msra.mxu0 %v1349
        %1392 = vmatprep.subr.mxu0 0.0
        %1393 = vmatpush1.msra.mxu0 %v1348
        %1394 = vmatprep.subr.mxu0 0.0
        %1395 = vmatpush1.msra.mxu0 %v1347
        %1396 = vmatprep.subr.mxu0 0.0
        %1397 = vmatpush1.msra.mxu0 %v1346
        %1398 = vmatprep.subr.mxu0 0.0
        %1399 = vmatpush2.msra.mxu0 0.0
        %1400 = vmatprep.subr.mxu0 0.0
        %1401 = vmatpush2.msra.mxu0 0.0
        %1402 = vmatprep.subr.mxu0 0.0
        %1403 = vmatpush2.msra.mxu0 0.0
        %1404 = vmatprep.subr.mxu0 0.0
        %1405 = vmatpush2.msra.mxu0 0.0
        %1406 = vmatprep.subr.mxu0 0.0
        %1407 = vmatpush2.msra.mxu0 0.0
        %1408 = vmatprep.subr.mxu0 0.0
        %1409 = vmatpush2.msra.mxu0 0.0
        %1410 = vmatprep.subr.mxu0 0.0
        %1411 = vmatpush2.msra.mxu0 0.0
        %1412 = vmatprep.subr.mxu0 0.0
        %1413 = vmatpush2.msra.mxu0 0.0
        %1414 = vmatprep.subr.mxu0 0.0
        %1415 = vmatpush2.msra.mxu0 0.0
        %1416 = vmatprep.subr.mxu0 0.0
        %1417 = vmatpush2.msra.mxu0 0.0
        %1418 = vmatprep.subr.mxu0 0.0
        %1419 = vmatpush2.msra.mxu0 0.0
        %1420 = vmatprep.subr.mxu0 0.0
        %1421 = vmatpush2.msra.mxu0 0.0
        %1422 = vmatprep.subr.mxu0 0.0
        %1423 = vmatpush2.msra.mxu0 0.0
        %1424 = vmatprep.subr.mxu0 0.0
        %1425 = vmatpush2.msra.mxu0 0.0
        %1426 = vmatprep.subr.mxu0 0.0
        %1427 = vmatpush2.msra.mxu0 0.0
        %1428 = vmatprep.subr.mxu0 0.0
        %1429 = vmatpush2.msra.mxu0 0.0
        %1430 = vmatprep.mubr.f32.mxu0 0.0
        %1431 = vmatmul.mubr.f32.gmra.mxu0 %v1355
        %v1432 = vpop.f32.mrf.mxu0
        %v1433 = vadd.f32 0.0, %v1432
        %v1434 = vpop.f32.mrf.mxu0
        %1435 = vmatprep.mubr.f32.mxu0 0.0
        %1436 = vmatmul.mubr.f32.gmra.mxu0 %v1358
        %v1437 = vpop.f32.mrf.mxu0
        %v1438 = vadd.f32 0.0, %v1437
        %v1439 = vpop.f32.mrf.mxu0
        %1440 = vmatprep.mubr.f32.mxu0 0.0
        %1441 = vmatmul.mubr.f32.gmra.mxu0 %v1361
        %v1442 = vpop.f32.mrf.mxu0
        %v1443 = vadd.f32 0.0, %v1442
        %v1444 = vpop.f32.mrf.mxu0
        %1445 = vdwg.mxu0
        %v1446 = vadd.f32 %v1344, %v1433
        %v1447 = vadd.f32 %v1344, %v1438
        %v1448 = vadd.f32 %v1344, %v1443
        %s1449 = scalar_lea.vmem %s3, 56
        %v1450 = vld [vmem:[%s1449] sm:$0xff]
        %v1451 = vld [vmem:[%s1449 + $0x8] sm:$0xff]
        %v1452 = vld [vmem:[%s1449 + $0x10] sm:$0xff]
        %v1453 = vld [vmem:[%s1449 + $0x18] sm:$0xff]
        %v1454 = vld [vmem:[%s1449 + $0x20] sm:$0xff]
        %v1455 = vld [vmem:[%s1449 + $0x28] sm:$0xff]
        %v1456 = vld [vmem:[%s1449 + $0x30] sm:$0x3]
        %v1457 = vrot.slane %v1335, 1
        %v1458 = vrot.slane %v1336, 1
        %v1459 = vsel %vm522, %v1457, %v1458
        %v1460 = vrot.slane %v1337, 1
        %v1461 = vsel %vm522, %v1458, %v1460
        %v1462 = vsel %vm1353, %v1459, 0
        %v1464 = vsel %vm1353, %v1461, 0
        %v1466 = vsel %vm1353, %v1460, 0
        %v1469 = vsel %vm1112, %v1456, 0
        %1471 = vmatprep.subr.mxu0 0.0
        %1472 = vmatpush1.msra.mxu0 0.0
        %1473 = vmatprep.subr.mxu0 0.0
        %1474 = vmatpush1.msra.mxu0 0.0
        %1475 = vmatprep.subr.mxu0 0.0
        %1476 = vmatpush1.msra.mxu0 0.0
        %1477 = vmatprep.subr.mxu0 0.0
        %1478 = vmatpush1.msra.mxu0 0.0
        %1479 = vmatprep.subr.mxu0 0.0
        %1480 = vmatpush1.msra.mxu0 0.0
        %1481 = vmatprep.subr.mxu0 0.0
        %1482 = vmatpush1.msra.mxu0 0.0
        %1483 = vmatprep.subr.mxu0 0.0
        %1484 = vmatpush1.msra.mxu0 0.0
        %1485 = vmatprep.subr.mxu0 0.0
        %1486 = vmatpush1.msra.mxu0 0.0
        %1487 = vmatprep.subr.mxu0 0.0
        %1488 = vmatpush1.msra.mxu0 0.0
        %1489 = vmatprep.subr.mxu0 0.0
        %1490 = vmatpush1.msra.mxu0 %v1469
        %1491 = vmatprep.subr.mxu0 0.0
        %1492 = vmatpush1.msra.mxu0 %v1455
        %1493 = vmatprep.subr.mxu0 0.0
        %1494 = vmatpush1.msra.mxu0 %v1454
        %1495 = vmatprep.subr.mxu0 0.0
        %1496 = vmatpush1.msra.mxu0 %v1453
        %1497 = vmatprep.subr.mxu0 0.0
        %1498 = vmatpush1.msra.mxu0 %v1452
        %1499 = vmatprep.subr.mxu0 0.0
        %1500 = vmatpush1.msra.mxu0 %v1451
        %1501 = vmatprep.subr.mxu0 0.0
        %1502 = vmatpush1.msra.mxu0 %v1450
        %1503 = vmatprep.subr.mxu0 0.0
        %1504 = vmatpush2.msra.mxu0 0.0
        %1505 = vmatprep.subr.mxu0 0.0
        %1506 = vmatpush2.msra.mxu0 0.0
        %1507 = vmatprep.subr.mxu0 0.0
        %1508 = vmatpush2.msra.mxu0 0.0
        %1509 = vmatprep.subr.mxu0 0.0
        %1510 = vmatpush2.msra.mxu0 0.0
        %1511 = vmatprep.subr.mxu0 0.0
        %1512 = vmatpush2.msra.mxu0 0.0
        %1513 = vmatprep.subr.mxu0 0.0
        %1514 = vmatpush2.msra.mxu0 0.0
        %1515 = vmatprep.subr.mxu0 0.0
        %1516 = vmatpush2.msra.mxu0 0.0
        %1517 = vmatprep.subr.mxu0 0.0
        %1518 = vmatpush2.msra.mxu0 0.0
        %1519 = vmatprep.subr.mxu0 0.0
        %1520 = vmatpush2.msra.mxu0 0.0
        %1521 = vmatprep.subr.mxu0 0.0
        %1522 = vmatpush2.msra.mxu0 0.0
        %1523 = vmatprep.subr.mxu0 0.0
        %1524 = vmatpush2.msra.mxu0 0.0
        %1525 = vmatprep.subr.mxu0 0.0
        %1526 = vmatpush2.msra.mxu0 0.0
        %1527 = vmatprep.subr.mxu0 0.0
        %1528 = vmatpush2.msra.mxu0 0.0
        %1529 = vmatprep.subr.mxu0 0.0
        %1530 = vmatpush2.msra.mxu0 0.0
        %1531 = vmatprep.subr.mxu0 0.0
        %1532 = vmatpush2.msra.mxu0 0.0
        %1533 = vmatprep.subr.mxu0 0.0
        %1534 = vmatpush2.msra.mxu0 0.0
        %1535 = vmatprep.mubr.f32.mxu0 0.0
        %1536 = vmatmul.mubr.f32.gmra.mxu0 %v1462
        %v1537 = vpop.f32.mrf.mxu0
        %v1538 = vadd.f32 0.0, %v1537
        %v1539 = vpop.f32.mrf.mxu0
        %1540 = vmatprep.mubr.f32.mxu0 0.0
        %1541 = vmatmul.mubr.f32.gmra.mxu0 %v1464
        %v1542 = vpop.f32.mrf.mxu0
        %v1543 = vadd.f32 0.0, %v1542
        %v1544 = vpop.f32.mrf.mxu0
        %1545 = vmatprep.mubr.f32.mxu0 0.0
        %1546 = vmatmul.mubr.f32.gmra.mxu0 %v1466
        %v1547 = vpop.f32.mrf.mxu0
        %v1548 = vadd.f32 0.0, %v1547
        %v1549 = vpop.f32.mrf.mxu0
        %1550 = vdwg.mxu0
        %v1551 = vadd.f32 %v1446, %v1538
        %v1552 = vadd.f32 %v1447, %v1543
        %v1553 = vadd.f32 %v1448, %v1548
        %s1554 = scalar_lea.vmem %s3, 112
        %v1555 = vld [vmem:[%s1554] sm:$0xff]
        %v1556 = vld [vmem:[%s1554 + $0x8] sm:$0xff]
        %v1557 = vld [vmem:[%s1554 + $0x10] sm:$0xff]
        %v1558 = vld [vmem:[%s1554 + $0x18] sm:$0xff]
        %v1559 = vld [vmem:[%s1554 + $0x20] sm:$0xff]
        %v1560 = vld [vmem:[%s1554 + $0x28] sm:$0xff]
        %v1561 = vld [vmem:[%s1554 + $0x30] sm:$0x3]
        %v1562 = vrot.slane %v1335, 2
        %v1563 = vrot.slane %v1336, 2
        %v1564 = vsel %vm640, %v1562, %v1563
        %v1565 = vrot.slane %v1337, 2
        %v1566 = vsel %vm640, %v1563, %v1565
        %v1567 = vsel %vm1353, %v1564, 0
        %v1569 = vsel %vm1353, %v1566, 0
        %v1571 = vsel %vm1353, %v1565, 0
        %v1574 = vsel %vm1112, %v1561, 0
        %1576 = vmatprep.subr.mxu0 0.0
        %1577 = vmatpush1.msra.mxu0 0.0
        %1578 = vmatprep.subr.mxu0 0.0
        %1579 = vmatpush1.msra.mxu0 0.0
        %1580 = vmatprep.subr.mxu0 0.0
        %1581 = vmatpush1.msra.mxu0 0.0
        %1582 = vmatprep.subr.mxu0 0.0
        %1583 = vmatpush1.msra.mxu0 0.0
        %1584 = vmatprep.subr.mxu0 0.0
        %1585 = vmatpush1.msra.mxu0 0.0
        %1586 = vmatprep.subr.mxu0 0.0
        %1587 = vmatpush1.msra.mxu0 0.0
        %1588 = vmatprep.subr.mxu0 0.0
        %1589 = vmatpush1.msra.mxu0 0.0
        %1590 = vmatprep.subr.mxu0 0.0
        %1591 = vmatpush1.msra.mxu0 0.0
        %1592 = vmatprep.subr.mxu0 0.0
        %1593 = vmatpush1.msra.mxu0 0.0
        %1594 = vmatprep.subr.mxu0 0.0
        %1595 = vmatpush1.msra.mxu0 %v1574
        %1596 = vmatprep.subr.mxu0 0.0
        %1597 = vmatpush1.msra.mxu0 %v1560
        %1598 = vmatprep.subr.mxu0 0.0
        %1599 = vmatpush1.msra.mxu0 %v1559
        %1600 = vmatprep.subr.mxu0 0.0
        %1601 = vmatpush1.msra.mxu0 %v1558
        %1602 = vmatprep.subr.mxu0 0.0
        %1603 = vmatpush1.msra.mxu0 %v1557
        %1604 = vmatprep.subr.mxu0 0.0
        %1605 = vmatpush1.msra.mxu0 %v1556
        %1606 = vmatprep.subr.mxu0 0.0
        %1607 = vmatpush1.msra.mxu0 %v1555
        %1608 = vmatprep.subr.mxu0 0.0
        %1609 = vmatpush2.msra.mxu0 0.0
        %1610 = vmatprep.subr.mxu0 0.0
        %1611 = vmatpush2.msra.mxu0 0.0
        %1612 = vmatprep.subr.mxu0 0.0
        %1613 = vmatpush2.msra.mxu0 0.0
        %1614 = vmatprep.subr.mxu0 0.0
        %1615 = vmatpush2.msra.mxu0 0.0
        %1616 = vmatprep.subr.mxu0 0.0
        %1617 = vmatpush2.msra.mxu0 0.0
        %1618 = vmatprep.subr.mxu0 0.0
        %1619 = vmatpush2.msra.mxu0 0.0
        %1620 = vmatprep.subr.mxu0 0.0
        %1621 = vmatpush2.msra.mxu0 0.0
        %1622 = vmatprep.subr.mxu0 0.0
        %1623 = vmatpush2.msra.mxu0 0.0
        %1624 = vmatprep.subr.mxu0 0.0
        %1625 = vmatpush2.msra.mxu0 0.0
        %1626 = vmatprep.subr.mxu0 0.0
        %1627 = vmatpush2.msra.mxu0 0.0
        %1628 = vmatprep.subr.mxu0 0.0
        %1629 = vmatpush2.msra.mxu0 0.0
        %1630 = vmatprep.subr.mxu0 0.0
        %1631 = vmatpush2.msra.mxu0 0.0
        %1632 = vmatprep.subr.mxu0 0.0
        %1633 = vmatpush2.msra.mxu0 0.0
        %1634 = vmatprep.subr.mxu0 0.0
        %1635 = vmatpush2.msra.mxu0 0.0
        %1636 = vmatprep.subr.mxu0 0.0
        %1637 = vmatpush2.msra.mxu0 0.0
        %1638 = vmatprep.subr.mxu0 0.0
        %1639 = vmatpush2.msra.mxu0 0.0
        %1640 = vmatprep.mubr.f32.mxu0 0.0
        %1641 = vmatmul.mubr.f32.gmra.mxu0 %v1567
        %v1642 = vpop.f32.mrf.mxu0
        %v1643 = vadd.f32 0.0, %v1642
        %v1644 = vpop.f32.mrf.mxu0
        %1645 = vmatprep.mubr.f32.mxu0 0.0
        %1646 = vmatmul.mubr.f32.gmra.mxu0 %v1569
        %v1647 = vpop.f32.mrf.mxu0
        %v1648 = vadd.f32 0.0, %v1647
        %v1649 = vpop.f32.mrf.mxu0
        %1650 = vmatprep.mubr.f32.mxu0 0.0
        %1651 = vmatmul.mubr.f32.gmra.mxu0 %v1571
        %v1652 = vpop.f32.mrf.mxu0
        %v1653 = vadd.f32 0.0, %v1652
        %v1654 = vpop.f32.mrf.mxu0
        %1655 = vdwg.mxu0
        %v1656 = vadd.f32 %v1551, %v1643
        %v1657 = vadd.f32 %v1552, %v1648
        %v1658 = vadd.f32 %v1553, %v1653
        %s1659 = scalar_lea.vmem %s3, 168
        %v1660 = vld [vmem:[%s1659] sm:$0xff]
        %v1661 = vld [vmem:[%s1659 + $0x8] sm:$0xff]
        %v1662 = vld [vmem:[%s1659 + $0x10] sm:$0xff]
        %v1663 = vld [vmem:[%s1659 + $0x18] sm:$0xff]
        %v1664 = vld [vmem:[%s1659 + $0x20] sm:$0xff]
        %v1665 = vld [vmem:[%s1659 + $0x28] sm:$0xff]
        %v1666 = vld [vmem:[%s1659 + $0x30] sm:$0x3]
        %v1667 = vrot.slane %v1335, 3
        %v1668 = vrot.slane %v1336, 3
        %v1669 = vsel %vm758, %v1667, %v1668
        %v1670 = vrot.slane %v1337, 3
        %v1671 = vsel %vm758, %v1668, %v1670
        %v1672 = vsel %vm1353, %v1669, 0
        %v1674 = vsel %vm1353, %v1671, 0
        %v1676 = vsel %vm1353, %v1670, 0
        %v1679 = vsel %vm1112, %v1666, 0
        %1681 = vmatprep.subr.mxu0 0.0
        %1682 = vmatpush1.msra.mxu0 0.0
        %1683 = vmatprep.subr.mxu0 0.0
        %1684 = vmatpush1.msra.mxu0 0.0
        %1685 = vmatprep.subr.mxu0 0.0
        %1686 = vmatpush1.msra.mxu0 0.0
        %1687 = vmatprep.subr.mxu0 0.0
        %1688 = vmatpush1.msra.mxu0 0.0
        %1689 = vmatprep.subr.mxu0 0.0
        %1690 = vmatpush1.msra.mxu0 0.0
        %1691 = vmatprep.subr.mxu0 0.0
        %1692 = vmatpush1.msra.mxu0 0.0
        %1693 = vmatprep.subr.mxu0 0.0
        %1694 = vmatpush1.msra.mxu0 0.0
        %1695 = vmatprep.subr.mxu0 0.0
        %1696 = vmatpush1.msra.mxu0 0.0
        %1697 = vmatprep.subr.mxu0 0.0
        %1698 = vmatpush1.msra.mxu0 0.0
        %1699 = vmatprep.subr.mxu0 0.0
        %1700 = vmatpush1.msra.mxu0 %v1679
        %1701 = vmatprep.subr.mxu0 0.0
        %1702 = vmatpush1.msra.mxu0 %v1665
        %1703 = vmatprep.subr.mxu0 0.0
        %1704 = vmatpush1.msra.mxu0 %v1664
        %1705 = vmatprep.subr.mxu0 0.0
        %1706 = vmatpush1.msra.mxu0 %v1663
        %1707 = vmatprep.subr.mxu0 0.0
        %1708 = vmatpush1.msra.mxu0 %v1662
        %1709 = vmatprep.subr.mxu0 0.0
        %1710 = vmatpush1.msra.mxu0 %v1661
        %1711 = vmatprep.subr.mxu0 0.0
        %1712 = vmatpush1.msra.mxu0 %v1660
        %1713 = vmatprep.subr.mxu0 0.0
        %1714 = vmatpush2.msra.mxu0 0.0
        %1715 = vmatprep.subr.mxu0 0.0
        %1716 = vmatpush2.msra.mxu0 0.0
        %1717 = vmatprep.subr.mxu0 0.0
        %1718 = vmatpush2.msra.mxu0 0.0
        %1719 = vmatprep.subr.mxu0 0.0
        %1720 = vmatpush2.msra.mxu0 0.0
        %1721 = vmatprep.subr.mxu0 0.0
        %1722 = vmatpush2.msra.mxu0 0.0
        %1723 = vmatprep.subr.mxu0 0.0
        %1724 = vmatpush2.msra.mxu0 0.0
        %1725 = vmatprep.subr.mxu0 0.0
        %1726 = vmatpush2.msra.mxu0 0.0
        %1727 = vmatprep.subr.mxu0 0.0
        %1728 = vmatpush2.msra.mxu0 0.0
        %1729 = vmatprep.subr.mxu0 0.0
        %1730 = vmatpush2.msra.mxu0 0.0
        %1731 = vmatprep.subr.mxu0 0.0
        %1732 = vmatpush2.msra.mxu0 0.0
        %1733 = vmatprep.subr.mxu0 0.0
        %1734 = vmatpush2.msra.mxu0 0.0
        %1735 = vmatprep.subr.mxu0 0.0
        %1736 = vmatpush2.msra.mxu0 0.0
        %1737 = vmatprep.subr.mxu0 0.0
        %1738 = vmatpush2.msra.mxu0 0.0
        %1739 = vmatprep.subr.mxu0 0.0
        %1740 = vmatpush2.msra.mxu0 0.0
        %1741 = vmatprep.subr.mxu0 0.0
        %1742 = vmatpush2.msra.mxu0 0.0
        %1743 = vmatprep.subr.mxu0 0.0
        %1744 = vmatpush2.msra.mxu0 0.0
        %1745 = vmatprep.mubr.f32.mxu0 0.0
        %1746 = vmatmul.mubr.f32.gmra.mxu0 %v1672
        %v1747 = vpop.f32.mrf.mxu0
        %v1748 = vadd.f32 0.0, %v1747
        %v1749 = vpop.f32.mrf.mxu0
        %1750 = vmatprep.mubr.f32.mxu0 0.0
        %1751 = vmatmul.mubr.f32.gmra.mxu0 %v1674
        %v1752 = vpop.f32.mrf.mxu0
        %v1753 = vadd.f32 0.0, %v1752
        %v1754 = vpop.f32.mrf.mxu0
        %1755 = vmatprep.mubr.f32.mxu0 0.0
        %1756 = vmatmul.mubr.f32.gmra.mxu0 %v1676
        %v1757 = vpop.f32.mrf.mxu0
        %v1758 = vadd.f32 0.0, %v1757
        %v1759 = vpop.f32.mrf.mxu0
        %1760 = vdwg.mxu0
        %v1761 = vadd.f32 %v1656, %v1748
        %v1762 = vadd.f32 %v1657, %v1753
        %v1763 = vadd.f32 %v1658, %v1758
        %s1764 = scalar_lea.vmem %s3, 224
        %v1765 = vld [vmem:[%s1764] sm:$0xff]
        %v1766 = vld [vmem:[%s1764 + $0x8] sm:$0xff]
        %v1767 = vld [vmem:[%s1764 + $0x10] sm:$0xff]
        %v1768 = vld [vmem:[%s1764 + $0x18] sm:$0xff]
        %v1769 = vld [vmem:[%s1764 + $0x20] sm:$0xff]
        %v1770 = vld [vmem:[%s1764 + $0x28] sm:$0xff]
        %v1771 = vld [vmem:[%s1764 + $0x30] sm:$0x3]
        %v1772 = vrot.slane %v1335, 4
        %v1773 = vrot.slane %v1336, 4
        %v1774 = vsel %vm876, %v1772, %v1773
        %v1775 = vrot.slane %v1337, 4
        %v1776 = vsel %vm876, %v1773, %v1775
        %v1777 = vsel %vm1353, %v1774, 0
        %v1779 = vsel %vm1353, %v1776, 0
        %v1781 = vsel %vm1353, %v1775, 0
        %v1784 = vsel %vm1112, %v1771, 0
        %1786 = vmatprep.subr.mxu0 0.0
        %1787 = vmatpush1.msra.mxu0 0.0
        %1788 = vmatprep.subr.mxu0 0.0
        %1789 = vmatpush1.msra.mxu0 0.0
        %1790 = vmatprep.subr.mxu0 0.0
        %1791 = vmatpush1.msra.mxu0 0.0
        %1792 = vmatprep.subr.mxu0 0.0
        %1793 = vmatpush1.msra.mxu0 0.0
        %1794 = vmatprep.subr.mxu0 0.0
        %1795 = vmatpush1.msra.mxu0 0.0
        %1796 = vmatprep.subr.mxu0 0.0
        %1797 = vmatpush1.msra.mxu0 0.0
        %1798 = vmatprep.subr.mxu0 0.0
        %1799 = vmatpush1.msra.mxu0 0.0
        %1800 = vmatprep.subr.mxu0 0.0
        %1801 = vmatpush1.msra.mxu0 0.0
        %1802 = vmatprep.subr.mxu0 0.0
        %1803 = vmatpush1.msra.mxu0 0.0
        %1804 = vmatprep.subr.mxu0 0.0
        %1805 = vmatpush1.msra.mxu0 %v1784
        %1806 = vmatprep.subr.mxu0 0.0
        %1807 = vmatpush1.msra.mxu0 %v1770
        %1808 = vmatprep.subr.mxu0 0.0
        %1809 = vmatpush1.msra.mxu0 %v1769
        %1810 = vmatprep.subr.mxu0 0.0
        %1811 = vmatpush1.msra.mxu0 %v1768
        %1812 = vmatprep.subr.mxu0 0.0
        %1813 = vmatpush1.msra.mxu0 %v1767
        %1814 = vmatprep.subr.mxu0 0.0
        %1815 = vmatpush1.msra.mxu0 %v1766
        %1816 = vmatprep.subr.mxu0 0.0
        %1817 = vmatpush1.msra.mxu0 %v1765
        %1818 = vmatprep.subr.mxu0 0.0
        %1819 = vmatpush2.msra.mxu0 0.0
        %1820 = vmatprep.subr.mxu0 0.0
        %1821 = vmatpush2.msra.mxu0 0.0
        %1822 = vmatprep.subr.mxu0 0.0
        %1823 = vmatpush2.msra.mxu0 0.0
        %1824 = vmatprep.subr.mxu0 0.0
        %1825 = vmatpush2.msra.mxu0 0.0
        %1826 = vmatprep.subr.mxu0 0.0
        %1827 = vmatpush2.msra.mxu0 0.0
        %1828 = vmatprep.subr.mxu0 0.0
        %1829 = vmatpush2.msra.mxu0 0.0
        %1830 = vmatprep.subr.mxu0 0.0
        %1831 = vmatpush2.msra.mxu0 0.0
        %1832 = vmatprep.subr.mxu0 0.0
        %1833 = vmatpush2.msra.mxu0 0.0
        %1834 = vmatprep.subr.mxu0 0.0
        %1835 = vmatpush2.msra.mxu0 0.0
        %1836 = vmatprep.subr.mxu0 0.0
        %1837 = vmatpush2.msra.mxu0 0.0
        %1838 = vmatprep.subr.mxu0 0.0
        %1839 = vmatpush2.msra.mxu0 0.0
        %1840 = vmatprep.subr.mxu0 0.0
        %1841 = vmatpush2.msra.mxu0 0.0
        %1842 = vmatprep.subr.mxu0 0.0
        %1843 = vmatpush2.msra.mxu0 0.0
        %1844 = vmatprep.subr.mxu0 0.0
        %1845 = vmatpush2.msra.mxu0 0.0
        %1846 = vmatprep.subr.mxu0 0.0
        %1847 = vmatpush2.msra.mxu0 0.0
        %1848 = vmatprep.subr.mxu0 0.0
        %1849 = vmatpush2.msra.mxu0 0.0
        %1850 = vmatprep.mubr.f32.mxu0 0.0
        %1851 = vmatmul.mubr.f32.gmra.mxu0 %v1777
        %v1852 = vpop.f32.mrf.mxu0
        %v1853 = vadd.f32 0.0, %v1852
        %v1854 = vpop.f32.mrf.mxu0
        %1855 = vmatprep.mubr.f32.mxu0 0.0
        %1856 = vmatmul.mubr.f32.gmra.mxu0 %v1779
        %v1857 = vpop.f32.mrf.mxu0
        %v1858 = vadd.f32 0.0, %v1857
        %v1859 = vpop.f32.mrf.mxu0
        %1860 = vmatprep.mubr.f32.mxu0 0.0
        %1861 = vmatmul.mubr.f32.gmra.mxu0 %v1781
        %v1862 = vpop.f32.mrf.mxu0
        %v1863 = vadd.f32 0.0, %v1862
        %v1864 = vpop.f32.mrf.mxu0
        %1865 = vdwg.mxu0
        %v1866 = vadd.f32 %v1761, %v1853
        %v1867 = vadd.f32 %v1762, %v1858
        %v1868 = vadd.f32 %v1763, %v1863
        %s1869 = scalar_lea.vmem %s3, 280
        %v1870 = vld [vmem:[%s1869] sm:$0xff]
        %v1871 = vld [vmem:[%s1869 + $0x8] sm:$0xff]
        %v1872 = vld [vmem:[%s1869 + $0x10] sm:$0xff]
        %v1873 = vld [vmem:[%s1869 + $0x18] sm:$0xff]
        %v1874 = vld [vmem:[%s1869 + $0x20] sm:$0xff]
        %v1875 = vld [vmem:[%s1869 + $0x28] sm:$0xff]
        %v1876 = vld [vmem:[%s1869 + $0x30] sm:$0x3]
        %v1877 = vrot.slane %v1335, 5
        %v1878 = vrot.slane %v1336, 5
        %v1879 = vsel %vm994, %v1877, %v1878
        %v1880 = vrot.slane %v1337, 5
        %v1881 = vsel %vm994, %v1878, %v1880
        %v1882 = vsel %vm1353, %v1879, 0
        %v1884 = vsel %vm1353, %v1881, 0
        %v1886 = vsel %vm1353, %v1880, 0
        %v1889 = vsel %vm1112, %v1876, 0
        %1891 = vmatprep.subr.mxu0 0.0
        %1892 = vmatpush1.msra.mxu0 0.0
        %1893 = vmatprep.subr.mxu0 0.0
        %1894 = vmatpush1.msra.mxu0 0.0
        %1895 = vmatprep.subr.mxu0 0.0
        %1896 = vmatpush1.msra.mxu0 0.0
        %1897 = vmatprep.subr.mxu0 0.0
        %1898 = vmatpush1.msra.mxu0 0.0
        %1899 = vmatprep.subr.mxu0 0.0
        %1900 = vmatpush1.msra.mxu0 0.0
        %1901 = vmatprep.subr.mxu0 0.0
        %1902 = vmatpush1.msra.mxu0 0.0
        %1903 = vmatprep.subr.mxu0 0.0
        %1904 = vmatpush1.msra.mxu0 0.0
        %1905 = vmatprep.subr.mxu0 0.0
        %1906 = vmatpush1.msra.mxu0 0.0
        %1907 = vmatprep.subr.mxu0 0.0
        %1908 = vmatpush1.msra.mxu0 0.0
        %1909 = vmatprep.subr.mxu0 0.0
        %1910 = vmatpush1.msra.mxu0 %v1889
        %1911 = vmatprep.subr.mxu0 0.0
        %1912 = vmatpush1.msra.mxu0 %v1875
        %1913 = vmatprep.subr.mxu0 0.0
        %1914 = vmatpush1.msra.mxu0 %v1874
        %1915 = vmatprep.subr.mxu0 0.0
        %1916 = vmatpush1.msra.mxu0 %v1873
        %1917 = vmatprep.subr.mxu0 0.0
        %1918 = vmatpush1.msra.mxu0 %v1872
        %1919 = vmatprep.subr.mxu0 0.0
        %1920 = vmatpush1.msra.mxu0 %v1871
        %1921 = vmatprep.subr.mxu0 0.0
        %1922 = vmatpush1.msra.mxu0 %v1870
        %1923 = vmatprep.subr.mxu0 0.0
        %1924 = vmatpush2.msra.mxu0 0.0
        %1925 = vmatprep.subr.mxu0 0.0
        %1926 = vmatpush2.msra.mxu0 0.0
        %1927 = vmatprep.subr.mxu0 0.0
        %1928 = vmatpush2.msra.mxu0 0.0
        %1929 = vmatprep.subr.mxu0 0.0
        %1930 = vmatpush2.msra.mxu0 0.0
        %1931 = vmatprep.subr.mxu0 0.0
        %1932 = vmatpush2.msra.mxu0 0.0
        %1933 = vmatprep.subr.mxu0 0.0
        %1934 = vmatpush2.msra.mxu0 0.0
        %1935 = vmatprep.subr.mxu0 0.0
        %1936 = vmatpush2.msra.mxu0 0.0
        %1937 = vmatprep.subr.mxu0 0.0
        %1938 = vmatpush2.msra.mxu0 0.0
        %1939 = vmatprep.subr.mxu0 0.0
        %1940 = vmatpush2.msra.mxu0 0.0
        %1941 = vmatprep.subr.mxu0 0.0
        %1942 = vmatpush2.msra.mxu0 0.0
        %1943 = vmatprep.subr.mxu0 0.0
        %1944 = vmatpush2.msra.mxu0 0.0
        %1945 = vmatprep.subr.mxu0 0.0
        %1946 = vmatpush2.msra.mxu0 0.0
        %1947 = vmatprep.subr.mxu0 0.0
        %1948 = vmatpush2.msra.mxu0 0.0
        %1949 = vmatprep.subr.mxu0 0.0
        %1950 = vmatpush2.msra.mxu0 0.0
        %1951 = vmatprep.subr.mxu0 0.0
        %1952 = vmatpush2.msra.mxu0 0.0
        %1953 = vmatprep.subr.mxu0 0.0
        %1954 = vmatpush2.msra.mxu0 0.0
        %1955 = vmatprep.mubr.f32.mxu0 0.0
        %1956 = vmatmul.mubr.f32.gmra.mxu0 %v1882
        %v1957 = vpop.f32.mrf.mxu0
        %v1958 = vadd.f32 0.0, %v1957
        %v1959 = vpop.f32.mrf.mxu0
        %1960 = vmatprep.mubr.f32.mxu0 0.0
        %1961 = vmatmul.mubr.f32.gmra.mxu0 %v1884
        %v1962 = vpop.f32.mrf.mxu0
        %v1963 = vadd.f32 0.0, %v1962
        %v1964 = vpop.f32.mrf.mxu0
        %1965 = vmatprep.mubr.f32.mxu0 0.0
        %1966 = vmatmul.mubr.f32.gmra.mxu0 %v1886
        %v1967 = vpop.f32.mrf.mxu0
        %v1968 = vadd.f32 0.0, %v1967
        %v1969 = vpop.f32.mrf.mxu0
        %1970 = vdwg.mxu0
        %v1971 = vadd.f32 %v1866, %v1958
        %v1972 = vadd.f32 %v1867, %v1963
        %v1973 = vadd.f32 %v1868, %v1968
        %s1974 = scalar_lea.vmem %s3, 336
        %v1975 = vld [vmem:[%s1974] sm:$0xff]
        %v1976 = vld [vmem:[%s1974 + $0x8] sm:$0xff]
        %v1977 = vld [vmem:[%s1974 + $0x10] sm:$0xff]
        %v1978 = vld [vmem:[%s1974 + $0x18] sm:$0xff]
        %v1979 = vld [vmem:[%s1974 + $0x20] sm:$0xff]
        %v1980 = vld [vmem:[%s1974 + $0x28] sm:$0xff]
        %v1981 = vld [vmem:[%s1974 + $0x30] sm:$0x3]
        %v1982 = vrot.slane %v1335, 6
        %v1983 = vrot.slane %v1336, 6
        %v1984 = vsel %vm1112, %v1982, %v1983
        %v1985 = vrot.slane %v1337, 6
        %v1986 = vsel %vm1112, %v1983, %v1985
        %v1987 = vsel %vm1353, %v1984, 0
        %v1989 = vsel %vm1353, %v1986, 0
        %v1991 = vsel %vm1353, %v1985, 0
        %v1994 = vsel %vm1112, %v1981, 0
        %1996 = vmatprep.subr.mxu0 0.0
        %1997 = vmatpush1.msra.mxu0 0.0
        %1998 = vmatprep.subr.mxu0 0.0
        %1999 = vmatpush1.msra.mxu0 0.0
        %2000 = vmatprep.subr.mxu0 0.0
        %2001 = vmatpush1.msra.mxu0 0.0
        %2002 = vmatprep.subr.mxu0 0.0
        %2003 = vmatpush1.msra.mxu0 0.0
        %2004 = vmatprep.subr.mxu0 0.0
        %2005 = vmatpush1.msra.mxu0 0.0
        %2006 = vmatprep.subr.mxu0 0.0
        %2007 = vmatpush1.msra.mxu0 0.0
        %2008 = vmatprep.subr.mxu0 0.0
        %2009 = vmatpush1.msra.mxu0 0.0
        %2010 = vmatprep.subr.mxu0 0.0
        %2011 = vmatpush1.msra.mxu0 0.0
        %2012 = vmatprep.subr.mxu0 0.0
        %2013 = vmatpush1.msra.mxu0 0.0
        %2014 = vmatprep.subr.mxu0 0.0
        %2015 = vmatpush1.msra.mxu0 %v1994
        %2016 = vmatprep.subr.mxu0 0.0
        %2017 = vmatpush1.msra.mxu0 %v1980
        %2018 = vmatprep.subr.mxu0 0.0
        %2019 = vmatpush1.msra.mxu0 %v1979
        %2020 = vmatprep.subr.mxu0 0.0
        %2021 = vmatpush1.msra.mxu0 %v1978
        %2022 = vmatprep.subr.mxu0 0.0
        %2023 = vmatpush1.msra.mxu0 %v1977
        %2024 = vmatprep.subr.mxu0 0.0
        %2025 = vmatpush1.msra.mxu0 %v1976
        %2026 = vmatprep.subr.mxu0 0.0
        %2027 = vmatpush1.msra.mxu0 %v1975
        %2028 = vmatprep.subr.mxu0 0.0
        %2029 = vmatpush2.msra.mxu0 0.0
        %2030 = vmatprep.subr.mxu0 0.0
        %2031 = vmatpush2.msra.mxu0 0.0
        %2032 = vmatprep.subr.mxu0 0.0
        %2033 = vmatpush2.msra.mxu0 0.0
        %2034 = vmatprep.subr.mxu0 0.0
        %2035 = vmatpush2.msra.mxu0 0.0
        %2036 = vmatprep.subr.mxu0 0.0
        %2037 = vmatpush2.msra.mxu0 0.0
        %2038 = vmatprep.subr.mxu0 0.0
        %2039 = vmatpush2.msra.mxu0 0.0
        %2040 = vmatprep.subr.mxu0 0.0
        %2041 = vmatpush2.msra.mxu0 0.0
        %2042 = vmatprep.subr.mxu0 0.0
        %2043 = vmatpush2.msra.mxu0 0.0
        %2044 = vmatprep.subr.mxu0 0.0
        %2045 = vmatpush2.msra.mxu0 0.0
        %2046 = vmatprep.subr.mxu0 0.0
        %2047 = vmatpush2.msra.mxu0 0.0
        %2048 = vmatprep.subr.mxu0 0.0
        %2049 = vmatpush2.msra.mxu0 0.0
        %2050 = vmatprep.subr.mxu0 0.0
        %2051 = vmatpush2.msra.mxu0 0.0
        %2052 = vmatprep.subr.mxu0 0.0
        %2053 = vmatpush2.msra.mxu0 0.0
        %2054 = vmatprep.subr.mxu0 0.0
        %2055 = vmatpush2.msra.mxu0 0.0
        %2056 = vmatprep.subr.mxu0 0.0
        %2057 = vmatpush2.msra.mxu0 0.0
        %2058 = vmatprep.subr.mxu0 0.0
        %2059 = vmatpush2.msra.mxu0 0.0
        %2060 = vmatprep.mubr.f32.mxu0 0.0
        %2061 = vmatmul.mubr.f32.gmra.mxu0 %v1987
        %v2062 = vpop.f32.mrf.mxu0
        %v2063 = vadd.f32 0.0, %v2062
        %v2064 = vpop.f32.mrf.mxu0
        %2065 = vmatprep.mubr.f32.mxu0 0.0
        %2066 = vmatmul.mubr.f32.gmra.mxu0 %v1989
        %v2067 = vpop.f32.mrf.mxu0
        %v2068 = vadd.f32 0.0, %v2067
        %v2069 = vpop.f32.mrf.mxu0
        %2070 = vmatprep.mubr.f32.mxu0 0.0
        %2071 = vmatmul.mubr.f32.gmra.mxu0 %v1991
        %v2072 = vpop.f32.mrf.mxu0
        %v2073 = vadd.f32 0.0, %v2072
        %v2074 = vpop.f32.mrf.mxu0
        %2075 = vdwg.mxu0
        %v2076 = vadd.f32 %v1971, %v2063
        %v2077 = vadd.f32 %v1972, %v2068
        %v2078 = vadd.f32 %v1973, %v2073
        %s2079 = scalar_lea.vmem %s3, 392
        %v2080 = vld [vmem:[%s2079] sm:$0xff]
        %v2081 = vld [vmem:[%s2079 + $0x8] sm:$0xff]
        %v2082 = vld [vmem:[%s2079 + $0x10] sm:$0xff]
        %v2083 = vld [vmem:[%s2079 + $0x18] sm:$0xff]
        %v2084 = vld [vmem:[%s2079 + $0x20] sm:$0xff]
        %v2085 = vld [vmem:[%s2079 + $0x28] sm:$0xff]
        %v2086 = vld [vmem:[%s2079 + $0x30] sm:$0x3]
        %v2088 = vrot.slane %v1335, 7
        %v2089 = vrot.slane %v1336, 7
        %v2090 = vsel %vm1230, %v2088, %v2089
        %v2091 = vrot.slane %v1337, 7
        %v2092 = vsel %vm1230, %v2089, %v2091
        %v2093 = vrot.slane %v1338, 7
        %v2094 = vsel %vm1230, %v2091, %v2093
        %v2095 = vsel %vm1353, %v2090, 0
        %v2097 = vsel %vm1353, %v2092, 0
        %v2099 = vsel %vm1353, %v2094, 0
        %v2102 = vsel %vm1112, %v2086, 0
        %2104 = vmatprep.subr.mxu0 0.0
        %2105 = vmatpush1.msra.mxu0 0.0
        %2106 = vmatprep.subr.mxu0 0.0
        %2107 = vmatpush1.msra.mxu0 0.0
        %2108 = vmatprep.subr.mxu0 0.0
        %2109 = vmatpush1.msra.mxu0 0.0
        %2110 = vmatprep.subr.mxu0 0.0
        %2111 = vmatpush1.msra.mxu0 0.0
        %2112 = vmatprep.subr.mxu0 0.0
        %2113 = vmatpush1.msra.mxu0 0.0
        %2114 = vmatprep.subr.mxu0 0.0
        %2115 = vmatpush1.msra.mxu0 0.0
        %2116 = vmatprep.subr.mxu0 0.0
        %2117 = vmatpush1.msra.mxu0 0.0
        %2118 = vmatprep.subr.mxu0 0.0
        %2119 = vmatpush1.msra.mxu0 0.0
        %2120 = vmatprep.subr.mxu0 0.0
        %2121 = vmatpush1.msra.mxu0 0.0
        %2122 = vmatprep.subr.mxu0 0.0
        %2123 = vmatpush1.msra.mxu0 %v2102
        %2124 = vmatprep.subr.mxu0 0.0
        %2125 = vmatpush1.msra.mxu0 %v2085
        %2126 = vmatprep.subr.mxu0 0.0
        %2127 = vmatpush1.msra.mxu0 %v2084
        %2128 = vmatprep.subr.mxu0 0.0
        %2129 = vmatpush1.msra.mxu0 %v2083
        %2130 = vmatprep.subr.mxu0 0.0
        %2131 = vmatpush1.msra.mxu0 %v2082
        %2132 = vmatprep.subr.mxu0 0.0
        %2133 = vmatpush1.msra.mxu0 %v2081
        %2134 = vmatprep.subr.mxu0 0.0
        %2135 = vmatpush1.msra.mxu0 %v2080
        %2136 = vmatprep.subr.mxu0 0.0
        %2137 = vmatpush2.msra.mxu0 0.0
        %2138 = vmatprep.subr.mxu0 0.0
        %2139 = vmatpush2.msra.mxu0 0.0
        %2140 = vmatprep.subr.mxu0 0.0
        %2141 = vmatpush2.msra.mxu0 0.0
        %2142 = vmatprep.subr.mxu0 0.0
        %2143 = vmatpush2.msra.mxu0 0.0
        %2144 = vmatprep.subr.mxu0 0.0
        %2145 = vmatpush2.msra.mxu0 0.0
        %2146 = vmatprep.subr.mxu0 0.0
        %2147 = vmatpush2.msra.mxu0 0.0
        %2148 = vmatprep.subr.mxu0 0.0
        %2149 = vmatpush2.msra.mxu0 0.0
        %2150 = vmatprep.subr.mxu0 0.0
        %2151 = vmatpush2.msra.mxu0 0.0
        %2152 = vmatprep.subr.mxu0 0.0
        %2153 = vmatpush2.msra.mxu0 0.0
        %2154 = vmatprep.subr.mxu0 0.0
        %2155 = vmatpush2.msra.mxu0 0.0
        %2156 = vmatprep.subr.mxu0 0.0
        %2157 = vmatpush2.msra.mxu0 0.0
        %2158 = vmatprep.subr.mxu0 0.0
        %2159 = vmatpush2.msra.mxu0 0.0
        %2160 = vmatprep.subr.mxu0 0.0
        %2161 = vmatpush2.msra.mxu0 0.0
        %2162 = vmatprep.subr.mxu0 0.0
        %2163 = vmatpush2.msra.mxu0 0.0
        %2164 = vmatprep.subr.mxu0 0.0
        %2165 = vmatpush2.msra.mxu0 0.0
        %2166 = vmatprep.subr.mxu0 0.0
        %2167 = vmatpush2.msra.mxu0 0.0
        %2168 = vmatprep.mubr.f32.mxu0 0.0
        %2169 = vmatmul.mubr.f32.gmra.mxu0 %v2095
        %v2170 = vpop.f32.mrf.mxu0
        %v2171 = vadd.f32 0.0, %v2170
        %v2172 = vpop.f32.mrf.mxu0
        %2173 = vmatprep.mubr.f32.mxu0 0.0
        %2174 = vmatmul.mubr.f32.gmra.mxu0 %v2097
        %v2175 = vpop.f32.mrf.mxu0
        %v2176 = vadd.f32 0.0, %v2175
        %v2177 = vpop.f32.mrf.mxu0
        %2178 = vmatprep.mubr.f32.mxu0 0.0
        %2179 = vmatmul.mubr.f32.gmra.mxu0 %v2099
        %v2180 = vpop.f32.mrf.mxu0
        %v2181 = vadd.f32 0.0, %v2180
        %v2182 = vpop.f32.mrf.mxu0
        %2183 = vdwg.mxu0
        %v2184 = vadd.f32 %v2076, %v2171
        %v2185 = vadd.f32 %v2077, %v2176
        %v2186 = vadd.f32 %v2078, %v2181
        %v2187 = vmax.f32 %v2184, 0.0
        %v2188 = vmax.f32 %v2185, 0.0
        %v2189 = vmax.f32 %v2186, 0.0
        %v2190 = vld [vmem:[%s6] sm:$0x1]
        %v2192 = vlaneseq
        %v2193 = vshrl.u32 %v2192, 7
        %v2194 = vsub.s32 0, %v2193
        %v2195 = vrot.slane %v2190, %v2194
        %v2197 = vld [vmem:[%s5] sm:$0xff]
        %v2198 = vld [vmem:[%s5 + $0x8] sm:$0xff]
        %v2199 = vld [vmem:[%s5 + $0x10] sm:$0xff]
        %v2200 = vld [vmem:[%s5 + $0x18] sm:$0xff]
        %v2201 = vld [vmem:[%s5 + $0x20] sm:$0xff]
        %v2202 = vld [vmem:[%s5 + $0x28] sm:$0xff]
        %v2203 = vld [vmem:[%s5 + $0x30] sm:$0xff]
        %v2204 = vld [vmem:[%s5 + $0x38] sm:$0xff]
        %v2205 = vld [vmem:[%s5 + $0x40] sm:$0xff]
        %vm2206 = vcmask 588800
        %v2208 = vsel %vm2206, %v2187, 0
        %v2211 = vsel %vm2206, %v2188, 0
        %2213 = vmatprep.subr.mxu0 0.0
        %2214 = vmatpush1.msra.mxu0 0.0
        %2215 = vmatprep.subr.mxu0 0.0
        %2216 = vmatpush1.msra.mxu0 0.0
        %2217 = vmatprep.subr.mxu0 0.0
        %2218 = vmatpush1.msra.mxu0 0.0
        %2219 = vmatprep.subr.mxu0 0.0
        %2220 = vmatpush1.msra.mxu0 0.0
        %2221 = vmatprep.subr.mxu0 0.0
        %2222 = vmatpush1.msra.mxu0 0.0
        %2223 = vmatprep.subr.mxu0 0.0
        %2224 = vmatpush1.msra.mxu0 0.0
        %2225 = vmatprep.subr.mxu0 0.0
        %2226 = vmatpush1.msra.mxu0 0.0
        %2227 = vmatprep.subr.mxu0 0.0
        %2228 = vmatpush1.msra.mxu0 %v2205
        %2229 = vmatprep.subr.mxu0 0.0
        %2230 = vmatpush1.msra.mxu0 %v2204
        %2231 = vmatprep.subr.mxu0 0.0
        %2232 = vmatpush1.msra.mxu0 %v2203
        %2233 = vmatprep.subr.mxu0 0.0
        %2234 = vmatpush1.msra.mxu0 %v2202
        %2235 = vmatprep.subr.mxu0 0.0
        %2236 = vmatpush1.msra.mxu0 %v2201
        %2237 = vmatprep.subr.mxu0 0.0
        %2238 = vmatpush1.msra.mxu0 %v2200
        %2239 = vmatprep.subr.mxu0 0.0
        %2240 = vmatpush1.msra.mxu0 %v2199
        %2241 = vmatprep.subr.mxu0 0.0
        %2242 = vmatpush1.msra.mxu0 %v2198
        %2243 = vmatprep.subr.mxu0 0.0
        %2244 = vmatpush1.msra.mxu0 %v2197
        %2245 = vmatprep.subr.mxu0 0.0
        %2246 = vmatpush2.msra.mxu0 0.0
        %2247 = vmatprep.subr.mxu0 0.0
        %2248 = vmatpush2.msra.mxu0 0.0
        %2249 = vmatprep.subr.mxu0 0.0
        %2250 = vmatpush2.msra.mxu0 0.0
        %2251 = vmatprep.subr.mxu0 0.0
        %2252 = vmatpush2.msra.mxu0 0.0
        %2253 = vmatprep.subr.mxu0 0.0
        %2254 = vmatpush2.msra.mxu0 0.0
        %2255 = vmatprep.subr.mxu0 0.0
        %2256 = vmatpush2.msra.mxu0 0.0
        %2257 = vmatprep.subr.mxu0 0.0
        %2258 = vmatpush2.msra.mxu0 0.0
        %2259 = vmatprep.subr.mxu0 0.0
        %2260 = vmatpush2.msra.mxu0 0.0
        %2261 = vmatprep.subr.mxu0 0.0
        %2262 = vmatpush2.msra.mxu0 0.0
        %2263 = vmatprep.subr.mxu0 0.0
        %2264 = vmatpush2.msra.mxu0 0.0
        %2265 = vmatprep.subr.mxu0 0.0
        %2266 = vmatpush2.msra.mxu0 0.0
        %2267 = vmatprep.subr.mxu0 0.0
        %2268 = vmatpush2.msra.mxu0 0.0
        %2269 = vmatprep.subr.mxu0 0.0
        %2270 = vmatpush2.msra.mxu0 0.0
        %2271 = vmatprep.subr.mxu0 0.0
        %2272 = vmatpush2.msra.mxu0 0.0
        %2273 = vmatprep.subr.mxu0 0.0
        %2274 = vmatpush2.msra.mxu0 0.0
        %2275 = vmatprep.subr.mxu0 0.0
        %2276 = vmatpush2.msra.mxu0 0.0
        %2277 = vmatprep.mubr.f32.mxu0 0.0
        %2278 = vmatmul.mubr.f32.gmra.mxu0 %v2208
        %v2279 = vpop.f32.mrf.mxu0
        %v2280 = vadd.f32 0.0, %v2279
        %v2281 = vpop.f32.mrf.mxu0
        %2282 = vmatprep.mubr.f32.mxu0 0.0
        %2283 = vmatmul.mubr.f32.gmra.mxu0 %v2211
        %v2284 = vpop.f32.mrf.mxu0
        %v2285 = vadd.f32 0.0, %v2284
        %v2286 = vpop.f32.mrf.mxu0
        %2287 = vdwg.mxu0
        %v2288 = vadd.f32 %v2195, %v2280
        %v2289 = vadd.f32 %v2195, %v2285
        %s2290 = scalar_lea.vmem %s5, 72
        %v2291 = vld [vmem:[%s2290] sm:$0xff]
        %v2292 = vld [vmem:[%s2290 + $0x8] sm:$0xff]
        %v2293 = vld [vmem:[%s2290 + $0x10] sm:$0xff]
        %v2294 = vld [vmem:[%s2290 + $0x18] sm:$0xff]
        %v2295 = vld [vmem:[%s2290 + $0x20] sm:$0xff]
        %v2296 = vld [vmem:[%s2290 + $0x28] sm:$0xff]
        %v2297 = vld [vmem:[%s2290 + $0x30] sm:$0xff]
        %v2298 = vld [vmem:[%s2290 + $0x38] sm:$0xff]
        %v2299 = vld [vmem:[%s2290 + $0x40] sm:$0xff]
        %v2300 = vrot.slane %v2187, 1
        %v2301 = vrot.slane %v2188, 1
        %v2302 = vsel %vm522, %v2300, %v2301
        %v2303 = vsel %vm2206, %v2302, 0
        %v2305 = vsel %vm2206, %v2301, 0
        %2307 = vmatprep.subr.mxu0 0.0
        %2308 = vmatpush1.msra.mxu0 0.0
        %2309 = vmatprep.subr.mxu0 0.0
        %2310 = vmatpush1.msra.mxu0 0.0
        %2311 = vmatprep.subr.mxu0 0.0
        %2312 = vmatpush1.msra.mxu0 0.0
        %2313 = vmatprep.subr.mxu0 0.0
        %2314 = vmatpush1.msra.mxu0 0.0
        %2315 = vmatprep.subr.mxu0 0.0
        %2316 = vmatpush1.msra.mxu0 0.0
        %2317 = vmatprep.subr.mxu0 0.0
        %2318 = vmatpush1.msra.mxu0 0.0
        %2319 = vmatprep.subr.mxu0 0.0
        %2320 = vmatpush1.msra.mxu0 0.0
        %2321 = vmatprep.subr.mxu0 0.0
        %2322 = vmatpush1.msra.mxu0 %v2299
        %2323 = vmatprep.subr.mxu0 0.0
        %2324 = vmatpush1.msra.mxu0 %v2298
        %2325 = vmatprep.subr.mxu0 0.0
        %2326 = vmatpush1.msra.mxu0 %v2297
        %2327 = vmatprep.subr.mxu0 0.0
        %2328 = vmatpush1.msra.mxu0 %v2296
        %2329 = vmatprep.subr.mxu0 0.0
        %2330 = vmatpush1.msra.mxu0 %v2295
        %2331 = vmatprep.subr.mxu0 0.0
        %2332 = vmatpush1.msra.mxu0 %v2294
        %2333 = vmatprep.subr.mxu0 0.0
        %2334 = vmatpush1.msra.mxu0 %v2293
        %2335 = vmatprep.subr.mxu0 0.0
        %2336 = vmatpush1.msra.mxu0 %v2292
        %2337 = vmatprep.subr.mxu0 0.0
        %2338 = vmatpush1.msra.mxu0 %v2291
        %2339 = vmatprep.subr.mxu0 0.0
        %2340 = vmatpush2.msra.mxu0 0.0
        %2341 = vmatprep.subr.mxu0 0.0
        %2342 = vmatpush2.msra.mxu0 0.0
        %2343 = vmatprep.subr.mxu0 0.0
        %2344 = vmatpush2.msra.mxu0 0.0
        %2345 = vmatprep.subr.mxu0 0.0
        %2346 = vmatpush2.msra.mxu0 0.0
        %2347 = vmatprep.subr.mxu0 0.0
        %2348 = vmatpush2.msra.mxu0 0.0
        %2349 = vmatprep.subr.mxu0 0.0
        %2350 = vmatpush2.msra.mxu0 0.0
        %2351 = vmatprep.subr.mxu0 0.0
        %2352 = vmatpush2.msra.mxu0 0.0
        %2353 = vmatprep.subr.mxu0 0.0
        %2354 = vmatpush2.msra.mxu0 0.0
        %2355 = vmatprep.subr.mxu0 0.0
        %2356 = vmatpush2.msra.mxu0 0.0
        %2357 = vmatprep.subr.mxu0 0.0
        %2358 = vmatpush2.msra.mxu0 0.0
        %2359 = vmatprep.subr.mxu0 0.0
        %2360 = vmatpush2.msra.mxu0 0.0
        %2361 = vmatprep.subr.mxu0 0.0
        %2362 = vmatpush2.msra.mxu0 0.0
        %2363 = vmatprep.subr.mxu0 0.0
        %2364 = vmatpush2.msra.mxu0 0.0
        %2365 = vmatprep.subr.mxu0 0.0
        %2366 = vmatpush2.msra.mxu0 0.0
        %2367 = vmatprep.subr.mxu0 0.0
        %2368 = vmatpush2.msra.mxu0 0.0
        %2369 = vmatprep.subr.mxu0 0.0
        %2370 = vmatpush2.msra.mxu0 0.0
        %2371 = vmatprep.mubr.f32.mxu0 0.0
        %2372 = vmatmul.mubr.f32.gmra.mxu0 %v2303
        %v2373 = vpop.f32.mrf.mxu0
        %v2374 = vadd.f32 0.0, %v2373
        %v2375 = vpop.f32.mrf.mxu0
        %2376 = vmatprep.mubr.f32.mxu0 0.0
        %2377 = vmatmul.mubr.f32.gmra.mxu0 %v2305
        %v2378 = vpop.f32.mrf.mxu0
        %v2379 = vadd.f32 0.0, %v2378
        %v2380 = vpop.f32.mrf.mxu0
        %2381 = vdwg.mxu0
        %v2382 = vadd.f32 %v2288, %v2374
        %v2383 = vadd.f32 %v2289, %v2379
        %s2384 = scalar_lea.vmem %s5, 144
        %v2385 = vld [vmem:[%s2384] sm:$0xff]
        %v2386 = vld [vmem:[%s2384 + $0x8] sm:$0xff]
        %v2387 = vld [vmem:[%s2384 + $0x10] sm:$0xff]
        %v2388 = vld [vmem:[%s2384 + $0x18] sm:$0xff]
        %v2389 = vld [vmem:[%s2384 + $0x20] sm:$0xff]
        %v2390 = vld [vmem:[%s2384 + $0x28] sm:$0xff]
        %v2391 = vld [vmem:[%s2384 + $0x30] sm:$0xff]
        %v2392 = vld [vmem:[%s2384 + $0x38] sm:$0xff]
        %v2393 = vld [vmem:[%s2384 + $0x40] sm:$0xff]
        %v2394 = vrot.slane %v2187, 2
        %v2395 = vrot.slane %v2188, 2
        %v2396 = vsel %vm640, %v2394, %v2395
        %v2397 = vsel %vm2206, %v2396, 0
        %v2399 = vsel %vm2206, %v2395, 0
        %2401 = vmatprep.subr.mxu0 0.0
        %2402 = vmatpush1.msra.mxu0 0.0
        %2403 = vmatprep.subr.mxu0 0.0
        %2404 = vmatpush1.msra.mxu0 0.0
        %2405 = vmatprep.subr.mxu0 0.0
        %2406 = vmatpush1.msra.mxu0 0.0
        %2407 = vmatprep.subr.mxu0 0.0
        %2408 = vmatpush1.msra.mxu0 0.0
        %2409 = vmatprep.subr.mxu0 0.0
        %2410 = vmatpush1.msra.mxu0 0.0
        %2411 = vmatprep.subr.mxu0 0.0
        %2412 = vmatpush1.msra.mxu0 0.0
        %2413 = vmatprep.subr.mxu0 0.0
        %2414 = vmatpush1.msra.mxu0 0.0
        %2415 = vmatprep.subr.mxu0 0.0
        %2416 = vmatpush1.msra.mxu0 %v2393
        %2417 = vmatprep.subr.mxu0 0.0
        %2418 = vmatpush1.msra.mxu0 %v2392
        %2419 = vmatprep.subr.mxu0 0.0
        %2420 = vmatpush1.msra.mxu0 %v2391
        %2421 = vmatprep.subr.mxu0 0.0
        %2422 = vmatpush1.msra.mxu0 %v2390
        %2423 = vmatprep.subr.mxu0 0.0
        %2424 = vmatpush1.msra.mxu0 %v2389
        %2425 = vmatprep.subr.mxu0 0.0
        %2426 = vmatpush1.msra.mxu0 %v2388
        %2427 = vmatprep.subr.mxu0 0.0
        %2428 = vmatpush1.msra.mxu0 %v2387
        %2429 = vmatprep.subr.mxu0 0.0
        %2430 = vmatpush1.msra.mxu0 %v2386
        %2431 = vmatprep.subr.mxu0 0.0
        %2432 = vmatpush1.msra.mxu0 %v2385
        %2433 = vmatprep.subr.mxu0 0.0
        %2434 = vmatpush2.msra.mxu0 0.0
        %2435 = vmatprep.subr.mxu0 0.0
        %2436 = vmatpush2.msra.mxu0 0.0
        %2437 = vmatprep.subr.mxu0 0.0
        %2438 = vmatpush2.msra.mxu0 0.0
        %2439 = vmatprep.subr.mxu0 0.0
        %2440 = vmatpush2.msra.mxu0 0.0
        %2441 = vmatprep.subr.mxu0 0.0
        %2442 = vmatpush2.msra.mxu0 0.0
        %2443 = vmatprep.subr.mxu0 0.0
        %2444 = vmatpush2.msra.mxu0 0.0
        %2445 = vmatprep.subr.mxu0 0.0
        %2446 = vmatpush2.msra.mxu0 0.0
        %2447 = vmatprep.subr.mxu0 0.0
        %2448 = vmatpush2.msra.mxu0 0.0
        %2449 = vmatprep.subr.mxu0 0.0
        %2450 = vmatpush2.msra.mxu0 0.0
        %2451 = vmatprep.subr.mxu0 0.0
        %2452 = vmatpush2.msra.mxu0 0.0
        %2453 = vmatprep.subr.mxu0 0.0
        %2454 = vmatpush2.msra.mxu0 0.0
        %2455 = vmatprep.subr.mxu0 0.0
        %2456 = vmatpush2.msra.mxu0 0.0
        %2457 = vmatprep.subr.mxu0 0.0
        %2458 = vmatpush2.msra.mxu0 0.0
        %2459 = vmatprep.subr.mxu0 0.0
        %2460 = vmatpush2.msra.mxu0 0.0
        %2461 = vmatprep.subr.mxu0 0.0
        %2462 = vmatpush2.msra.mxu0 0.0
        %2463 = vmatprep.subr.mxu0 0.0
        %2464 = vmatpush2.msra.mxu0 0.0
        %2465 = vmatprep.mubr.f32.mxu0 0.0
        %2466 = vmatmul.mubr.f32.gmra.mxu0 %v2397
        %v2467 = vpop.f32.mrf.mxu0
        %v2468 = vadd.f32 0.0, %v2467
        %v2469 = vpop.f32.mrf.mxu0
        %2470 = vmatprep.mubr.f32.mxu0 0.0
        %2471 = vmatmul.mubr.f32.gmra.mxu0 %v2399
        %v2472 = vpop.f32.mrf.mxu0
        %v2473 = vadd.f32 0.0, %v2472
        %v2474 = vpop.f32.mrf.mxu0
        %2475 = vdwg.mxu0
        %v2476 = vadd.f32 %v2382, %v2468
        %v2477 = vadd.f32 %v2383, %v2473
        %s2478 = scalar_lea.vmem %s5, 216
        %v2479 = vld [vmem:[%s2478] sm:$0xff]
        %v2480 = vld [vmem:[%s2478 + $0x8] sm:$0xff]
        %v2481 = vld [vmem:[%s2478 + $0x10] sm:$0xff]
        %v2482 = vld [vmem:[%s2478 + $0x18] sm:$0xff]
        %v2483 = vld [vmem:[%s2478 + $0x20] sm:$0xff]
        %v2484 = vld [vmem:[%s2478 + $0x28] sm:$0xff]
        %v2485 = vld [vmem:[%s2478 + $0x30] sm:$0xff]
        %v2486 = vld [vmem:[%s2478 + $0x38] sm:$0xff]
        %v2487 = vld [vmem:[%s2478 + $0x40] sm:$0xff]
        %v2488 = vrot.slane %v2187, 3
        %v2489 = vrot.slane %v2188, 3
        %v2490 = vsel %vm758, %v2488, %v2489
        %v2491 = vsel %vm2206, %v2490, 0
        %v2493 = vsel %vm2206, %v2489, 0
        %2495 = vmatprep.subr.mxu0 0.0
        %2496 = vmatpush1.msra.mxu0 0.0
        %2497 = vmatprep.subr.mxu0 0.0
        %2498 = vmatpush1.msra.mxu0 0.0
        %2499 = vmatprep.subr.mxu0 0.0
        %2500 = vmatpush1.msra.mxu0 0.0
        %2501 = vmatprep.subr.mxu0 0.0
        %2502 = vmatpush1.msra.mxu0 0.0
        %2503 = vmatprep.subr.mxu0 0.0
        %2504 = vmatpush1.msra.mxu0 0.0
        %2505 = vmatprep.subr.mxu0 0.0
        %2506 = vmatpush1.msra.mxu0 0.0
        %2507 = vmatprep.subr.mxu0 0.0
        %2508 = vmatpush1.msra.mxu0 0.0
        %2509 = vmatprep.subr.mxu0 0.0
        %2510 = vmatpush1.msra.mxu0 %v2487
        %2511 = vmatprep.subr.mxu0 0.0
        %2512 = vmatpush1.msra.mxu0 %v2486
        %2513 = vmatprep.subr.mxu0 0.0
        %2514 = vmatpush1.msra.mxu0 %v2485
        %2515 = vmatprep.subr.mxu0 0.0
        %2516 = vmatpush1.msra.mxu0 %v2484
        %2517 = vmatprep.subr.mxu0 0.0
        %2518 = vmatpush1.msra.mxu0 %v2483
        %2519 = vmatprep.subr.mxu0 0.0
        %2520 = vmatpush1.msra.mxu0 %v2482
        %2521 = vmatprep.subr.mxu0 0.0
        %2522 = vmatpush1.msra.mxu0 %v2481
        %2523 = vmatprep.subr.mxu0 0.0
        %2524 = vmatpush1.msra.mxu0 %v2480
        %2525 = vmatprep.subr.mxu0 0.0
        %2526 = vmatpush1.msra.mxu0 %v2479
        %2527 = vmatprep.subr.mxu0 0.0
        %2528 = vmatpush2.msra.mxu0 0.0
        %2529 = vmatprep.subr.mxu0 0.0
        %2530 = vmatpush2.msra.mxu0 0.0
        %2531 = vmatprep.subr.mxu0 0.0
        %2532 = vmatpush2.msra.mxu0 0.0
        %2533 = vmatprep.subr.mxu0 0.0
        %2534 = vmatpush2.msra.mxu0 0.0
        %2535 = vmatprep.subr.mxu0 0.0
        %2536 = vmatpush2.msra.mxu0 0.0
        %2537 = vmatprep.subr.mxu0 0.0
        %2538 = vmatpush2.msra.mxu0 0.0
        %2539 = vmatprep.subr.mxu0 0.0
        %2540 = vmatpush2.msra.mxu0 0.0
        %2541 = vmatprep.subr.mxu0 0.0
        %2542 = vmatpush2.msra.mxu0 0.0
        %2543 = vmatprep.subr.mxu0 0.0
        %2544 = vmatpush2.msra.mxu0 0.0
        %2545 = vmatprep.subr.mxu0 0.0
        %2546 = vmatpush2.msra.mxu0 0.0
        %2547 = vmatprep.subr.mxu0 0.0
        %2548 = vmatpush2.msra.mxu0 0.0
        %2549 = vmatprep.subr.mxu0 0.0
        %2550 = vmatpush2.msra.mxu0 0.0
        %2551 = vmatprep.subr.mxu0 0.0
        %2552 = vmatpush2.msra.mxu0 0.0
        %2553 = vmatprep.subr.mxu0 0.0
        %2554 = vmatpush2.msra.mxu0 0.0
        %2555 = vmatprep.subr.mxu0 0.0
        %2556 = vmatpush2.msra.mxu0 0.0
        %2557 = vmatprep.subr.mxu0 0.0
        %2558 = vmatpush2.msra.mxu0 0.0
        %2559 = vmatprep.mubr.f32.mxu0 0.0
        %2560 = vmatmul.mubr.f32.gmra.mxu0 %v2491
        %v2561 = vpop.f32.mrf.mxu0
        %v2562 = vadd.f32 0.0, %v2561
        %v2563 = vpop.f32.mrf.mxu0
        %2564 = vmatprep.mubr.f32.mxu0 0.0
        %2565 = vmatmul.mubr.f32.gmra.mxu0 %v2493
        %v2566 = vpop.f32.mrf.mxu0
        %v2567 = vadd.f32 0.0, %v2566
        %v2568 = vpop.f32.mrf.mxu0
        %2569 = vdwg.mxu0
        %v2570 = vadd.f32 %v2476, %v2562
        %v2571 = vadd.f32 %v2477, %v2567
        %s2572 = scalar_lea.vmem %s5, 288
        %v2573 = vld [vmem:[%s2572] sm:$0xff]
        %v2574 = vld [vmem:[%s2572 + $0x8] sm:$0xff]
        %v2575 = vld [vmem:[%s2572 + $0x10] sm:$0xff]
        %v2576 = vld [vmem:[%s2572 + $0x18] sm:$0xff]
        %v2577 = vld [vmem:[%s2572 + $0x20] sm:$0xff]
        %v2578 = vld [vmem:[%s2572 + $0x28] sm:$0xff]
        %v2579 = vld [vmem:[%s2572 + $0x30] sm:$0xff]
        %v2580 = vld [vmem:[%s2572 + $0x38] sm:$0xff]
        %v2581 = vld [vmem:[%s2572 + $0x40] sm:$0xff]
        %v2582 = vrot.slane %v2187, 4
        %v2583 = vrot.slane %v2188, 4
        %v2584 = vsel %vm876, %v2582, %v2583
        %v2585 = vsel %vm2206, %v2584, 0
        %v2587 = vsel %vm2206, %v2583, 0
        %2589 = vmatprep.subr.mxu0 0.0
        %2590 = vmatpush1.msra.mxu0 0.0
        %2591 = vmatprep.subr.mxu0 0.0
        %2592 = vmatpush1.msra.mxu0 0.0
        %2593 = vmatprep.subr.mxu0 0.0
        %2594 = vmatpush1.msra.mxu0 0.0
        %2595 = vmatprep.subr.mxu0 0.0
        %2596 = vmatpush1.msra.mxu0 0.0
        %2597 = vmatprep.subr.mxu0 0.0
        %2598 = vmatpush1.msra.mxu0 0.0
        %2599 = vmatprep.subr.mxu0 0.0
        %2600 = vmatpush1.msra.mxu0 0.0
        %2601 = vmatprep.subr.mxu0 0.0
        %2602 = vmatpush1.msra.mxu0 0.0
        %2603 = vmatprep.subr.mxu0 0.0
        %2604 = vmatpush1.msra.mxu0 %v2581
        %2605 = vmatprep.subr.mxu0 0.0
        %2606 = vmatpush1.msra.mxu0 %v2580
        %2607 = vmatprep.subr.mxu0 0.0
        %2608 = vmatpush1.msra.mxu0 %v2579
        %2609 = vmatprep.subr.mxu0 0.0
        %2610 = vmatpush1.msra.mxu0 %v2578
        %2611 = vmatprep.subr.mxu0 0.0
        %2612 = vmatpush1.msra.mxu0 %v2577
        %2613 = vmatprep.subr.mxu0 0.0
        %2614 = vmatpush1.msra.mxu0 %v2576
        %2615 = vmatprep.subr.mxu0 0.0
        %2616 = vmatpush1.msra.mxu0 %v2575
        %2617 = vmatprep.subr.mxu0 0.0
        %2618 = vmatpush1.msra.mxu0 %v2574
        %2619 = vmatprep.subr.mxu0 0.0
        %2620 = vmatpush1.msra.mxu0 %v2573
        %2621 = vmatprep.subr.mxu0 0.0
        %2622 = vmatpush2.msra.mxu0 0.0
        %2623 = vmatprep.subr.mxu0 0.0
        %2624 = vmatpush2.msra.mxu0 0.0
        %2625 = vmatprep.subr.mxu0 0.0
        %2626 = vmatpush2.msra.mxu0 0.0
        %2627 = vmatprep.subr.mxu0 0.0
        %2628 = vmatpush2.msra.mxu0 0.0
        %2629 = vmatprep.subr.mxu0 0.0
        %2630 = vmatpush2.msra.mxu0 0.0
        %2631 = vmatprep.subr.mxu0 0.0
        %2632 = vmatpush2.msra.mxu0 0.0
        %2633 = vmatprep.subr.mxu0 0.0
        %2634 = vmatpush2.msra.mxu0 0.0
        %2635 = vmatprep.subr.mxu0 0.0
        %2636 = vmatpush2.msra.mxu0 0.0
        %2637 = vmatprep.subr.mxu0 0.0
        %2638 = vmatpush2.msra.mxu0 0.0
        %2639 = vmatprep.subr.mxu0 0.0
        %2640 = vmatpush2.msra.mxu0 0.0
        %2641 = vmatprep.subr.mxu0 0.0
        %2642 = vmatpush2.msra.mxu0 0.0
        %2643 = vmatprep.subr.mxu0 0.0
        %2644 = vmatpush2.msra.mxu0 0.0
        %2645 = vmatprep.subr.mxu0 0.0
        %2646 = vmatpush2.msra.mxu0 0.0
        %2647 = vmatprep.subr.mxu0 0.0
        %2648 = vmatpush2.msra.mxu0 0.0
        %2649 = vmatprep.subr.mxu0 0.0
        %2650 = vmatpush2.msra.mxu0 0.0
        %2651 = vmatprep.subr.mxu0 0.0
        %2652 = vmatpush2.msra.mxu0 0.0
        %2653 = vmatprep.mubr.f32.mxu0 0.0
        %2654 = vmatmul.mubr.f32.gmra.mxu0 %v2585
        %v2655 = vpop.f32.mrf.mxu0
        %v2656 = vadd.f32 0.0, %v2655
        %v2657 = vpop.f32.mrf.mxu0
        %2658 = vmatprep.mubr.f32.mxu0 0.0
        %2659 = vmatmul.mubr.f32.gmra.mxu0 %v2587
        %v2660 = vpop.f32.mrf.mxu0
        %v2661 = vadd.f32 0.0, %v2660
        %v2662 = vpop.f32.mrf.mxu0
        %2663 = vdwg.mxu0
        %v2664 = vadd.f32 %v2570, %v2656
        %v2665 = vadd.f32 %v2571, %v2661
        %s2666 = scalar_lea.vmem %s5, 360
        %v2667 = vld [vmem:[%s2666] sm:$0xff]
        %v2668 = vld [vmem:[%s2666 + $0x8] sm:$0xff]
        %v2669 = vld [vmem:[%s2666 + $0x10] sm:$0xff]
        %v2670 = vld [vmem:[%s2666 + $0x18] sm:$0xff]
        %v2671 = vld [vmem:[%s2666 + $0x20] sm:$0xff]
        %v2672 = vld [vmem:[%s2666 + $0x28] sm:$0xff]
        %v2673 = vld [vmem:[%s2666 + $0x30] sm:$0xff]
        %v2674 = vld [vmem:[%s2666 + $0x38] sm:$0xff]
        %v2675 = vld [vmem:[%s2666 + $0x40] sm:$0xff]
        %v2676 = vrot.slane %v2187, 5
        %v2677 = vrot.slane %v2188, 5
        %v2678 = vsel %vm994, %v2676, %v2677
        %v2679 = vsel %vm2206, %v2678, 0
        %v2681 = vsel %vm2206, %v2677, 0
        %2683 = vmatprep.subr.mxu0 0.0
        %2684 = vmatpush1.msra.mxu0 0.0
        %2685 = vmatprep.subr.mxu0 0.0
        %2686 = vmatpush1.msra.mxu0 0.0
        %2687 = vmatprep.subr.mxu0 0.0
        %2688 = vmatpush1.msra.mxu0 0.0
        %2689 = vmatprep.subr.mxu0 0.0
        %2690 = vmatpush1.msra.mxu0 0.0
        %2691 = vmatprep.subr.mxu0 0.0
        %2692 = vmatpush1.msra.mxu0 0.0
        %2693 = vmatprep.subr.mxu0 0.0
        %2694 = vmatpush1.msra.mxu0 0.0
        %2695 = vmatprep.subr.mxu0 0.0
        %2696 = vmatpush1.msra.mxu0 0.0
        %2697 = vmatprep.subr.mxu0 0.0
        %2698 = vmatpush1.msra.mxu0 %v2675
        %2699 = vmatprep.subr.mxu0 0.0
        %2700 = vmatpush1.msra.mxu0 %v2674
        %2701 = vmatprep.subr.mxu0 0.0
        %2702 = vmatpush1.msra.mxu0 %v2673
        %2703 = vmatprep.subr.mxu0 0.0
        %2704 = vmatpush1.msra.mxu0 %v2672
        %2705 = vmatprep.subr.mxu0 0.0
        %2706 = vmatpush1.msra.mxu0 %v2671
        %2707 = vmatprep.subr.mxu0 0.0
        %2708 = vmatpush1.msra.mxu0 %v2670
        %2709 = vmatprep.subr.mxu0 0.0
        %2710 = vmatpush1.msra.mxu0 %v2669
        %2711 = vmatprep.subr.mxu0 0.0
        %2712 = vmatpush1.msra.mxu0 %v2668
        %2713 = vmatprep.subr.mxu0 0.0
        %2714 = vmatpush1.msra.mxu0 %v2667
        %2715 = vmatprep.subr.mxu0 0.0
        %2716 = vmatpush2.msra.mxu0 0.0
        %2717 = vmatprep.subr.mxu0 0.0
        %2718 = vmatpush2.msra.mxu0 0.0
        %2719 = vmatprep.subr.mxu0 0.0
        %2720 = vmatpush2.msra.mxu0 0.0
        %2721 = vmatprep.subr.mxu0 0.0
        %2722 = vmatpush2.msra.mxu0 0.0
        %2723 = vmatprep.subr.mxu0 0.0
        %2724 = vmatpush2.msra.mxu0 0.0
        %2725 = vmatprep.subr.mxu0 0.0
        %2726 = vmatpush2.msra.mxu0 0.0
        %2727 = vmatprep.subr.mxu0 0.0
        %2728 = vmatpush2.msra.mxu0 0.0
        %2729 = vmatprep.subr.mxu0 0.0
        %2730 = vmatpush2.msra.mxu0 0.0
        %2731 = vmatprep.subr.mxu0 0.0
        %2732 = vmatpush2.msra.mxu0 0.0
        %2733 = vmatprep.subr.mxu0 0.0
        %2734 = vmatpush2.msra.mxu0 0.0
        %2735 = vmatprep.subr.mxu0 0.0
        %2736 = vmatpush2.msra.mxu0 0.0
        %2737 = vmatprep.subr.mxu0 0.0
        %2738 = vmatpush2.msra.mxu0 0.0
        %2739 = vmatprep.subr.mxu0 0.0
        %2740 = vmatpush2.msra.mxu0 0.0
        %2741 = vmatprep.subr.mxu0 0.0
        %2742 = vmatpush2.msra.mxu0 0.0
        %2743 = vmatprep.subr.mxu0 0.0
        %2744 = vmatpush2.msra.mxu0 0.0
        %2745 = vmatprep.subr.mxu0 0.0
        %2746 = vmatpush2.msra.mxu0 0.0
        %2747 = vmatprep.mubr.f32.mxu0 0.0
        %2748 = vmatmul.mubr.f32.gmra.mxu0 %v2679
        %v2749 = vpop.f32.mrf.mxu0
        %v2750 = vadd.f32 0.0, %v2749
        %v2751 = vpop.f32.mrf.mxu0
        %2752 = vmatprep.mubr.f32.mxu0 0.0
        %2753 = vmatmul.mubr.f32.gmra.mxu0 %v2681
        %v2754 = vpop.f32.mrf.mxu0
        %v2755 = vadd.f32 0.0, %v2754
        %v2756 = vpop.f32.mrf.mxu0
        %2757 = vdwg.mxu0
        %v2758 = vadd.f32 %v2664, %v2750
        %v2759 = vadd.f32 %v2665, %v2755
        %s2760 = scalar_lea.vmem %s5, 432
        %v2761 = vld [vmem:[%s2760] sm:$0xff]
        %v2762 = vld [vmem:[%s2760 + $0x8] sm:$0xff]
        %v2763 = vld [vmem:[%s2760 + $0x10] sm:$0xff]
        %v2764 = vld [vmem:[%s2760 + $0x18] sm:$0xff]
        %v2765 = vld [vmem:[%s2760 + $0x20] sm:$0xff]
        %v2766 = vld [vmem:[%s2760 + $0x28] sm:$0xff]
        %v2767 = vld [vmem:[%s2760 + $0x30] sm:$0xff]
        %v2768 = vld [vmem:[%s2760 + $0x38] sm:$0xff]
        %v2769 = vld [vmem:[%s2760 + $0x40] sm:$0xff]
        %v2771 = vrot.slane %v2187, 6
        %v2772 = vrot.slane %v2188, 6
        %v2773 = vsel %vm1112, %v2771, %v2772
        %v2774 = vrot.slane %v2189, 6
        %v2775 = vsel %vm1112, %v2772, %v2774
        %v2776 = vsel %vm2206, %v2773, 0
        %v2778 = vsel %vm2206, %v2775, 0
        %2780 = vmatprep.subr.mxu0 0.0
        %2781 = vmatpush1.msra.mxu0 0.0
        %2782 = vmatprep.subr.mxu0 0.0
        %2783 = vmatpush1.msra.mxu0 0.0
        %2784 = vmatprep.subr.mxu0 0.0
        %2785 = vmatpush1.msra.mxu0 0.0
        %2786 = vmatprep.subr.mxu0 0.0
        %2787 = vmatpush1.msra.mxu0 0.0
        %2788 = vmatprep.subr.mxu0 0.0
        %2789 = vmatpush1.msra.mxu0 0.0
        %2790 = vmatprep.subr.mxu0 0.0
        %2791 = vmatpush1.msra.mxu0 0.0
        %2792 = vmatprep.subr.mxu0 0.0
        %2793 = vmatpush1.msra.mxu0 0.0
        %2794 = vmatprep.subr.mxu0 0.0
        %2795 = vmatpush1.msra.mxu0 %v2769
        %2796 = vmatprep.subr.mxu0 0.0
        %2797 = vmatpush1.msra.mxu0 %v2768
        %2798 = vmatprep.subr.mxu0 0.0
        %2799 = vmatpush1.msra.mxu0 %v2767
        %2800 = vmatprep.subr.mxu0 0.0
        %2801 = vmatpush1.msra.mxu0 %v2766
        %2802 = vmatprep.subr.mxu0 0.0
        %2803 = vmatpush1.msra.mxu0 %v2765
        %2804 = vmatprep.subr.mxu0 0.0
        %2805 = vmatpush1.msra.mxu0 %v2764
        %2806 = vmatprep.subr.mxu0 0.0
        %2807 = vmatpush1.msra.mxu0 %v2763
        %2808 = vmatprep.subr.mxu0 0.0
        %2809 = vmatpush1.msra.mxu0 %v2762
        %2810 = vmatprep.subr.mxu0 0.0
        %2811 = vmatpush1.msra.mxu0 %v2761
        %2812 = vmatprep.subr.mxu0 0.0
        %2813 = vmatpush2.msra.mxu0 0.0
        %2814 = vmatprep.subr.mxu0 0.0
        %2815 = vmatpush2.msra.mxu0 0.0
        %2816 = vmatprep.subr.mxu0 0.0
        %2817 = vmatpush2.msra.mxu0 0.0
        %2818 = vmatprep.subr.mxu0 0.0
        %2819 = vmatpush2.msra.mxu0 0.0
        %2820 = vmatprep.subr.mxu0 0.0
        %2821 = vmatpush2.msra.mxu0 0.0
        %2822 = vmatprep.subr.mxu0 0.0
        %2823 = vmatpush2.msra.mxu0 0.0
        %2824 = vmatprep.subr.mxu0 0.0
        %2825 = vmatpush2.msra.mxu0 0.0
        %2826 = vmatprep.subr.mxu0 0.0
        %2827 = vmatpush2.msra.mxu0 0.0
        %2828 = vmatprep.subr.mxu0 0.0
        %2829 = vmatpush2.msra.mxu0 0.0
        %2830 = vmatprep.subr.mxu0 0.0
        %2831 = vmatpush2.msra.mxu0 0.0
        %2832 = vmatprep.subr.mxu0 0.0
        %2833 = vmatpush2.msra.mxu0 0.0
        %2834 = vmatprep.subr.mxu0 0.0
        %2835 = vmatpush2.msra.mxu0 0.0
        %2836 = vmatprep.subr.mxu0 0.0
        %2837 = vmatpush2.msra.mxu0 0.0
        %2838 = vmatprep.subr.mxu0 0.0
        %2839 = vmatpush2.msra.mxu0 0.0
        %2840 = vmatprep.subr.mxu0 0.0
        %2841 = vmatpush2.msra.mxu0 0.0
        %2842 = vmatprep.subr.mxu0 0.0
        %2843 = vmatpush2.msra.mxu0 0.0
        %2844 = vmatprep.mubr.f32.mxu0 0.0
        %2845 = vmatmul.mubr.f32.gmra.mxu0 %v2776
        %v2846 = vpop.f32.mrf.mxu0
        %v2847 = vadd.f32 0.0, %v2846
        %v2848 = vpop.f32.mrf.mxu0
        %2849 = vmatprep.mubr.f32.mxu0 0.0
        %2850 = vmatmul.mubr.f32.gmra.mxu0 %v2778
        %v2851 = vpop.f32.mrf.mxu0
        %v2852 = vadd.f32 0.0, %v2851
        %v2853 = vpop.f32.mrf.mxu0
        %2854 = vdwg.mxu0
        %v2855 = vadd.f32 %v2758, %v2847
        %v2856 = vadd.f32 %v2759, %v2852
        %s2857 = scalar_lea.vmem %s5, 504
        %v2858 = vld [vmem:[%s2857] sm:$0xff]
        %v2859 = vld [vmem:[%s2857 + $0x8] sm:$0xff]
        %v2860 = vld [vmem:[%s2857 + $0x10] sm:$0xff]
        %v2861 = vld [vmem:[%s2857 + $0x18] sm:$0xff]
        %v2862 = vld [vmem:[%s2857 + $0x20] sm:$0xff]
        %v2863 = vld [vmem:[%s2857 + $0x28] sm:$0xff]
        %v2864 = vld [vmem:[%s2857 + $0x30] sm:$0xff]
        %v2865 = vld [vmem:[%s2857 + $0x38] sm:$0xff]
        %v2866 = vld [vmem:[%s2857 + $0x40] sm:$0xff]
        %v2867 = vrot.slane %v2187, 7
        %v2868 = vrot.slane %v2188, 7
        %v2869 = vsel %vm1230, %v2867, %v2868
        %v2870 = vrot.slane %v2189, 7
        %v2871 = vsel %vm1230, %v2868, %v2870
        %v2872 = vsel %vm2206, %v2869, 0
        %v2874 = vsel %vm2206, %v2871, 0
        %2876 = vmatprep.subr.mxu0 0.0
        %2877 = vmatpush1.msra.mxu0 0.0
        %2878 = vmatprep.subr.mxu0 0.0
        %2879 = vmatpush1.msra.mxu0 0.0
        %2880 = vmatprep.subr.mxu0 0.0
        %2881 = vmatpush1.msra.mxu0 0.0
        %2882 = vmatprep.subr.mxu0 0.0
        %2883 = vmatpush1.msra.mxu0 0.0
        %2884 = vmatprep.subr.mxu0 0.0
        %2885 = vmatpush1.msra.mxu0 0.0
        %2886 = vmatprep.subr.mxu0 0.0
        %2887 = vmatpush1.msra.mxu0 0.0
        %2888 = vmatprep.subr.mxu0 0.0
        %2889 = vmatpush1.msra.mxu0 0.0
        %2890 = vmatprep.subr.mxu0 0.0
        %2891 = vmatpush1.msra.mxu0 %v2866
        %2892 = vmatprep.subr.mxu0 0.0
        %2893 = vmatpush1.msra.mxu0 %v2865
        %2894 = vmatprep.subr.mxu0 0.0
        %2895 = vmatpush1.msra.mxu0 %v2864
        %2896 = vmatprep.subr.mxu0 0.0
        %2897 = vmatpush1.msra.mxu0 %v2863
        %2898 = vmatprep.subr.mxu0 0.0
        %2899 = vmatpush1.msra.mxu0 %v2862
        %2900 = vmatprep.subr.mxu0 0.0
        %2901 = vmatpush1.msra.mxu0 %v2861
        %2902 = vmatprep.subr.mxu0 0.0
        %2903 = vmatpush1.msra.mxu0 %v2860
        %2904 = vmatprep.subr.mxu0 0.0
        %2905 = vmatpush1.msra.mxu0 %v2859
        %2906 = vmatprep.subr.mxu0 0.0
        %2907 = vmatpush1.msra.mxu0 %v2858
        %2908 = vmatprep.subr.mxu0 0.0
        %2909 = vmatpush2.msra.mxu0 0.0
        %2910 = vmatprep.subr.mxu0 0.0
        %2911 = vmatpush2.msra.mxu0 0.0
        %2912 = vmatprep.subr.mxu0 0.0
        %2913 = vmatpush2.msra.mxu0 0.0
        %2914 = vmatprep.subr.mxu0 0.0
        %2915 = vmatpush2.msra.mxu0 0.0
        %2916 = vmatprep.subr.mxu0 0.0
        %2917 = vmatpush2.msra.mxu0 0.0
        %2918 = vmatprep.subr.mxu0 0.0
        %2919 = vmatpush2.msra.mxu0 0.0
        %2920 = vmatprep.subr.mxu0 0.0
        %2921 = vmatpush2.msra.mxu0 0.0
        %2922 = vmatprep.subr.mxu0 0.0
        %2923 = vmatpush2.msra.mxu0 0.0
        %2924 = vmatprep.subr.mxu0 0.0
        %2925 = vmatpush2.msra.mxu0 0.0
        %2926 = vmatprep.subr.mxu0 0.0
        %2927 = vmatpush2.msra.mxu0 0.0
        %2928 = vmatprep.subr.mxu0 0.0
        %2929 = vmatpush2.msra.mxu0 0.0
        %2930 = vmatprep.subr.mxu0 0.0
        %2931 = vmatpush2.msra.mxu0 0.0
        %2932 = vmatprep.subr.mxu0 0.0
        %2933 = vmatpush2.msra.mxu0 0.0
        %2934 = vmatprep.subr.mxu0 0.0
        %2935 = vmatpush2.msra.mxu0 0.0
        %2936 = vmatprep.subr.mxu0 0.0
        %2937 = vmatpush2.msra.mxu0 0.0
        %2938 = vmatprep.subr.mxu0 0.0
        %2939 = vmatpush2.msra.mxu0 0.0
        %2940 = vmatprep.mubr.f32.mxu0 0.0
        %2941 = vmatmul.mubr.f32.gmra.mxu0 %v2872
        %v2942 = vpop.f32.mrf.mxu0
        %v2943 = vadd.f32 0.0, %v2942
        %v2944 = vpop.f32.mrf.mxu0
        %2945 = vmatprep.mubr.f32.mxu0 0.0
        %2946 = vmatmul.mubr.f32.gmra.mxu0 %v2874
        %v2947 = vpop.f32.mrf.mxu0
        %v2948 = vadd.f32 0.0, %v2947
        %v2949 = vpop.f32.mrf.mxu0
        %2950 = vdwg.mxu0
        %v2951 = vadd.f32 %v2855, %v2943
        %v2952 = vadd.f32 %v2856, %v2948
        %v2953 = vmax.f32 %v2951, 0.0
        %v2954 = vmax.f32 %v2952, 0.0
        %v2955 = vld [vmem:[%s8] sm:$0x1]
        %v2957 = vlaneseq
        %v2958 = vshrl.u32 %v2957, 7
        %v2959 = vsub.s32 0, %v2958
        %v2960 = vrot.slane %v2955, %v2959
        %v2962 = vld [vmem:[%s7] sm:$0xff]
        %v2963 = vld [vmem:[%s7 + $0x8] sm:$0xff]
        %v2964 = vld [vmem:[%s7 + $0x10] sm:$0xff]
        %v2965 = vld [vmem:[%s7 + $0x18] sm:$0xff]
        %v2966 = vld [vmem:[%s7 + $0x20] sm:$0xff]
        %v2967 = vld [vmem:[%s7 + $0x28] sm:$0xff]
        %v2968 = vld [vmem:[%s7 + $0x30] sm:$0xff]
        %v2969 = vld [vmem:[%s7 + $0x38] sm:$0xff]
        %v2970 = vld [vmem:[%s7 + $0x40] sm:$0xff]
        %v2971 = vld [vmem:[%s7 + $0x48] sm:$0xff]
        %v2972 = vld [vmem:[%s7 + $0x50] sm:$0xff]
        %vm2973 = vcmask 719872
        %v2975 = vsel %vm2973, %v2953, 0
        %2977 = vmatprep.subr.mxu0 0.0
        %2978 = vmatpush1.msra.mxu0 0.0
        %2979 = vmatprep.subr.mxu0 0.0
        %2980 = vmatpush1.msra.mxu0 0.0
        %2981 = vmatprep.subr.mxu0 0.0
        %2982 = vmatpush1.msra.mxu0 0.0
        %2983 = vmatprep.subr.mxu0 0.0
        %2984 = vmatpush1.msra.mxu0 0.0
        %2985 = vmatprep.subr.mxu0 0.0
        %2986 = vmatpush1.msra.mxu0 0.0
        %2987 = vmatprep.subr.mxu0 0.0
        %2988 = vmatpush1.msra.mxu0 %v2972
        %2989 = vmatprep.subr.mxu0 0.0
        %2990 = vmatpush1.msra.mxu0 %v2971
        %2991 = vmatprep.subr.mxu0 0.0
        %2992 = vmatpush1.msra.mxu0 %v2970
        %2993 = vmatprep.subr.mxu0 0.0
        %2994 = vmatpush1.msra.mxu0 %v2969
        %2995 = vmatprep.subr.mxu0 0.0
        %2996 = vmatpush1.msra.mxu0 %v2968
        %2997 = vmatprep.subr.mxu0 0.0
        %2998 = vmatpush1.msra.mxu0 %v2967
        %2999 = vmatprep.subr.mxu0 0.0
        %3000 = vmatpush1.msra.mxu0 %v2966
        %3001 = vmatprep.subr.mxu0 0.0
        %3002 = vmatpush1.msra.mxu0 %v2965
        %3003 = vmatprep.subr.mxu0 0.0
        %3004 = vmatpush1.msra.mxu0 %v2964
        %3005 = vmatprep.subr.mxu0 0.0
        %3006 = vmatpush1.msra.mxu0 %v2963
        %3007 = vmatprep.subr.mxu0 0.0
        %3008 = vmatpush1.msra.mxu0 %v2962
        %3009 = vmatprep.subr.mxu0 0.0
        %3010 = vmatpush2.msra.mxu0 0.0
        %3011 = vmatprep.subr.mxu0 0.0
        %3012 = vmatpush2.msra.mxu0 0.0
        %3013 = vmatprep.subr.mxu0 0.0
        %3014 = vmatpush2.msra.mxu0 0.0
        %3015 = vmatprep.subr.mxu0 0.0
        %3016 = vmatpush2.msra.mxu0 0.0
        %3017 = vmatprep.subr.mxu0 0.0
        %3018 = vmatpush2.msra.mxu0 0.0
        %3019 = vmatprep.subr.mxu0 0.0
        %3020 = vmatpush2.msra.mxu0 0.0
        %3021 = vmatprep.subr.mxu0 0.0
        %3022 = vmatpush2.msra.mxu0 0.0
        %3023 = vmatprep.subr.mxu0 0.0
        %3024 = vmatpush2.msra.mxu0 0.0
        %3025 = vmatprep.subr.mxu0 0.0
        %3026 = vmatpush2.msra.mxu0 0.0
        %3027 = vmatprep.subr.mxu0 0.0
        %3028 = vmatpush2.msra.mxu0 0.0
        %3029 = vmatprep.subr.mxu0 0.0
        %3030 = vmatpush2.msra.mxu0 0.0
        %3031 = vmatprep.subr.mxu0 0.0
        %3032 = vmatpush2.msra.mxu0 0.0
        %3033 = vmatprep.subr.mxu0 0.0
        %3034 = vmatpush2.msra.mxu0 0.0
        %3035 = vmatprep.subr.mxu0 0.0
        %3036 = vmatpush2.msra.mxu0 0.0
        %3037 = vmatprep.subr.mxu0 0.0
        %3038 = vmatpush2.msra.mxu0 0.0
        %3039 = vmatprep.subr.mxu0 0.0
        %3040 = vmatpush2.msra.mxu0 0.0
        %3041 = vmatprep.mubr.f32.mxu0 0.0
        %3042 = vmatmul.mubr.f32.gmra.mxu0 %v2975
        %v3043 = vpop.f32.mrf.mxu0
        %v3044 = vadd.f32 0.0, %v3043
        %v3045 = vpop.f32.mrf.mxu0
        %3046 = vdwg.mxu0
        %v3047 = vadd.f32 %v2960, %v3044
        %s3048 = scalar_lea.vmem %s7, 88
        %v3049 = vld [vmem:[%s3048] sm:$0xff]
        %v3050 = vld [vmem:[%s3048 + $0x8] sm:$0xff]
        %v3051 = vld [vmem:[%s3048 + $0x10] sm:$0xff]
        %v3052 = vld [vmem:[%s3048 + $0x18] sm:$0xff]
        %v3053 = vld [vmem:[%s3048 + $0x20] sm:$0xff]
        %v3054 = vld [vmem:[%s3048 + $0x28] sm:$0xff]
        %v3055 = vld [vmem:[%s3048 + $0x30] sm:$0xff]
        %v3056 = vld [vmem:[%s3048 + $0x38] sm:$0xff]
        %v3057 = vld [vmem:[%s3048 + $0x40] sm:$0xff]
        %v3058 = vld [vmem:[%s3048 + $0x48] sm:$0xff]
        %v3059 = vld [vmem:[%s3048 + $0x50] sm:$0xff]
        %v3060 = vrot.slane %v2953, 1
        %v3061 = vsel %vm2973, %v3060, 0
        %3063 = vmatprep.subr.mxu0 0.0
        %3064 = vmatpush1.msra.mxu0 0.0
        %3065 = vmatprep.subr.mxu0 0.0
        %3066 = vmatpush1.msra.mxu0 0.0
        %3067 = vmatprep.subr.mxu0 0.0
        %3068 = vmatpush1.msra.mxu0 0.0
        %3069 = vmatprep.subr.mxu0 0.0
        %3070 = vmatpush1.msra.mxu0 0.0
        %3071 = vmatprep.subr.mxu0 0.0
        %3072 = vmatpush1.msra.mxu0 0.0
        %3073 = vmatprep.subr.mxu0 0.0
        %3074 = vmatpush1.msra.mxu0 %v3059
        %3075 = vmatprep.subr.mxu0 0.0
        %3076 = vmatpush1.msra.mxu0 %v3058
        %3077 = vmatprep.subr.mxu0 0.0
        %3078 = vmatpush1.msra.mxu0 %v3057
        %3079 = vmatprep.subr.mxu0 0.0
        %3080 = vmatpush1.msra.mxu0 %v3056
        %3081 = vmatprep.subr.mxu0 0.0
        %3082 = vmatpush1.msra.mxu0 %v3055
        %3083 = vmatprep.subr.mxu0 0.0
        %3084 = vmatpush1.msra.mxu0 %v3054
        %3085 = vmatprep.subr.mxu0 0.0
        %3086 = vmatpush1.msra.mxu0 %v3053
        %3087 = vmatprep.subr.mxu0 0.0
        %3088 = vmatpush1.msra.mxu0 %v3052
        %3089 = vmatprep.subr.mxu0 0.0
        %3090 = vmatpush1.msra.mxu0 %v3051
        %3091 = vmatprep.subr.mxu0 0.0
        %3092 = vmatpush1.msra.mxu0 %v3050
        %3093 = vmatprep.subr.mxu0 0.0
        %3094 = vmatpush1.msra.mxu0 %v3049
        %3095 = vmatprep.subr.mxu0 0.0
        %3096 = vmatpush2.msra.mxu0 0.0
        %3097 = vmatprep.subr.mxu0 0.0
        %3098 = vmatpush2.msra.mxu0 0.0
        %3099 = vmatprep.subr.mxu0 0.0
        %3100 = vmatpush2.msra.mxu0 0.0
        %3101 = vmatprep.subr.mxu0 0.0
        %3102 = vmatpush2.msra.mxu0 0.0
        %3103 = vmatprep.subr.mxu0 0.0
        %3104 = vmatpush2.msra.mxu0 0.0
        %3105 = vmatprep.subr.mxu0 0.0
        %3106 = vmatpush2.msra.mxu0 0.0
        %3107 = vmatprep.subr.mxu0 0.0
        %3108 = vmatpush2.msra.mxu0 0.0
        %3109 = vmatprep.subr.mxu0 0.0
        %3110 = vmatpush2.msra.mxu0 0.0
        %3111 = vmatprep.subr.mxu0 0.0
        %3112 = vmatpush2.msra.mxu0 0.0
        %3113 = vmatprep.subr.mxu0 0.0
        %3114 = vmatpush2.msra.mxu0 0.0
        %3115 = vmatprep.subr.mxu0 0.0
        %3116 = vmatpush2.msra.mxu0 0.0
        %3117 = vmatprep.subr.mxu0 0.0
        %3118 = vmatpush2.msra.mxu0 0.0
        %3119 = vmatprep.subr.mxu0 0.0
        %3120 = vmatpush2.msra.mxu0 0.0
        %3121 = vmatprep.subr.mxu0 0.0
        %3122 = vmatpush2.msra.mxu0 0.0
        %3123 = vmatprep.subr.mxu0 0.0
        %3124 = vmatpush2.msra.mxu0 0.0
        %3125 = vmatprep.subr.mxu0 0.0
        %3126 = vmatpush2.msra.mxu0 0.0
        %3127 = vmatprep.mubr.f32.mxu0 0.0
        %3128 = vmatmul.mubr.f32.gmra.mxu0 %v3061
        %v3129 = vpop.f32.mrf.mxu0
        %v3130 = vadd.f32 0.0, %v3129
        %v3131 = vpop.f32.mrf.mxu0
        %3132 = vdwg.mxu0
        %v3133 = vadd.f32 %v3047, %v3130
        %s3134 = scalar_lea.vmem %s7, 176
        %v3135 = vld [vmem:[%s3134] sm:$0xff]
        %v3136 = vld [vmem:[%s3134 + $0x8] sm:$0xff]
        %v3137 = vld [vmem:[%s3134 + $0x10] sm:$0xff]
        %v3138 = vld [vmem:[%s3134 + $0x18] sm:$0xff]
        %v3139 = vld [vmem:[%s3134 + $0x20] sm:$0xff]
        %v3140 = vld [vmem:[%s3134 + $0x28] sm:$0xff]
        %v3141 = vld [vmem:[%s3134 + $0x30] sm:$0xff]
        %v3142 = vld [vmem:[%s3134 + $0x38] sm:$0xff]
        %v3143 = vld [vmem:[%s3134 + $0x40] sm:$0xff]
        %v3144 = vld [vmem:[%s3134 + $0x48] sm:$0xff]
        %v3145 = vld [vmem:[%s3134 + $0x50] sm:$0xff]
        %v3146 = vrot.slane %v2953, 2
        %v3147 = vsel %vm2973, %v3146, 0
        %3149 = vmatprep.subr.mxu0 0.0
        %3150 = vmatpush1.msra.mxu0 0.0
        %3151 = vmatprep.subr.mxu0 0.0
        %3152 = vmatpush1.msra.mxu0 0.0
        %3153 = vmatprep.subr.mxu0 0.0
        %3154 = vmatpush1.msra.mxu0 0.0
        %3155 = vmatprep.subr.mxu0 0.0
        %3156 = vmatpush1.msra.mxu0 0.0
        %3157 = vmatprep.subr.mxu0 0.0
        %3158 = vmatpush1.msra.mxu0 0.0
        %3159 = vmatprep.subr.mxu0 0.0
        %3160 = vmatpush1.msra.mxu0 %v3145
        %3161 = vmatprep.subr.mxu0 0.0
        %3162 = vmatpush1.msra.mxu0 %v3144
        %3163 = vmatprep.subr.mxu0 0.0
        %3164 = vmatpush1.msra.mxu0 %v3143
        %3165 = vmatprep.subr.mxu0 0.0
        %3166 = vmatpush1.msra.mxu0 %v3142
        %3167 = vmatprep.subr.mxu0 0.0
        %3168 = vmatpush1.msra.mxu0 %v3141
        %3169 = vmatprep.subr.mxu0 0.0
        %3170 = vmatpush1.msra.mxu0 %v3140
        %3171 = vmatprep.subr.mxu0 0.0
        %3172 = vmatpush1.msra.mxu0 %v3139
        %3173 = vmatprep.subr.mxu0 0.0
        %3174 = vmatpush1.msra.mxu0 %v3138
        %3175 = vmatprep.subr.mxu0 0.0
        %3176 = vmatpush1.msra.mxu0 %v3137
        %3177 = vmatprep.subr.mxu0 0.0
        %3178 = vmatpush1.msra.mxu0 %v3136
        %3179 = vmatprep.subr.mxu0 0.0
        %3180 = vmatpush1.msra.mxu0 %v3135
        %3181 = vmatprep.subr.mxu0 0.0
        %3182 = vmatpush2.msra.mxu0 0.0
        %3183 = vmatprep.subr.mxu0 0.0
        %3184 = vmatpush2.msra.mxu0 0.0
        %3185 = vmatprep.subr.mxu0 0.0
        %3186 = vmatpush2.msra.mxu0 0.0
        %3187 = vmatprep.subr.mxu0 0.0
        %3188 = vmatpush2.msra.mxu0 0.0
        %3189 = vmatprep.subr.mxu0 0.0
        %3190 = vmatpush2.msra.mxu0 0.0
        %3191 = vmatprep.subr.mxu0 0.0
        %3192 = vmatpush2.msra.mxu0 0.0
        %3193 = vmatprep.subr.mxu0 0.0
        %3194 = vmatpush2.msra.mxu0 0.0
        %3195 = vmatprep.subr.mxu0 0.0
        %3196 = vmatpush2.msra.mxu0 0.0
        %3197 = vmatprep.subr.mxu0 0.0
        %3198 = vmatpush2.msra.mxu0 0.0
        %3199 = vmatprep.subr.mxu0 0.0
        %3200 = vmatpush2.msra.mxu0 0.0
        %3201 = vmatprep.subr.mxu0 0.0
        %3202 = vmatpush2.msra.mxu0 0.0
        %3203 = vmatprep.subr.mxu0 0.0
        %3204 = vmatpush2.msra.mxu0 0.0
        %3205 = vmatprep.subr.mxu0 0.0
        %3206 = vmatpush2.msra.mxu0 0.0
        %3207 = vmatprep.subr.mxu0 0.0
        %3208 = vmatpush2.msra.mxu0 0.0
        %3209 = vmatprep.subr.mxu0 0.0
        %3210 = vmatpush2.msra.mxu0 0.0
        %3211 = vmatprep.subr.mxu0 0.0
        %3212 = vmatpush2.msra.mxu0 0.0
        %3213 = vmatprep.mubr.f32.mxu0 0.0
        %3214 = vmatmul.mubr.f32.gmra.mxu0 %v3147
        %v3215 = vpop.f32.mrf.mxu0
        %v3216 = vadd.f32 0.0, %v3215
        %v3217 = vpop.f32.mrf.mxu0
        %3218 = vdwg.mxu0
        %v3219 = vadd.f32 %v3133, %v3216
        %s3220 = scalar_lea.vmem %s7, 264
        %v3221 = vld [vmem:[%s3220] sm:$0xff]
        %v3222 = vld [vmem:[%s3220 + $0x8] sm:$0xff]
        %v3223 = vld [vmem:[%s3220 + $0x10] sm:$0xff]
        %v3224 = vld [vmem:[%s3220 + $0x18] sm:$0xff]
        %v3225 = vld [vmem:[%s3220 + $0x20] sm:$0xff]
        %v3226 = vld [vmem:[%s3220 + $0x28] sm:$0xff]
        %v3227 = vld [vmem:[%s3220 + $0x30] sm:$0xff]
        %v3228 = vld [vmem:[%s3220 + $0x38] sm:$0xff]
        %v3229 = vld [vmem:[%s3220 + $0x40] sm:$0xff]
        %v3230 = vld [vmem:[%s3220 + $0x48] sm:$0xff]
        %v3231 = vld [vmem:[%s3220 + $0x50] sm:$0xff]
        %v3232 = vrot.slane %v2953, 3
        %v3233 = vsel %vm2973, %v3232, 0
        %3235 = vmatprep.subr.mxu0 0.0
        %3236 = vmatpush1.msra.mxu0 0.0
        %3237 = vmatprep.subr.mxu0 0.0
        %3238 = vmatpush1.msra.mxu0 0.0
        %3239 = vmatprep.subr.mxu0 0.0
        %3240 = vmatpush1.msra.mxu0 0.0
        %3241 = vmatprep.subr.mxu0 0.0
        %3242 = vmatpush1.msra.mxu0 0.0
        %3243 = vmatprep.subr.mxu0 0.0
        %3244 = vmatpush1.msra.mxu0 0.0
        %3245 = vmatprep.subr.mxu0 0.0
        %3246 = vmatpush1.msra.mxu0 %v3231
        %3247 = vmatprep.subr.mxu0 0.0
        %3248 = vmatpush1.msra.mxu0 %v3230
        %3249 = vmatprep.subr.mxu0 0.0
        %3250 = vmatpush1.msra.mxu0 %v3229
        %3251 = vmatprep.subr.mxu0 0.0
        %3252 = vmatpush1.msra.mxu0 %v3228
        %3253 = vmatprep.subr.mxu0 0.0
        %3254 = vmatpush1.msra.mxu0 %v3227
        %3255 = vmatprep.subr.mxu0 0.0
        %3256 = vmatpush1.msra.mxu0 %v3226
        %3257 = vmatprep.subr.mxu0 0.0
        %3258 = vmatpush1.msra.mxu0 %v3225
        %3259 = vmatprep.subr.mxu0 0.0
        %3260 = vmatpush1.msra.mxu0 %v3224
        %3261 = vmatprep.subr.mxu0 0.0
        %3262 = vmatpush1.msra.mxu0 %v3223
        %3263 = vmatprep.subr.mxu0 0.0
        %3264 = vmatpush1.msra.mxu0 %v3222
        %3265 = vmatprep.subr.mxu0 0.0
        %3266 = vmatpush1.msra.mxu0 %v3221
        %3267 = vmatprep.subr.mxu0 0.0
        %3268 = vmatpush2.msra.mxu0 0.0
        %3269 = vmatprep.subr.mxu0 0.0
        %3270 = vmatpush2.msra.mxu0 0.0
        %3271 = vmatprep.subr.mxu0 0.0
        %3272 = vmatpush2.msra.mxu0 0.0
        %3273 = vmatprep.subr.mxu0 0.0
        %3274 = vmatpush2.msra.mxu0 0.0
        %3275 = vmatprep.subr.mxu0 0.0
        %3276 = vmatpush2.msra.mxu0 0.0
        %3277 = vmatprep.subr.mxu0 0.0
        %3278 = vmatpush2.msra.mxu0 0.0
        %3279 = vmatprep.subr.mxu0 0.0
        %3280 = vmatpush2.msra.mxu0 0.0
        %3281 = vmatprep.subr.mxu0 0.0
        %3282 = vmatpush2.msra.mxu0 0.0
        %3283 = vmatprep.subr.mxu0 0.0
        %3284 = vmatpush2.msra.mxu0 0.0
        %3285 = vmatprep.subr.mxu0 0.0
        %3286 = vmatpush2.msra.mxu0 0.0
        %3287 = vmatprep.subr.mxu0 0.0
        %3288 = vmatpush2.msra.mxu0 0.0
        %3289 = vmatprep.subr.mxu0 0.0
        %3290 = vmatpush2.msra.mxu0 0.0
        %3291 = vmatprep.subr.mxu0 0.0
        %3292 = vmatpush2.msra.mxu0 0.0
        %3293 = vmatprep.subr.mxu0 0.0
        %3294 = vmatpush2.msra.mxu0 0.0
        %3295 = vmatprep.subr.mxu0 0.0
        %3296 = vmatpush2.msra.mxu0 0.0
        %3297 = vmatprep.subr.mxu0 0.0
        %3298 = vmatpush2.msra.mxu0 0.0
        %3299 = vmatprep.mubr.f32.mxu0 0.0
        %3300 = vmatmul.mubr.f32.gmra.mxu0 %v3233
        %v3301 = vpop.f32.mrf.mxu0
        %v3302 = vadd.f32 0.0, %v3301
        %v3303 = vpop.f32.mrf.mxu0
        %3304 = vdwg.mxu0
        %v3305 = vadd.f32 %v3219, %v3302
        %s3306 = scalar_lea.vmem %s7, 352
        %v3307 = vld [vmem:[%s3306] sm:$0xff]
        %v3308 = vld [vmem:[%s3306 + $0x8] sm:$0xff]
        %v3309 = vld [vmem:[%s3306 + $0x10] sm:$0xff]
        %v3310 = vld [vmem:[%s3306 + $0x18] sm:$0xff]
        %v3311 = vld [vmem:[%s3306 + $0x20] sm:$0xff]
        %v3312 = vld [vmem:[%s3306 + $0x28] sm:$0xff]
        %v3313 = vld [vmem:[%s3306 + $0x30] sm:$0xff]
        %v3314 = vld [vmem:[%s3306 + $0x38] sm:$0xff]
        %v3315 = vld [vmem:[%s3306 + $0x40] sm:$0xff]
        %v3316 = vld [vmem:[%s3306 + $0x48] sm:$0xff]
        %v3317 = vld [vmem:[%s3306 + $0x50] sm:$0xff]
        %v3318 = vrot.slane %v2953, 4
        %v3319 = vsel %vm2973, %v3318, 0
        %3321 = vmatprep.subr.mxu0 0.0
        %3322 = vmatpush1.msra.mxu0 0.0
        %3323 = vmatprep.subr.mxu0 0.0
        %3324 = vmatpush1.msra.mxu0 0.0
        %3325 = vmatprep.subr.mxu0 0.0
        %3326 = vmatpush1.msra.mxu0 0.0
        %3327 = vmatprep.subr.mxu0 0.0
        %3328 = vmatpush1.msra.mxu0 0.0
        %3329 = vmatprep.subr.mxu0 0.0
        %3330 = vmatpush1.msra.mxu0 0.0
        %3331 = vmatprep.subr.mxu0 0.0
        %3332 = vmatpush1.msra.mxu0 %v3317
        %3333 = vmatprep.subr.mxu0 0.0
        %3334 = vmatpush1.msra.mxu0 %v3316
        %3335 = vmatprep.subr.mxu0 0.0
        %3336 = vmatpush1.msra.mxu0 %v3315
        %3337 = vmatprep.subr.mxu0 0.0
        %3338 = vmatpush1.msra.mxu0 %v3314
        %3339 = vmatprep.subr.mxu0 0.0
        %3340 = vmatpush1.msra.mxu0 %v3313
        %3341 = vmatprep.subr.mxu0 0.0
        %3342 = vmatpush1.msra.mxu0 %v3312
        %3343 = vmatprep.subr.mxu0 0.0
        %3344 = vmatpush1.msra.mxu0 %v3311
        %3345 = vmatprep.subr.mxu0 0.0
        %3346 = vmatpush1.msra.mxu0 %v3310
        %3347 = vmatprep.subr.mxu0 0.0
        %3348 = vmatpush1.msra.mxu0 %v3309
        %3349 = vmatprep.subr.mxu0 0.0
        %3350 = vmatpush1.msra.mxu0 %v3308
        %3351 = vmatprep.subr.mxu0 0.0
        %3352 = vmatpush1.msra.mxu0 %v3307
        %3353 = vmatprep.subr.mxu0 0.0
        %3354 = vmatpush2.msra.mxu0 0.0
        %3355 = vmatprep.subr.mxu0 0.0
        %3356 = vmatpush2.msra.mxu0 0.0
        %3357 = vmatprep.subr.mxu0 0.0
        %3358 = vmatpush2.msra.mxu0 0.0
        %3359 = vmatprep.subr.mxu0 0.0
        %3360 = vmatpush2.msra.mxu0 0.0
        %3361 = vmatprep.subr.mxu0 0.0
        %3362 = vmatpush2.msra.mxu0 0.0
        %3363 = vmatprep.subr.mxu0 0.0
        %3364 = vmatpush2.msra.mxu0 0.0
        %3365 = vmatprep.subr.mxu0 0.0
        %3366 = vmatpush2.msra.mxu0 0.0
        %3367 = vmatprep.subr.mxu0 0.0
        %3368 = vmatpush2.msra.mxu0 0.0
        %3369 = vmatprep.subr.mxu0 0.0
        %3370 = vmatpush2.msra.mxu0 0.0
        %3371 = vmatprep.subr.mxu0 0.0
        %3372 = vmatpush2.msra.mxu0 0.0
        %3373 = vmatprep.subr.mxu0 0.0
        %3374 = vmatpush2.msra.mxu0 0.0
        %3375 = vmatprep.subr.mxu0 0.0
        %3376 = vmatpush2.msra.mxu0 0.0
        %3377 = vmatprep.subr.mxu0 0.0
        %3378 = vmatpush2.msra.mxu0 0.0
        %3379 = vmatprep.subr.mxu0 0.0
        %3380 = vmatpush2.msra.mxu0 0.0
        %3381 = vmatprep.subr.mxu0 0.0
        %3382 = vmatpush2.msra.mxu0 0.0
        %3383 = vmatprep.subr.mxu0 0.0
        %3384 = vmatpush2.msra.mxu0 0.0
        %3385 = vmatprep.mubr.f32.mxu0 0.0
        %3386 = vmatmul.mubr.f32.gmra.mxu0 %v3319
        %v3387 = vpop.f32.mrf.mxu0
        %v3388 = vadd.f32 0.0, %v3387
        %v3389 = vpop.f32.mrf.mxu0
        %3390 = vdwg.mxu0
        %v3391 = vadd.f32 %v3305, %v3388
        %s3392 = scalar_lea.vmem %s7, 440
        %v3393 = vld [vmem:[%s3392] sm:$0xff]
        %v3394 = vld [vmem:[%s3392 + $0x8] sm:$0xff]
        %v3395 = vld [vmem:[%s3392 + $0x10] sm:$0xff]
        %v3396 = vld [vmem:[%s3392 + $0x18] sm:$0xff]
        %v3397 = vld [vmem:[%s3392 + $0x20] sm:$0xff]
        %v3398 = vld [vmem:[%s3392 + $0x28] sm:$0xff]
        %v3399 = vld [vmem:[%s3392 + $0x30] sm:$0xff]
        %v3400 = vld [vmem:[%s3392 + $0x38] sm:$0xff]
        %v3401 = vld [vmem:[%s3392 + $0x40] sm:$0xff]
        %v3402 = vld [vmem:[%s3392 + $0x48] sm:$0xff]
        %v3403 = vld [vmem:[%s3392 + $0x50] sm:$0xff]
        %v3405 = vrot.slane %v2953, 5
        %v3406 = vrot.slane %v2954, 5
        %v3407 = vsel %vm994, %v3405, %v3406
        %v3408 = vsel %vm2973, %v3407, 0
        %3410 = vmatprep.subr.mxu0 0.0
        %3411 = vmatpush1.msra.mxu0 0.0
        %3412 = vmatprep.subr.mxu0 0.0
        %3413 = vmatpush1.msra.mxu0 0.0
        %3414 = vmatprep.subr.mxu0 0.0
        %3415 = vmatpush1.msra.mxu0 0.0
        %3416 = vmatprep.subr.mxu0 0.0
        %3417 = vmatpush1.msra.mxu0 0.0
        %3418 = vmatprep.subr.mxu0 0.0
        %3419 = vmatpush1.msra.mxu0 0.0
        %3420 = vmatprep.subr.mxu0 0.0
        %3421 = vmatpush1.msra.mxu0 %v3403
        %3422 = vmatprep.subr.mxu0 0.0
        %3423 = vmatpush1.msra.mxu0 %v3402
        %3424 = vmatprep.subr.mxu0 0.0
        %3425 = vmatpush1.msra.mxu0 %v3401
        %3426 = vmatprep.subr.mxu0 0.0
        %3427 = vmatpush1.msra.mxu0 %v3400
        %3428 = vmatprep.subr.mxu0 0.0
        %3429 = vmatpush1.msra.mxu0 %v3399
        %3430 = vmatprep.subr.mxu0 0.0
        %3431 = vmatpush1.msra.mxu0 %v3398
        %3432 = vmatprep.subr.mxu0 0.0
        %3433 = vmatpush1.msra.mxu0 %v3397
        %3434 = vmatprep.subr.mxu0 0.0
        %3435 = vmatpush1.msra.mxu0 %v3396
        %3436 = vmatprep.subr.mxu0 0.0
        %3437 = vmatpush1.msra.mxu0 %v3395
        %3438 = vmatprep.subr.mxu0 0.0
        %3439 = vmatpush1.msra.mxu0 %v3394
        %3440 = vmatprep.subr.mxu0 0.0
        %3441 = vmatpush1.msra.mxu0 %v3393
        %3442 = vmatprep.subr.mxu0 0.0
        %3443 = vmatpush2.msra.mxu0 0.0
        %3444 = vmatprep.subr.mxu0 0.0
        %3445 = vmatpush2.msra.mxu0 0.0
        %3446 = vmatprep.subr.mxu0 0.0
        %3447 = vmatpush2.msra.mxu0 0.0
        %3448 = vmatprep.subr.mxu0 0.0
        %3449 = vmatpush2.msra.mxu0 0.0
        %3450 = vmatprep.subr.mxu0 0.0
        %3451 = vmatpush2.msra.mxu0 0.0
        %3452 = vmatprep.subr.mxu0 0.0
        %3453 = vmatpush2.msra.mxu0 0.0
        %3454 = vmatprep.subr.mxu0 0.0
        %3455 = vmatpush2.msra.mxu0 0.0
        %3456 = vmatprep.subr.mxu0 0.0
        %3457 = vmatpush2.msra.mxu0 0.0
        %3458 = vmatprep.subr.mxu0 0.0
        %3459 = vmatpush2.msra.mxu0 0.0
        %3460 = vmatprep.subr.mxu0 0.0
        %3461 = vmatpush2.msra.mxu0 0.0
        %3462 = vmatprep.subr.mxu0 0.0
        %3463 = vmatpush2.msra.mxu0 0.0
        %3464 = vmatprep.subr.mxu0 0.0
        %3465 = vmatpush2.msra.mxu0 0.0
        %3466 = vmatprep.subr.mxu0 0.0
        %3467 = vmatpush2.msra.mxu0 0.0
        %3468 = vmatprep.subr.mxu0 0.0
        %3469 = vmatpush2.msra.mxu0 0.0
        %3470 = vmatprep.subr.mxu0 0.0
        %3471 = vmatpush2.msra.mxu0 0.0
        %3472 = vmatprep.subr.mxu0 0.0
        %3473 = vmatpush2.msra.mxu0 0.0
        %3474 = vmatprep.mubr.f32.mxu0 0.0
        %3475 = vmatmul.mubr.f32.gmra.mxu0 %v3408
        %v3476 = vpop.f32.mrf.mxu0
        %v3477 = vadd.f32 0.0, %v3476
        %v3478 = vpop.f32.mrf.mxu0
        %3479 = vdwg.mxu0
        %v3480 = vadd.f32 %v3391, %v3477
        %s3481 = scalar_lea.vmem %s7, 528
        %v3482 = vld [vmem:[%s3481] sm:$0xff]
        %v3483 = vld [vmem:[%s3481 + $0x8] sm:$0xff]
        %v3484 = vld [vmem:[%s3481 + $0x10] sm:$0xff]
        %v3485 = vld [vmem:[%s3481 + $0x18] sm:$0xff]
        %v3486 = vld [vmem:[%s3481 + $0x20] sm:$0xff]
        %v3487 = vld [vmem:[%s3481 + $0x28] sm:$0xff]
        %v3488 = vld [vmem:[%s3481 + $0x30] sm:$0xff]
        %v3489 = vld [vmem:[%s3481 + $0x38] sm:$0xff]
        %v3490 = vld [vmem:[%s3481 + $0x40] sm:$0xff]
        %v3491 = vld [vmem:[%s3481 + $0x48] sm:$0xff]
        %v3492 = vld [vmem:[%s3481 + $0x50] sm:$0xff]
        %v3493 = vrot.slane %v2953, 6
        %v3494 = vrot.slane %v2954, 6
        %v3495 = vsel %vm1112, %v3493, %v3494
        %v3496 = vsel %vm2973, %v3495, 0
        %3498 = vmatprep.subr.mxu0 0.0
        %3499 = vmatpush1.msra.mxu0 0.0
        %3500 = vmatprep.subr.mxu0 0.0
        %3501 = vmatpush1.msra.mxu0 0.0
        %3502 = vmatprep.subr.mxu0 0.0
        %3503 = vmatpush1.msra.mxu0 0.0
        %3504 = vmatprep.subr.mxu0 0.0
        %3505 = vmatpush1.msra.mxu0 0.0
        %3506 = vmatprep.subr.mxu0 0.0
        %3507 = vmatpush1.msra.mxu0 0.0
        %3508 = vmatprep.subr.mxu0 0.0
        %3509 = vmatpush1.msra.mxu0 %v3492
        %3510 = vmatprep.subr.mxu0 0.0
        %3511 = vmatpush1.msra.mxu0 %v3491
        %3512 = vmatprep.subr.mxu0 0.0
        %3513 = vmatpush1.msra.mxu0 %v3490
        %3514 = vmatprep.subr.mxu0 0.0
        %3515 = vmatpush1.msra.mxu0 %v3489
        %3516 = vmatprep.subr.mxu0 0.0
        %3517 = vmatpush1.msra.mxu0 %v3488
        %3518 = vmatprep.subr.mxu0 0.0
        %3519 = vmatpush1.msra.mxu0 %v3487
        %3520 = vmatprep.subr.mxu0 0.0
        %3521 = vmatpush1.msra.mxu0 %v3486
        %3522 = vmatprep.subr.mxu0 0.0
        %3523 = vmatpush1.msra.mxu0 %v3485
        %3524 = vmatprep.subr.mxu0 0.0
        %3525 = vmatpush1.msra.mxu0 %v3484
        %3526 = vmatprep.subr.mxu0 0.0
        %3527 = vmatpush1.msra.mxu0 %v3483
        %3528 = vmatprep.subr.mxu0 0.0
        %3529 = vmatpush1.msra.mxu0 %v3482
        %3530 = vmatprep.subr.mxu0 0.0
        %3531 = vmatpush2.msra.mxu0 0.0
        %3532 = vmatprep.subr.mxu0 0.0
        %3533 = vmatpush2.msra.mxu0 0.0
        %3534 = vmatprep.subr.mxu0 0.0
        %3535 = vmatpush2.msra.mxu0 0.0
        %3536 = vmatprep.subr.mxu0 0.0
        %3537 = vmatpush2.msra.mxu0 0.0
        %3538 = vmatprep.subr.mxu0 0.0
        %3539 = vmatpush2.msra.mxu0 0.0
        %3540 = vmatprep.subr.mxu0 0.0
        %3541 = vmatpush2.msra.mxu0 0.0
        %3542 = vmatprep.subr.mxu0 0.0
        %3543 = vmatpush2.msra.mxu0 0.0
        %3544 = vmatprep.subr.mxu0 0.0
        %3545 = vmatpush2.msra.mxu0 0.0
        %3546 = vmatprep.subr.mxu0 0.0
        %3547 = vmatpush2.msra.mxu0 0.0
        %3548 = vmatprep.subr.mxu0 0.0
        %3549 = vmatpush2.msra.mxu0 0.0
        %3550 = vmatprep.subr.mxu0 0.0
        %3551 = vmatpush2.msra.mxu0 0.0
        %3552 = vmatprep.subr.mxu0 0.0
        %3553 = vmatpush2.msra.mxu0 0.0
        %3554 = vmatprep.subr.mxu0 0.0
        %3555 = vmatpush2.msra.mxu0 0.0
        %3556 = vmatprep.subr.mxu0 0.0
        %3557 = vmatpush2.msra.mxu0 0.0
        %3558 = vmatprep.subr.mxu0 0.0
        %3559 = vmatpush2.msra.mxu0 0.0
        %3560 = vmatprep.subr.mxu0 0.0
        %3561 = vmatpush2.msra.mxu0 0.0
        %3562 = vmatprep.mubr.f32.mxu0 0.0
        %3563 = vmatmul.mubr.f32.gmra.mxu0 %v3496
        %v3564 = vpop.f32.mrf.mxu0
        %v3565 = vadd.f32 0.0, %v3564
        %v3566 = vpop.f32.mrf.mxu0
        %3567 = vdwg.mxu0
        %v3568 = vadd.f32 %v3480, %v3565
        %s3569 = scalar_lea.vmem %s7, 616
        %v3570 = vld [vmem:[%s3569] sm:$0xff]
        %v3571 = vld [vmem:[%s3569 + $0x8] sm:$0xff]
        %v3572 = vld [vmem:[%s3569 + $0x10] sm:$0xff]
        %v3573 = vld [vmem:[%s3569 + $0x18] sm:$0xff]
        %v3574 = vld [vmem:[%s3569 + $0x20] sm:$0xff]
        %v3575 = vld [vmem:[%s3569 + $0x28] sm:$0xff]
        %v3576 = vld [vmem:[%s3569 + $0x30] sm:$0xff]
        %v3577 = vld [vmem:[%s3569 + $0x38] sm:$0xff]
        %v3578 = vld [vmem:[%s3569 + $0x40] sm:$0xff]
        %v3579 = vld [vmem:[%s3569 + $0x48] sm:$0xff]
        %v3580 = vld [vmem:[%s3569 + $0x50] sm:$0xff]
        %v3581 = vrot.slane %v2953, 7
        %v3582 = vrot.slane %v2954, 7
        %v3583 = vsel %vm1230, %v3581, %v3582
        %v3584 = vsel %vm2973, %v3583, 0
        %3586 = vmatprep.subr.mxu0 0.0
        %3587 = vmatpush1.msra.mxu0 0.0
        %3588 = vmatprep.subr.mxu0 0.0
        %3589 = vmatpush1.msra.mxu0 0.0
        %3590 = vmatprep.subr.mxu0 0.0
        %3591 = vmatpush1.msra.mxu0 0.0
        %3592 = vmatprep.subr.mxu0 0.0
        %3593 = vmatpush1.msra.mxu0 0.0
        %3594 = vmatprep.subr.mxu0 0.0
        %3595 = vmatpush1.msra.mxu0 0.0
        %3596 = vmatprep.subr.mxu0 0.0
        %3597 = vmatpush1.msra.mxu0 %v3580
        %3598 = vmatprep.subr.mxu0 0.0
        %3599 = vmatpush1.msra.mxu0 %v3579
        %3600 = vmatprep.subr.mxu0 0.0
        %3601 = vmatpush1.msra.mxu0 %v3578
        %3602 = vmatprep.subr.mxu0 0.0
        %3603 = vmatpush1.msra.mxu0 %v3577
        %3604 = vmatprep.subr.mxu0 0.0
        %3605 = vmatpush1.msra.mxu0 %v3576
        %3606 = vmatprep.subr.mxu0 0.0
        %3607 = vmatpush1.msra.mxu0 %v3575
        %3608 = vmatprep.subr.mxu0 0.0
        %3609 = vmatpush1.msra.mxu0 %v3574
        %3610 = vmatprep.subr.mxu0 0.0
        %3611 = vmatpush1.msra.mxu0 %v3573
        %3612 = vmatprep.subr.mxu0 0.0
        %3613 = vmatpush1.msra.mxu0 %v3572
        %3614 = vmatprep.subr.mxu0 0.0
        %3615 = vmatpush1.msra.mxu0 %v3571
        %3616 = vmatprep.subr.mxu0 0.0
        %3617 = vmatpush1.msra.mxu0 %v3570
        %3618 = vmatprep.subr.mxu0 0.0
        %3619 = vmatpush2.msra.mxu0 0.0
        %3620 = vmatprep.subr.mxu0 0.0
        %3621 = vmatpush2.msra.mxu0 0.0
        %3622 = vmatprep.subr.mxu0 0.0
        %3623 = vmatpush2.msra.mxu0 0.0
        %3624 = vmatprep.subr.mxu0 0.0
        %3625 = vmatpush2.msra.mxu0 0.0
        %3626 = vmatprep.subr.mxu0 0.0
        %3627 = vmatpush2.msra.mxu0 0.0
        %3628 = vmatprep.subr.mxu0 0.0
        %3629 = vmatpush2.msra.mxu0 0.0
        %3630 = vmatprep.subr.mxu0 0.0
        %3631 = vmatpush2.msra.mxu0 0.0
        %3632 = vmatprep.subr.mxu0 0.0
        %3633 = vmatpush2.msra.mxu0 0.0
        %3634 = vmatprep.subr.mxu0 0.0
        %3635 = vmatpush2.msra.mxu0 0.0
        %3636 = vmatprep.subr.mxu0 0.0
        %3637 = vmatpush2.msra.mxu0 0.0
        %3638 = vmatprep.subr.mxu0 0.0
        %3639 = vmatpush2.msra.mxu0 0.0
        %3640 = vmatprep.subr.mxu0 0.0
        %3641 = vmatpush2.msra.mxu0 0.0
        %3642 = vmatprep.subr.mxu0 0.0
        %3643 = vmatpush2.msra.mxu0 0.0
        %3644 = vmatprep.subr.mxu0 0.0
        %3645 = vmatpush2.msra.mxu0 0.0
        %3646 = vmatprep.subr.mxu0 0.0
        %3647 = vmatpush2.msra.mxu0 0.0
        %3648 = vmatprep.subr.mxu0 0.0
        %3649 = vmatpush2.msra.mxu0 0.0
        %3650 = vmatprep.mubr.f32.mxu0 0.0
        %3651 = vmatmul.mubr.f32.gmra.mxu0 %v3584
        %v3652 = vpop.f32.mrf.mxu0
        %v3653 = vadd.f32 0.0, %v3652
        %v3654 = vpop.f32.mrf.mxu0
        %3655 = vdwg.mxu0
        %v3656 = vadd.f32 %v3568, %v3653
        %v3657 = vmax.f32 %v3656, 0.0
        %3659 = vrot.lane.b32.xlu0 %v3657, 112
        %v3660 = vpop.permute.xlu0 %3659
        %v3662 = vmax.f32 %v3657, %v3660
        %v3663 = vld [vmem:[%s10] sm:$0x1]
        %v3665 = vrot.slane %v3662, 1
        %v3667 = vmax.f32 %v3662, %v3665
        %v3668 = vld [vmem:[%s9] sm:$0xff]
        %v3669 = vld [vmem:[%s9 + $0x8] sm:$0xff]
        %v3670 = vld [vmem:[%s9 + $0x10] sm:$0xff]
        %v3671 = vld [vmem:[%s9 + $0x18] sm:$0xff]
        %v3672 = vld [vmem:[%s9 + $0x20] sm:$0xff]
        %v3673 = vld [vmem:[%s9 + $0x28] sm:$0xff]
        %vm3674 = vcmask 392192
        %v3676 = vsel %vm3674, %v3667, 0
        %3678 = vmatprep.subr.mxu0 0.0
        %3679 = vmatpush1.msra.mxu0 0.0
        %3680 = vmatprep.subr.mxu0 0.0
        %3681 = vmatpush1.msra.mxu0 0.0
        %3682 = vmatprep.subr.mxu0 0.0
        %3683 = vmatpush1.msra.mxu0 0.0
        %3684 = vmatprep.subr.mxu0 0.0
        %3685 = vmatpush1.msra.mxu0 0.0
        %3686 = vmatprep.subr.mxu0 0.0
        %3687 = vmatpush1.msra.mxu0 0.0
        %3688 = vmatprep.subr.mxu0 0.0
        %3689 = vmatpush1.msra.mxu0 0.0
        %3690 = vmatprep.subr.mxu0 0.0
        %3691 = vmatpush1.msra.mxu0 0.0
        %3692 = vmatprep.subr.mxu0 0.0
        %3693 = vmatpush1.msra.mxu0 0.0
        %3694 = vmatprep.subr.mxu0 0.0
        %3695 = vmatpush1.msra.mxu0 0.0
        %3696 = vmatprep.subr.mxu0 0.0
        %3697 = vmatpush1.msra.mxu0 0.0
        %3698 = vmatprep.subr.mxu0 0.0
        %3699 = vmatpush1.msra.mxu0 %v3673
        %3700 = vmatprep.subr.mxu0 0.0
        %3701 = vmatpush1.msra.mxu0 %v3672
        %3702 = vmatprep.subr.mxu0 0.0
        %3703 = vmatpush1.msra.mxu0 %v3671
        %3704 = vmatprep.subr.mxu0 0.0
        %3705 = vmatpush1.msra.mxu0 %v3670
        %3706 = vmatprep.subr.mxu0 0.0
        %3707 = vmatpush1.msra.mxu0 %v3669
        %3708 = vmatprep.subr.mxu0 0.0
        %3709 = vmatpush1.msra.mxu0 %v3668
        %3710 = vmatprep.subr.mxu0 0.0
        %3711 = vmatpush2.msra.mxu0 0.0
        %3712 = vmatprep.subr.mxu0 0.0
        %3713 = vmatpush2.msra.mxu0 0.0
        %3714 = vmatprep.subr.mxu0 0.0
        %3715 = vmatpush2.msra.mxu0 0.0
        %3716 = vmatprep.subr.mxu0 0.0
        %3717 = vmatpush2.msra.mxu0 0.0
        %3718 = vmatprep.subr.mxu0 0.0
        %3719 = vmatpush2.msra.mxu0 0.0
        %3720 = vmatprep.subr.mxu0 0.0
        %3721 = vmatpush2.msra.mxu0 0.0
        %3722 = vmatprep.subr.mxu0 0.0
        %3723 = vmatpush2.msra.mxu0 0.0
        %3724 = vmatprep.subr.mxu0 0.0
        %3725 = vmatpush2.msra.mxu0 0.0
        %3726 = vmatprep.subr.mxu0 0.0
        %3727 = vmatpush2.msra.mxu0 0.0
        %3728 = vmatprep.subr.mxu0 0.0
        %3729 = vmatpush2.msra.mxu0 0.0
        %3730 = vmatprep.subr.mxu0 0.0
        %3731 = vmatpush2.msra.mxu0 0.0
        %3732 = vmatprep.subr.mxu0 0.0
        %3733 = vmatpush2.msra.mxu0 0.0
        %3734 = vmatprep.subr.mxu0 0.0
        %3735 = vmatpush2.msra.mxu0 0.0
        %3736 = vmatprep.subr.mxu0 0.0
        %3737 = vmatpush2.msra.mxu0 0.0
        %3738 = vmatprep.subr.mxu0 0.0
        %3739 = vmatpush2.msra.mxu0 0.0
        %3740 = vmatprep.subr.mxu0 0.0
        %3741 = vmatpush2.msra.mxu0 0.0
        %3742 = vmatprep.mubr.f32.mxu0 0.0
        %3743 = vmatmul.mubr.f32.gmra.mxu0 %v3676
        %v3744 = vpop.f32.mrf.mxu0
        %v3745 = vadd.f32 0.0, %v3744
        %v3746 = vpop.f32.mrf.mxu0
        %3747 = vdwg.mxu0
        %v3748 = vadd.f32 %v3663, %v3745
        %s3749 = scalar_lea.vmem %s9, 48
        %v3750 = vld [vmem:[%s3749] sm:$0xff]
        %v3751 = vld [vmem:[%s3749 + $0x8] sm:$0xff]
        %v3752 = vld [vmem:[%s3749 + $0x10] sm:$0xff]
        %v3753 = vld [vmem:[%s3749 + $0x18] sm:$0xff]
        %v3754 = vld [vmem:[%s3749 + $0x20] sm:$0xff]
        %v3755 = vld [vmem:[%s3749 + $0x28] sm:$0xff]
        %v3756 = vrot.slane %v3667, 2
        %v3757 = vsel %vm3674, %v3756, 0
        %3759 = vmatprep.subr.mxu0 0.0
        %3760 = vmatpush1.msra.mxu0 0.0
        %3761 = vmatprep.subr.mxu0 0.0
        %3762 = vmatpush1.msra.mxu0 0.0
        %3763 = vmatprep.subr.mxu0 0.0
        %3764 = vmatpush1.msra.mxu0 0.0
        %3765 = vmatprep.subr.mxu0 0.0
        %3766 = vmatpush1.msra.mxu0 0.0
        %3767 = vmatprep.subr.mxu0 0.0
        %3768 = vmatpush1.msra.mxu0 0.0
        %3769 = vmatprep.subr.mxu0 0.0
        %3770 = vmatpush1.msra.mxu0 0.0
        %3771 = vmatprep.subr.mxu0 0.0
        %3772 = vmatpush1.msra.mxu0 0.0
        %3773 = vmatprep.subr.mxu0 0.0
        %3774 = vmatpush1.msra.mxu0 0.0
        %3775 = vmatprep.subr.mxu0 0.0
        %3776 = vmatpush1.msra.mxu0 0.0
        %3777 = vmatprep.subr.mxu0 0.0
        %3778 = vmatpush1.msra.mxu0 0.0
        %3779 = vmatprep.subr.mxu0 0.0
        %3780 = vmatpush1.msra.mxu0 %v3755
        %3781 = vmatprep.subr.mxu0 0.0
        %3782 = vmatpush1.msra.mxu0 %v3754
        %3783 = vmatprep.subr.mxu0 0.0
        %3784 = vmatpush1.msra.mxu0 %v3753
        %3785 = vmatprep.subr.mxu0 0.0
        %3786 = vmatpush1.msra.mxu0 %v3752
        %3787 = vmatprep.subr.mxu0 0.0
        %3788 = vmatpush1.msra.mxu0 %v3751
        %3789 = vmatprep.subr.mxu0 0.0
        %3790 = vmatpush1.msra.mxu0 %v3750
        %3791 = vmatprep.subr.mxu0 0.0
        %3792 = vmatpush2.msra.mxu0 0.0
        %3793 = vmatprep.subr.mxu0 0.0
        %3794 = vmatpush2.msra.mxu0 0.0
        %3795 = vmatprep.subr.mxu0 0.0
        %3796 = vmatpush2.msra.mxu0 0.0
        %3797 = vmatprep.subr.mxu0 0.0
        %3798 = vmatpush2.msra.mxu0 0.0
        %3799 = vmatprep.subr.mxu0 0.0
        %3800 = vmatpush2.msra.mxu0 0.0
        %3801 = vmatprep.subr.mxu0 0.0
        %3802 = vmatpush2.msra.mxu0 0.0
        %3803 = vmatprep.subr.mxu0 0.0
        %3804 = vmatpush2.msra.mxu0 0.0
        %3805 = vmatprep.subr.mxu0 0.0
        %3806 = vmatpush2.msra.mxu0 0.0
        %3807 = vmatprep.subr.mxu0 0.0
        %3808 = vmatpush2.msra.mxu0 0.0
        %3809 = vmatprep.subr.mxu0 0.0
        %3810 = vmatpush2.msra.mxu0 0.0
        %3811 = vmatprep.subr.mxu0 0.0
        %3812 = vmatpush2.msra.mxu0 0.0
        %3813 = vmatprep.subr.mxu0 0.0
        %3814 = vmatpush2.msra.mxu0 0.0
        %3815 = vmatprep.subr.mxu0 0.0
        %3816 = vmatpush2.msra.mxu0 0.0
        %3817 = vmatprep.subr.mxu0 0.0
        %3818 = vmatpush2.msra.mxu0 0.0
        %3819 = vmatprep.subr.mxu0 0.0
        %3820 = vmatpush2.msra.mxu0 0.0
        %3821 = vmatprep.subr.mxu0 0.0
        %3822 = vmatpush2.msra.mxu0 0.0
        %3823 = vmatprep.mubr.f32.mxu0 0.0
        %3824 = vmatmul.mubr.f32.gmra.mxu0 %v3757
        %v3825 = vpop.f32.mrf.mxu0
        %v3826 = vadd.f32 0.0, %v3825
        %v3827 = vpop.f32.mrf.mxu0
        %3828 = vdwg.mxu0
        %v3829 = vadd.f32 %v3748, %v3826
        %vm3830 = vcmask 24576
        %3831 = vst.msk [vmem:[%s378] sm:$0x1] %vm3830, %v3829
        %s3832 = sand.u32 %s269, 1
        %s3833 = scalar_lea.sflag [#allocation3], %s3832
        %s3834 = sand.u32 %s269, 1
        %s3835 = scalar_lea.vmem [#allocation2], %s3834
        // Predicated region
        $region65: #{tpu_custom_call.1} parent=63 // pred_check
          %p3836 = pneg %p279
        $region66: #{tpu_custom_call.1} parent=63 // pred_check_branch
          %3838 = sbr.rel (%p3836) target = $region68
        $region67: #{tpu_custom_call.1} parent=63 // pred_region
          %s3840 = ssub.s32 16, 16
          %3841 = vsyncadd %s3833, %s3840
          %s3842 = smul.addr %s25, 16
          %s3843 = scalar_lea.hbm %s11, %s3842
          %s3845 = sshll.u32 %s3835, 4
          %s3846 = int_to_ptr.vmem [resolvable:$true] %s3845
          %3848 = dma.vmem_to_hbm [thread:$0]  %s3846, 16, %s3843, %s3833
        $region68: #{tpu_custom_call.1} parent=63 // pred_fallthru
          _
      $region64: #{tpu_custom_call.1} parent=5 // pred_fallthru
        _
      %p3849 = scmp.le.s32.totalorder 2, %s20
      // Predicated region
      $region69: #{tpu_custom_call.1} parent=5 // pred_check
        %p3850 = pneg %p3849
      $region70: #{tpu_custom_call.1} parent=5 // pred_check_branch
        %3852 = sbr.rel (%p3850) target = $region72
      $region71: #{tpu_custom_call.1} parent=5 // pred_region
        %s3853 = ssub.s32 %s20, 2
        // Predicated region
        $region73: #{tpu_custom_call.1} parent=71 // pred_check
          %p3854 = pneg %p285
        $region74: #{tpu_custom_call.1} parent=71 // pred_check_branch
          %3856 = sbr.rel (%p3854) target = $region76
        $region75: #{tpu_custom_call.1} parent=71 // pred_region
          %s3857 = sand.u32 %s270, 1
          %s3858 = scalar_lea.sflag [#allocation3], %s3857
          %s3859 = sand.u32 %s270, 1
          %s3860 = scalar_lea.vmem [#allocation2], %s3859
          %3861 = dma.done %s3858, 16
        $region76: #{tpu_custom_call.1} parent=71 // pred_fallthru
          _
      $region72: #{tpu_custom_call.1} parent=5 // pred_fallthru
        _
    $region6: #{tpu_custom_call.1} parent=1 // loop_footer
      %s24 = sadd.s32 1, %s20
    $region7: #{tpu_custom_call.1} parent=1 // loop_footer_branch
      %19 = sbr.rel target = $region3
    $region8: #{tpu_custom_call.1} parent=1 // loop_exit
      _
    %3862 = vsyncpa [#allocation3], 1
    %s3863 = scalar_lea.sflag [#allocation3], 1
    %3864 = vsyncpa %s3863, 1

</llo_original>
